<compile_context>
chip_gen: v6e
topology: v6e:2x2x1
jax: 0.10.0
libtpu: 0.0.40
codegen_flags: <defaults>
</compile_context>

<pallas_src>
import functools

import jax
import jax.numpy as jnp
import numpy as np
from jax.experimental import pallas as pl
from jax.experimental.pallas import tpu as pltpu

VMEM_LIMIT_BYTES = 48 * 1024 * 1024  # explicit scoped-VMEM budget (safe on v5e/v6e/v7x)


# --------------------------------------------------------------------------
# Kernel 1: row-tiled feature transform  xw1 = X @ W1  (bf16 in/out, f32 acc)
# --------------------------------------------------------------------------
def transform_kernel(x_ref, w_ref, o_ref):
    o_ref[...] = jnp.dot(x_ref[...], w_ref[...],
                         preferred_element_type=jnp.float32).astype(o_ref.dtype)


def feature_transform(x_bf, w_bf, *, tm):
    n, f = x_bf.shape
    d_out = w_bf.shape[1]
    return pl.pallas_call(
        transform_kernel,
        out_shape=jax.ShapeDtypeStruct((n, d_out), jnp.bfloat16),
        grid=(n // tm,),
        in_specs=[
            pl.BlockSpec((tm, f), lambda i: (i, 0)),
            pl.BlockSpec((f, d_out), lambda i: (0, 0)),
        ],
        out_specs=pl.BlockSpec((tm, d_out), lambda i: (i, 0)),
        compiler_params=pltpu.CompilerParams(
            dimension_semantics=("parallel",),
            vmem_limit_bytes=VMEM_LIMIT_BYTES),
        cost_estimate=pl.CostEstimate(
            flops=2 * n * f * d_out, transcendentals=0,
            bytes_accessed=2 * (n * f + f * d_out + n * d_out)),
    )(x_bf, w_bf)


# --------------------------------------------------------------------------
# Kernel 2: layer-1 aggregation (block-sparse DMA skip) + ReLU + fused (h @ W2)
#   out = relu(adj @ xw1 + b1) @ W2     (bf16 MXU operands, f32 accumulate)
# --------------------------------------------------------------------------
def agg_relu_matmul_kernel(cols_ref, cnt_ref, adj_ref, xw1_ref, b_ref, w2_ref,
                           o_ref, acc_ref, *, tk, k_steps):
    i = pl.program_id(0)
    k = pl.program_id(1)

    @pl.when(k == 0)
    def _init():
        acc_ref[...] = jnp.zeros_like(acc_ref)

    @pl.when(k < cnt_ref[i])                       # skip compute on padded k-steps
    def _accum():
        c = cols_ref[i * k_steps + k]
        # xw1 is fully VMEM-resident; slice the feature rows for this adj block.
        rows = xw1_ref[pl.ds(pl.multiple_of(c * tk, tk), tk), :]
        acc_ref[...] += jnp.dot(adj_ref[...], rows,
                                preferred_element_type=jnp.float32)

    @pl.when(k == pl.num_programs(1) - 1)
    def _epilogue():
        h = jnp.maximum(acc_ref[...] + b_ref[...], 0.0)          # f32 bias + ReLU
        # F.dropout(training=False) is the identity -> nothing to do here.
        o_ref[...] = jnp.dot(h.astype(jnp.bfloat16), w2_ref[...],
                             preferred_element_type=jnp.float32).astype(o_ref.dtype)


def gcn_layer1(cols, cnt, adj_bf, xw1_bf, b1, w2_bf, *, tm, tk):
    n = adj_bf.shape[0]
    h = xw1_bf.shape[1]
    c = w2_bf.shape[1]
    row_tiles = n // tm
    k_steps = cols.shape[0] // row_tiles

    grid_spec = pltpu.PrefetchScalarGridSpec(
        num_scalar_prefetch=2,
        grid=(row_tiles, k_steps),
        in_specs=[
            # adj tile: data-dependent column block; padded steps repeat the
            # previous block index so the pipeliner issues no DMA for them.
            pl.BlockSpec((tm, tk),
                         lambda i, k, cols, cnt: (i, cols[i * k_steps + k])),
            pl.BlockSpec((n, h), lambda i, k, cols, cnt: (0, 0)),   # xw1 resident
            pl.BlockSpec((1, h), lambda i, k, cols, cnt: (0, 0)),   # b1 (f32)
            pl.BlockSpec((h, c), lambda i, k, cols, cnt: (0, 0)),   # W2 (fused)
        ],
        out_specs=pl.BlockSpec((tm, c), lambda i, k, cols, cnt: (i, 0)),
        scratch_shapes=[pltpu.VMEM((tm, h), jnp.float32)],
    )
    visited = cols.shape[0]                     # upper bound on fetched adj blocks
    flops = 2 * visited * tm * tk * h + 2 * n * h * c
    bytes_accessed = 2 * (visited * tm * tk + n * h + h * c + n * c) + 4 * h
    kernel = functools.partial(agg_relu_matmul_kernel, tk=tk, k_steps=k_steps)
    return pl.pallas_call(
        kernel,
        out_shape=jax.ShapeDtypeStruct((n, c), jnp.bfloat16),
        grid_spec=grid_spec,
        compiler_params=pltpu.CompilerParams(
            dimension_semantics=("parallel", "arbitrary"),
            vmem_limit_bytes=VMEM_LIMIT_BYTES),
        cost_estimate=pl.CostEstimate(flops=flops, transcendentals=0,
                                      bytes_accessed=bytes_accessed),
    )(cols, cnt, adj_bf, xw1_bf, b1, w2_bf)


# --------------------------------------------------------------------------
# Kernel 3: layer-2 aggregation (block-sparse DMA skip) + bias + log_softmax
#   out = log_softmax(adj @ hw2 + b2, axis=1)   (f32 epilogue)
# --------------------------------------------------------------------------
def agg_logsoftmax_kernel(cols_ref, cnt_ref, adj_ref, hw2_ref, b_ref,
                          o_ref, acc_ref, *, tk, k_steps):
    i = pl.program_id(0)
    k = pl.program_id(1)

    @pl.when(k == 0)
    def _init():
        acc_ref[...] = jnp.zeros_like(acc_ref)

    @pl.when(k < cnt_ref[i])
    def _accum():
        c = cols_ref[i * k_steps + k]
        rows = hw2_ref[pl.ds(pl.multiple_of(c * tk, tk), tk), :]
        acc_ref[...] += jnp.dot(adj_ref[...], rows,
                                preferred_element_type=jnp.float32)

    @pl.when(k == pl.num_programs(1) - 1)
    def _epilogue():
        z = acc_ref[...] + b_ref[...]                            # f32
        m = jnp.max(z, axis=1, keepdims=True)
        lse = m + jnp.log(jnp.sum(jnp.exp(z - m), axis=1, keepdims=True))
        o_ref[...] = (z - lse).astype(o_ref.dtype)


def gcn_layer2(cols, cnt, adj_bf, hw2_bf, b2, *, tm, tk):
    n = adj_bf.shape[0]
    c = hw2_bf.shape[1]
    row_tiles = n // tm
    k_steps = cols.shape[0] // row_tiles

    grid_spec = pltpu.PrefetchScalarGridSpec(
        num_scalar_prefetch=2,
        grid=(row_tiles, k_steps),
        in_specs=[
            pl.BlockSpec((tm, tk),
                         lambda i, k, cols, cnt: (i, cols[i * k_steps + k])),
            pl.BlockSpec((n, c), lambda i, k, cols, cnt: (0, 0)),   # hw2 resident
            pl.BlockSpec((1, c), lambda i, k, cols, cnt: (0, 0)),   # b2 (f32)
        ],
        out_specs=pl.BlockSpec((tm, c), lambda i, k, cols, cnt: (i, 0)),
        scratch_shapes=[pltpu.VMEM((tm, c), jnp.float32)],
    )
    visited = cols.shape[0]
    flops = 2 * visited * tm * tk * c
    bytes_accessed = 2 * (visited * tm * tk + n * c) + 4 * (n * c + c)
    kernel = functools.partial(agg_logsoftmax_kernel, tk=tk, k_steps=k_steps)
    return pl.pallas_call(
        kernel,
        out_shape=jax.ShapeDtypeStruct((n, c), jnp.float32),
        grid_spec=grid_spec,
        compiler_params=pltpu.CompilerParams(
            dimension_semantics=("parallel", "arbitrary"),
            vmem_limit_bytes=VMEM_LIMIT_BYTES),
        cost_estimate=pl.CostEstimate(flops=flops, transcendentals=2 * n * c,
                                      bytes_accessed=bytes_accessed),
    )(cols, cnt, adj_bf, hw2_bf, b2)


# --------------------------------------------------------------------------
# Forward pass (matches Net.forward in eval mode)
# --------------------------------------------------------------------------
@functools.partial(jax.jit, static_argnames=("tm", "tk"))
def gcn_forward(x, adj, cols, cnt, w1, b1, w2, b2, *, tm=256, tk=256):
    # bf16 MXU operands; biases and all epilogue math stay f32.
    x_bf = x.astype(jnp.bfloat16)
    adj_bf = adj.astype(jnp.bfloat16)
    w1_bf = w1.astype(jnp.bfloat16)
    w2_bf = w2.astype(jnp.bfloat16)

    xw1 = feature_transform(x_bf, w1_bf, tm=tm)                       # (N, H) bf16
    hw2 = gcn_layer1(cols, cnt, adj_bf, xw1, b1, w2_bf, tm=tm, tk=tk)  # (N, C) bf16
    out = gcn_layer2(cols, cnt, adj_bf, hw2, b2, tm=tm, tk=tk)         # (N, C) f32
    return out


# --------------------------------------------------------------------------
# Graph helpers (wrapper-side, static preprocessing)
# --------------------------------------------------------------------------
def build_dense_adj(edge_index, edge_weight, num_nodes):
    # adj[dst, src] = w  so  (adj @ h)[i] = sum_{edges (src->i)} w * h[src]
    src = edge_index[0]
    dst = edge_index[1]
    adj = jnp.zeros((num_nodes, num_nodes), jnp.float32)
    return adj.at[dst, src].add(edge_weight)


def build_block_csr(adj, tm, tk):
    """Compact per-row-tile list of nonzero adjacency block columns (host-side).

    Padded entries repeat the last valid block column, so the pipeliner sees an
    unchanged block index and skips their DMA; compute is skipped via cnt."""
    a = np.asarray(adj)
    n = a.shape[0]
    rt, ct = n // tm, n // tk
    blk = np.abs(a).reshape(rt, tm, ct, tk).sum(axis=(1, 3)) > 0      # (rt, ct)
    cnt = blk.sum(axis=1).astype(np.int32)                           # (rt,)
    max_nnz = max(int(cnt.max()), 1)
    cols = np.zeros((rt, max_nnz), np.int32)
    for i in range(rt):
        nz = np.nonzero(blk[i])[0].astype(np.int32)
        if nz.size:
            cols[i, :nz.size] = nz
            cols[i, nz.size:] = nz[-1]
    # 1-D SMEM layout (avoids 2-D s32 SMEM padding blowup at real scale).
    return jnp.asarray(cols.reshape(-1)), jnp.asarray(cnt)


if __name__ == "__main__":
    key = jax.random.PRNGKey(0)
    ks = jax.random.split(key, 12)

    # Small synthetic "Planetoid-like" problem (module fixes hidden=16).
    N = 512       # nodes
    F_IN = 128    # dataset.num_features
    HID = 16      # hidden size from the module
    C = 8         # dataset.num_classes
    TM = TK = 256  # demo tiles; N/TM = 2 row tiles (even -> balances v7x's 2 TCs)

    x = jax.random.normal(ks[0], (N, F_IN), dtype=jnp.float32)

    # Block-structured graph: edges within each half plus first-half -> second-
    # half cross edges, so row tile 0 touches 1 adjacency block and row tile 1
    # touches 2 (exercises both the DMA-skip and the padded-step path).
    e = 512
    src_a = jax.random.randint(ks[1], (e,), 0, N // 2, dtype=jnp.int32)
    dst_a = jax.random.randint(ks[2], (e,), 0, N // 2, dtype=jnp.int32)
    src_b = jax.random.randint(ks[3], (e,), N // 2, N, dtype=jnp.int32)
    dst_b = jax.random.randint(ks[4], (e,), N // 2, N, dtype=jnp.int32)
    src_c = jax.random.randint(ks[5], (e,), 0, N // 2, dtype=jnp.int32)
    dst_c = jax.random.randint(ks[6], (e,), N // 2, N, dtype=jnp.int32)
    edge_index = jnp.stack([jnp.concatenate([src_a, src_b, src_c]),
                            jnp.concatenate([dst_a, dst_b, dst_c])])
    edge_weight = jax.random.uniform(ks[7], (3 * e,), dtype=jnp.float32)

    adj = build_dense_adj(edge_index, edge_weight, N)
    cols, cnt = build_block_csr(adj, TM, TK)

    def glorot(k, shape):
        limit = (6.0 / (shape[0] + shape[1])) ** 0.5
        return jax.random.uniform(k, shape, jnp.float32, -limit, limit)

    w1 = glorot(ks[8], (F_IN, HID))
    b1 = 0.1 * jax.random.normal(ks[9], (1, HID), dtype=jnp.float32)
    w2 = glorot(ks[10], (HID, C))
    b2 = 0.1 * jax.random.normal(ks[11], (1, C), dtype=jnp.float32)

    out = gcn_forward(x, adj, cols, cnt, w1, b1, w2, b2, tm=TM, tk=TK)
    jax.block_until_ready(out)

    # Reference in the same mixed precision (bf16 operands, f32 accumulation).
    x_bf = x.astype(jnp.bfloat16)
    adj_bf = adj.astype(jnp.bfloat16)
    w1_bf = w1.astype(jnp.bfloat16)
    w2_bf = w2.astype(jnp.bfloat16)
    xw1_r = jnp.dot(x_bf, w1_bf, preferred_element_type=jnp.float32).astype(jnp.bfloat16)
    h_r = jnp.maximum(jnp.dot(adj_bf, xw1_r, preferred_element_type=jnp.float32) + b1, 0.0)
    hw2_r = jnp.dot(h_r.astype(jnp.bfloat16), w2_bf,
                    preferred_element_type=jnp.float32).astype(jnp.bfloat16)
    z_r = jnp.dot(adj_bf, hw2_r, preferred_element_type=jnp.float32) + b2
    m_r = jnp.max(z_r, axis=1, keepdims=True)
    ref = z_r - (m_r + jnp.log(jnp.sum(jnp.exp(z_r - m_r), axis=1, keepdims=True)))

    assert out.shape == (N, C)
    assert bool(jnp.allclose(jnp.exp(out).sum(axis=1), 1.0, atol=1e-4))
    err = float(jnp.max(jnp.abs(out - ref)))
    assert bool(jnp.allclose(out, ref, atol=3e-2)), err

    print("KERNEL_OK")
</pallas_src>

<mosaic_0001>
module attributes {stable_mosaic.version = 11 : i64} {
  func.func @agg_logsoftmax_kernel(%arg0: i32, %arg1: i32, %arg2: memref<4xi32, #tpu.memory_space<smem>>, %arg3: memref<2xi32, #tpu.memory_space<smem>>, %arg4: memref<256x256xbf16, #tpu.memory_space<vmem>>, %arg5: memref<512x8xbf16, #tpu.memory_space<vmem>>, %arg6: memref<1x8xf32, #tpu.memory_space<vmem>>, %arg7: memref<256x8xf32, #tpu.memory_space<vmem>>, %arg8: memref<256x8xf32, #tpu.memory_space<vmem>>) attributes {dimension_semantics = [#tpu.dimension_semantics<parallel>, #tpu.dimension_semantics<arbitrary>], iteration_bounds = array<i64: 2, 2>, scalar_prefetch = 2 : i64, scratch_operands = 1 : i64, tpu.core_type = #tpu.core_type<tc>, window_params = [{transform_indices = @transform_0, window_bounds = array<i64: 256, 256>}, {pipeline_mode = #tpu.pipeline_mode<synchronous>, transform_indices = @transform_1, window_bounds = array<i64: 512, 8>}, {pipeline_mode = #tpu.pipeline_mode<synchronous>, transform_indices = @transform_2, window_bounds = array<i64: 1, 8>}, {transform_indices = @transform_3, window_bounds = array<i64: 256, 8>}]} {
    %c0_i32 = arith.constant 0 : i32
    %0 = arith.cmpi eq, %arg1, %c0_i32 : i32
    %1 = arith.extui %0 : i1 to i32
    %c0_i32_0 = arith.constant 0 : i32
    %2 = arith.cmpi ne, %1, %c0_i32_0 : i32
    scf.if %2 {
      %cst = arith.constant 0.000000e+00 : f32
      %11 = vector.broadcast %cst : f32 to vector<256x8xf32>
      %c0 = arith.constant 0 : index
      %c0_3 = arith.constant 0 : index
      %12 = vector.load %arg8[%c0, %c0_3] : memref<256x8xf32, #tpu.memory_space<vmem>>, vector<256x8xf32>
      tpu.vector_store %arg8[%c0, %c0_3], %11 {strides = array<i32>} : memref<256x8xf32, #tpu.memory_space<vmem>>, vector<256x8xf32>,
    } else {
    }
    %3 = arith.index_cast %arg0 : i32 to index
    %4 = memref.load %arg3[%3] : memref<2xi32, #tpu.memory_space<smem>>
    %5 = arith.cmpi slt, %arg1, %4 : i32
    %6 = arith.extui %5 : i1 to i32
    %c0_i32_1 = arith.constant 0 : i32
    %7 = arith.cmpi ne, %6, %c0_i32_1 : i32
    scf.if %7 {
      %c2_i32 = arith.constant 2 : i32
      %11 = arith.muli %arg0, %c2_i32 : i32
      %12 = arith.addi %11, %arg1 : i32
      %13 = arith.index_cast %12 : i32 to index
      %14 = memref.load %arg2[%13] : memref<4xi32, #tpu.memory_space<smem>>
      %c256_i32 = arith.constant 256 : i32
      %15 = arith.muli %14, %c256_i32 : i32
      %16 = tpu.assume_multiple %15, 256 : i32
      %17 = arith.index_cast %16 : i32 to index
      %c0 = arith.constant 0 : index
      %18 = vector.load %arg5[%17, %c0] : memref<512x8xbf16, #tpu.memory_space<vmem>>, vector<256x8xbf16>
      %c0_3 = arith.constant 0 : index
      %c0_4 = arith.constant 0 : index
      %19 = vector.load %arg8[%c0_3, %c0_4] : memref<256x8xf32, #tpu.memory_space<vmem>>, vector<256x8xf32>
      %c0_5 = arith.constant 0 : index
      %c0_6 = arith.constant 0 : index
      %20 = vector.load %arg4[%c0_5, %c0_6] : memref<256x256xbf16, #tpu.memory_space<vmem>>, vector<256x256xbf16>
      %cst = arith.constant dense<0.000000e+00> : vector<256x8xf32>
      %21 = tpu.matmul %20, %18, %cst {dimension_numbers = #tpu.dot_dimension_numbers<[1], [0], [0], [1], [0, 0, 1, 1], [], []>} : vector<256x256xbf16>, vector<256x8xbf16>, vector<256x8xf32> -> vector<256x8xf32>
      %22 = arith.addf %19, %21 : vector<256x8xf32>
      %c0_7 = arith.constant 0 : index
      %c0_8 = arith.constant 0 : index
      %23 = vector.load %arg8[%c0_7, %c0_8] : memref<256x8xf32, #tpu.memory_space<vmem>>, vector<256x8xf32>
      tpu.vector_store %arg8[%c0_7, %c0_8], %22 {strides = array<i32>} : memref<256x8xf32, #tpu.memory_space<vmem>>, vector<256x8xf32>,
    } else {
    }
    %c1_i32 = arith.constant 1 : i32
    %8 = arith.cmpi eq, %arg1, %c1_i32 : i32
    %9 = arith.extui %8 : i1 to i32
    %c0_i32_2 = arith.constant 0 : i32
    %10 = arith.cmpi ne, %9, %c0_i32_2 : i32
    scf.if %10 {
      %c0 = arith.constant 0 : index
      %c0_3 = arith.constant 0 : index
      %11 = vector.load %arg8[%c0, %c0_3] : memref<256x8xf32, #tpu.memory_space<vmem>>, vector<256x8xf32>
      %c0_4 = arith.constant 0 : index
      %c0_5 = arith.constant 0 : index
      %12 = vector.load %arg6[%c0_4, %c0_5] : memref<1x8xf32, #tpu.memory_space<vmem>>, vector<1x8xf32>
      %13 = vector.broadcast %12 : vector<1x8xf32> to vector<256x8xf32>
      %14 = arith.addf %11, %13 : vector<256x8xf32>
      %cst = arith.constant dense<0xFF800000> : vector<256xf32>
      %15 = vector.multi_reduction <maximumf>, %14, %cst [1] : vector<256x8xf32> to vector<256xf32>
      %16 = vector.shape_cast %15 : vector<256xf32> to vector<256x1xf32>
      %17 = vector.broadcast %16 : vector<256x1xf32> to vector<256x8xf32>
      %18 = arith.subf %14, %17 : vector<256x8xf32>
      %19 = math.exp %18 : vector<256x8xf32>
      %cst_6 = arith.constant dense<0.000000e+00> : vector<256xf32>
      %20 = vector.multi_reduction <add>, %19, %cst_6 [1] : vector<256x8xf32> to vector<256xf32>
      %21 = vector.shape_cast %20 : vector<256xf32> to vector<256x1xf32>
      %22 = math.log %21 : vector<256x1xf32>
      %23 = arith.addf %16, %22 : vector<256x1xf32>
      %24 = vector.broadcast %23 : vector<256x1xf32> to vector<256x8xf32>
      %25 = arith.subf %14, %24 : vector<256x8xf32>
      %c0_7 = arith.constant 0 : index
      %c0_8 = arith.constant 0 : index
      %26 = vector.load %arg7[%c0_7, %c0_8] : memref<256x8xf32, #tpu.memory_space<vmem>>, vector<256x8xf32>
      tpu.vector_store %arg7[%c0_7, %c0_8], %25 {strides = array<i32>} : memref<256x8xf32, #tpu.memory_space<vmem>>, vector<256x8xf32>,
    } else {
    }
    return
  }
  func.func @transform_0(%arg0: i32, %arg1: i32, %arg2: memref<4xi32, #tpu.memory_space<smem>>, %arg3: memref<2xi32, #tpu.memory_space<smem>>) -> (i32, i32) {
    %c2_i32 = arith.constant 2 : i32
    %0 = arith.muli %arg0, %c2_i32 : i32
    %1 = arith.addi %0, %arg1 : i32
    %2 = arith.index_cast %1 : i32 to index
    %3 = memref.load %arg2[%2] : memref<4xi32, #tpu.memory_space<smem>>
    %c0_i32 = arith.constant 0 : i32
    return %arg0, %3 : i32, i32
  }
  func.func @transform_1(%arg0: i32, %arg1: i32, %arg2: memref<4xi32, #tpu.memory_space<smem>>, %arg3: memref<2xi32, #tpu.memory_space<smem>>) -> (i32, i32) {
    %c0_i32 = arith.constant 0 : i32
    %c0_i32_0 = arith.constant 0 : i32
    %c0_i32_1 = arith.constant 0 : i32
    return %c0_i32, %c0_i32_0 : i32, i32
  }
  func.func @transform_2(%arg0: i32, %arg1: i32, %arg2: memref<4xi32, #tpu.memory_space<smem>>, %arg3: memref<2xi32, #tpu.memory_space<smem>>) -> (i32, i32) {
    %c0_i32 = arith.constant 0 : i32
    %c0_i32_0 = arith.constant 0 : i32
    %c0_i32_1 = arith.constant 0 : i32
    return %c0_i32, %c0_i32_0 : i32, i32
  }
  func.func @transform_3(%arg0: i32, %arg1: i32, %arg2: memref<4xi32, #tpu.memory_space<smem>>, %arg3: memref<2xi32, #tpu.memory_space<smem>>) -> (i32, i32) {
    %c0_i32 = arith.constant 0 : i32
    %c0_i32_0 = arith.constant 0 : i32
    return %arg0, %c0_i32 : i32, i32
  }
}

module attributes {stable_mosaic.version = 11 : i64} {
  func.func @agg_relu_matmul_kernel(%arg0: i32, %arg1: i32, %arg2: memref<4xi32, #tpu.memory_space<smem>>, %arg3: memref<2xi32, #tpu.memory_space<smem>>, %arg4: memref<256x256xbf16, #tpu.memory_space<vmem>>, %arg5: memref<512x16xbf16, #tpu.memory_space<vmem>>, %arg6: memref<1x16xf32, #tpu.memory_space<vmem>>, %arg7: memref<16x8xbf16, #tpu.memory_space<vmem>>, %arg8: memref<256x8xbf16, #tpu.memory_space<vmem>>, %arg9: memref<256x16xf32, #tpu.memory_space<vmem>>) attributes {dimension_semantics = [#tpu.dimension_semantics<parallel>, #tpu.dimension_semantics<arbitrary>], iteration_bounds = array<i64: 2, 2>, scalar_prefetch = 2 : i64, scratch_operands = 1 : i64, tpu.core_type = #tpu.core_type<tc>, window_params = [{transform_indices = @transform_0, window_bounds = array<i64: 256, 256>}, {pipeline_mode = #tpu.pipeline_mode<synchronous>, transform_indices = @transform_1, window_bounds = array<i64: 512, 16>}, {pipeline_mode = #tpu.pipeline_mode<synchronous>, transform_indices = @transform_2, window_bounds = array<i64: 1, 16>}, {pipeline_mode = #tpu.pipeline_mode<synchronous>, transform_indices = @transform_3, window_bounds = array<i64: 16, 8>}, {transform_indices = @transform_4, window_bounds = array<i64: 256, 8>}]} {
    %c0_i32 = arith.constant 0 : i32
    %0 = arith.cmpi eq, %arg1, %c0_i32 : i32
    %1 = arith.extui %0 : i1 to i32
    %c0_i32_0 = arith.constant 0 : i32
    %2 = arith.cmpi ne, %1, %c0_i32_0 : i32
    scf.if %2 {
      %cst = arith.constant 0.000000e+00 : f32
      %11 = vector.broadcast %cst : f32 to vector<256x16xf32>
      %c0 = arith.constant 0 : index
      %c0_3 = arith.constant 0 : index
      %12 = vector.load %arg9[%c0, %c0_3] : memref<256x16xf32, #tpu.memory_space<vmem>>, vector<256x16xf32>
      tpu.vector_store %arg9[%c0, %c0_3], %11 {strides = array<i32>} : memref<256x16xf32, #tpu.memory_space<vmem>>, vector<256x16xf32>,
    } else {
    }
    %3 = arith.index_cast %arg0 : i32 to index
    %4 = memref.load %arg3[%3] : memref<2xi32, #tpu.memory_space<smem>>
    %5 = arith.cmpi slt, %arg1, %4 : i32
    %6 = arith.extui %5 : i1 to i32
    %c0_i32_1 = arith.constant 0 : i32
    %7 = arith.cmpi ne, %6, %c0_i32_1 : i32
    scf.if %7 {
      %c2_i32 = arith.constant 2 : i32
      %11 = arith.muli %arg0, %c2_i32 : i32
      %12 = arith.addi %11, %arg1 : i32
      %13 = arith.index_cast %12 : i32 to index
      %14 = memref.load %arg2[%13] : memref<4xi32, #tpu.memory_space<smem>>
      %c256_i32 = arith.constant 256 : i32
      %15 = arith.muli %14, %c256_i32 : i32
      %16 = tpu.assume_multiple %15, 256 : i32
      %17 = arith.index_cast %16 : i32 to index
      %c0 = arith.constant 0 : index
      %18 = vector.load %arg5[%17, %c0] : memref<512x16xbf16, #tpu.memory_space<vmem>>, vector<256x16xbf16>
      %c0_3 = arith.constant 0 : index
      %c0_4 = arith.constant 0 : index
      %19 = vector.load %arg9[%c0_3, %c0_4] : memref<256x16xf32, #tpu.memory_space<vmem>>, vector<256x16xf32>
      %c0_5 = arith.constant 0 : index
      %c0_6 = arith.constant 0 : index
      %20 = vector.load %arg4[%c0_5, %c0_6] : memref<256x256xbf16, #tpu.memory_space<vmem>>, vector<256x256xbf16>
      %cst = arith.constant dense<0.000000e+00> : vector<256x16xf32>
      %21 = tpu.matmul %20, %18, %cst {dimension_numbers = #tpu.dot_dimension_numbers<[1], [0], [0], [1], [0, 0, 1, 1], [], []>} : vector<256x256xbf16>, vector<256x16xbf16>, vector<256x16xf32> -> vector<256x16xf32>
      %22 = arith.addf %19, %21 : vector<256x16xf32>
      %c0_7 = arith.constant 0 : index
      %c0_8 = arith.constant 0 : index
      %23 = vector.load %arg9[%c0_7, %c0_8] : memref<256x16xf32, #tpu.memory_space<vmem>>, vector<256x16xf32>
      tpu.vector_store %arg9[%c0_7, %c0_8], %22 {strides = array<i32>} : memref<256x16xf32, #tpu.memory_space<vmem>>, vector<256x16xf32>,
    } else {
    }
    %c1_i32 = arith.constant 1 : i32
    %8 = arith.cmpi eq, %arg1, %c1_i32 : i32
    %9 = arith.extui %8 : i1 to i32
    %c0_i32_2 = arith.constant 0 : i32
    %10 = arith.cmpi ne, %9, %c0_i32_2 : i32
    scf.if %10 {
      %c0 = arith.constant 0 : index
      %c0_3 = arith.constant 0 : index
      %11 = vector.load %arg9[%c0, %c0_3] : memref<256x16xf32, #tpu.memory_space<vmem>>, vector<256x16xf32>
      %c0_4 = arith.constant 0 : index
      %c0_5 = arith.constant 0 : index
      %12 = vector.load %arg6[%c0_4, %c0_5] : memref<1x16xf32, #tpu.memory_space<vmem>>, vector<1x16xf32>
      %13 = vector.broadcast %12 : vector<1x16xf32> to vector<256x16xf32>
      %14 = arith.addf %11, %13 : vector<256x16xf32>
      %cst = arith.constant 0.000000e+00 : f32
      %15 = vector.broadcast %cst : f32 to vector<256x16xf32>
      %16 = arith.maximumf %14, %15 : vector<256x16xf32>
      %17 = arith.truncf %16 : vector<256x16xf32> to vector<256x16xbf16>
      %c0_6 = arith.constant 0 : index
      %c0_7 = arith.constant 0 : index
      %18 = vector.load %arg7[%c0_6, %c0_7] : memref<16x8xbf16, #tpu.memory_space<vmem>>, vector<16x8xbf16>
      %cst_8 = arith.constant dense<0.000000e+00> : vector<256x8xf32>
      %19 = tpu.matmul %17, %18, %cst_8 {dimension_numbers = #tpu.dot_dimension_numbers<[1], [0], [0], [1], [0, 0, 1, 1], [], []>} : vector<256x16xbf16>, vector<16x8xbf16>, vector<256x8xf32> -> vector<256x8xf32>
      %20 = arith.truncf %19 : vector<256x8xf32> to vector<256x8xbf16>
      %c0_9 = arith.constant 0 : index
      %c0_10 = arith.constant 0 : index
      %21 = vector.load %arg8[%c0_9, %c0_10] : memref<256x8xbf16, #tpu.memory_space<vmem>>, vector<256x8xbf16>
      tpu.vector_store %arg8[%c0_9, %c0_10], %20 {strides = array<i32>} : memref<256x8xbf16, #tpu.memory_space<vmem>>, vector<256x8xbf16>,
    } else {
    }
    return
  }
  func.func @transform_0(%arg0: i32, %arg1: i32, %arg2: memref<4xi32, #tpu.memory_space<smem>>, %arg3: memref<2xi32, #tpu.memory_space<smem>>) -> (i32, i32) {
    %c2_i32 = arith.constant 2 : i32
    %0 = arith.muli %arg0, %c2_i32 : i32
    %1 = arith.addi %0, %arg1 : i32
    %2 = arith.index_cast %1 : i32 to index
    %3 = memref.load %arg2[%2] : memref<4xi32, #tpu.memory_space<smem>>
    %c0_i32 = arith.constant 0 : i32
    return %arg0, %3 : i32, i32
  }
  func.func @transform_1(%arg0: i32, %arg1: i32, %arg2: memref<4xi32, #tpu.memory_space<smem>>, %arg3: memref<2xi32, #tpu.memory_space<smem>>) -> (i32, i32) {
    %c0_i32 = arith.constant 0 : i32
    %c0_i32_0 = arith.constant 0 : i32
    %c0_i32_1 = arith.constant 0 : i32
    return %c0_i32, %c0_i32_0 : i32, i32
  }
  func.func @transform_2(%arg0: i32, %arg1: i32, %arg2: memref<4xi32, #tpu.memory_space<smem>>, %arg3: memref<2xi32, #tpu.memory_space<smem>>) -> (i32, i32) {
    %c0_i32 = arith.constant 0 : i32
    %c0_i32_0 = arith.constant 0 : i32
    %c0_i32_1 = arith.constant 0 : i32
    return %c0_i32, %c0_i32_0 : i32, i32
  }
  func.func @transform_3(%arg0: i32, %arg1: i32, %arg2: memref<4xi32, #tpu.memory_space<smem>>, %arg3: memref<2xi32, #tpu.memory_space<smem>>) -> (i32, i32) {
    %c0_i32 = arith.constant 0 : i32
    %c0_i32_0 = arith.constant 0 : i32
    %c0_i32_1 = arith.constant 0 : i32
    return %c0_i32, %c0_i32_0 : i32, i32
  }
  func.func @transform_4(%arg0: i32, %arg1: i32, %arg2: memref<4xi32, #tpu.memory_space<smem>>, %arg3: memref<2xi32, #tpu.memory_space<smem>>) -> (i32, i32) {
    %c0_i32 = arith.constant 0 : i32
    %c0_i32_0 = arith.constant 0 : i32
    return %arg0, %c0_i32 : i32, i32
  }
}

module attributes {stable_mosaic.version = 11 : i64} {
  func.func @transform_kernel(%arg0: i32, %arg1: memref<256x128xbf16, #tpu.memory_space<vmem>>, %arg2: memref<128x16xbf16, #tpu.memory_space<vmem>>, %arg3: memref<256x16xbf16, #tpu.memory_space<vmem>>) attributes {dimension_semantics = [#tpu.dimension_semantics<parallel>], iteration_bounds = array<i64: 2>, scalar_prefetch = 0 : i64, scratch_operands = 0 : i64, tpu.core_type = #tpu.core_type<tc>, window_params = [{transform_indices = @transform_0, window_bounds = array<i64: 256, 128>}, {pipeline_mode = #tpu.pipeline_mode<synchronous>, transform_indices = @transform_1, window_bounds = array<i64: 128, 16>}, {transform_indices = @transform_2, window_bounds = array<i64: 256, 16>}]} {
    %c0 = arith.constant 0 : index
    %c0_0 = arith.constant 0 : index
    %0 = vector.load %arg1[%c0, %c0_0] : memref<256x128xbf16, #tpu.memory_space<vmem>>, vector<256x128xbf16>
    %c0_1 = arith.constant 0 : index
    %c0_2 = arith.constant 0 : index
    %1 = vector.load %arg2[%c0_1, %c0_2] : memref<128x16xbf16, #tpu.memory_space<vmem>>, vector<128x16xbf16>
    %cst = arith.constant dense<0.000000e+00> : vector<256x16xf32>
    %2 = tpu.matmul %0, %1, %cst {dimension_numbers = #tpu.dot_dimension_numbers<[1], [0], [0], [1], [0, 0, 1, 1], [], []>} : vector<256x128xbf16>, vector<128x16xbf16>, vector<256x16xf32> -> vector<256x16xf32>
    %3 = arith.truncf %2 : vector<256x16xf32> to vector<256x16xbf16>
    %c0_3 = arith.constant 0 : index
    %c0_4 = arith.constant 0 : index
    %4 = vector.load %arg3[%c0_3, %c0_4] : memref<256x16xbf16, #tpu.memory_space<vmem>>, vector<256x16xbf16>
    tpu.vector_store %arg3[%c0_3, %c0_4], %3 {strides = array<i32>} : memref<256x16xbf16, #tpu.memory_space<vmem>>, vector<256x16xbf16>,
    return
  }
  func.func @transform_0(%arg0: i32) -> (i32, i32) {
    %c0_i32 = arith.constant 0 : i32
    %c0_i32_0 = arith.constant 0 : i32
    return %arg0, %c0_i32 : i32, i32
  }
  func.func @transform_1(%arg0: i32) -> (i32, i32) {
    %c0_i32 = arith.constant 0 : i32
    %c0_i32_0 = arith.constant 0 : i32
    %c0_i32_1 = arith.constant 0 : i32
    return %c0_i32, %c0_i32_0 : i32, i32
  }
  func.func @transform_2(%arg0: i32) -> (i32, i32) {
    %c0_i32 = arith.constant 0 : i32
    %c0_i32_0 = arith.constant 0 : i32
    return %arg0, %c0_i32 : i32, i32
  }
}

</mosaic_0001>

<llo_original>
// kernel: gcn_forward.3
$region0: #{gcn_forward.3}
  #allocation0 [shape = 'u32[]', space=smem, size = 0x4, offset = 0x4, fixed_abs, tag = 'smem constant byte address 0x4 - core index']
  #allocation1 [shape = 'u32[144,128]{1,0:T(1,128)}', space=vmem, size = 0x12000, scoped, tag = 'internal scratch']
  %s0 = inlined_call_operand.vmem [shape: bf16[512,128], index: 0, kind: input, shape index: {}]
  %s1 = inlined_call_operand.vmem [shape: bf16[128,16], index: 1, kind: input, shape index: {}]
  %s2 = inlined_call_operand.vmem [shape: bf16[512,16], index: 2, kind: output, shape index: {}]
  %s3 = sld [smem:[#allocation0]]
  $region41: #{gcn_forward.3} parent=0
    _
  %s5 = ssub.s32 1, %s3
  %s6 = scalar_select 0, %s5, %s3
  loop: start=0, step=1, limit=4
  $region2: #{gcn_forward.3} parent=0 // loop_pre_header
    _
  $region3: #{gcn_forward.3} parent=0 // loop_header
    %s8 = sphi 0, %s12
    %p9 = scmp.ge.s32.totalorder %s8, 4
    %s18 = sphi 0, %s20
    %s21 = sphi 0, %s18
    %s22 = sphi 0, %s21
    %s38 = sphi 0, %s22
    %s42 = sphi 0, %s42
    %s44 = sphi 0, %s42
    %s45 = sphi 0, %s44
    %s59 = sphi 0, %s45
    %s65 = sphi 0, %s67
    %s68 = sphi 0, %s65
    %s69 = sphi 0, %s68
    %s85 = sphi 0, %s69
  $region4: #{gcn_forward.3} parent=0 // loop_header_branch
    %11 = sbr.rel (%p9) target = $region8
  $region5: #{gcn_forward.3} parent=0 // loop_body
    %s13 = ssub.s32 %s8, 1
    %s14 = ssub.s32 %s8, 2
    %s15 = sadd.s32 %s8, 1
    %s16 = ssub.s32 %s8, %s15
    %p17 = scmp.eq.s32.totalorder %s16, 0
    %s19 = sadd.s32 %s18, 1
    %s20 = scalar_select %p17, %s18, %s19
    %p23 = pneg %p17
    %p24 = scmp.eq.s32.totalorder %s8, 1
    %p25 = por %p23, %p24
    %p26 = scmp.ne.s32.totalorder %s18, %s21
    %p27 = scmp.eq.s32.totalorder %s8, 0
    %p28 = por %p26, %p27
    %p29 = scmp.ne.s32.totalorder %s18, %s21
    %p30 = scmp.eq.s32.totalorder %s13, 1
    %p31 = por %p29, %p30
    %p32 = scmp.ne.s32.totalorder %s21, %s22
    %p33 = scmp.eq.s32.totalorder %s13, 0
    %p34 = por %p32, %p33
    %p35 = scmp.ne.s32.totalorder %s21, %s22
    %p36 = scmp.eq.s32.totalorder %s14, 1
    %p37 = por %p35, %p36
    %p39 = scmp.ne.s32.totalorder %s22, %s38
    %p40 = scmp.eq.s32.totalorder %s14, 0
    %p41 = por %p39, %p40
    %s43 = sadd.s32 %s42, 1
    %p46 = scmp.eq.s32.totalorder %s8, 1
    %p47 = scmp.ne.s32.totalorder %s42, %s44
    %p48 = scmp.eq.s32.totalorder %s8, 0
    %p49 = por %p47, %p48
    %p50 = scmp.ne.s32.totalorder %s42, %s44
    %p51 = scmp.eq.s32.totalorder %s13, 1
    %p52 = por %p50, %p51
    %p53 = scmp.ne.s32.totalorder %s44, %s45
    %p54 = scmp.eq.s32.totalorder %s13, 0
    %p55 = por %p53, %p54
    %p56 = scmp.ne.s32.totalorder %s44, %s45
    %p57 = scmp.eq.s32.totalorder %s14, 1
    %p58 = por %p56, %p57
    %p60 = scmp.ne.s32.totalorder %s45, %s59
    %p61 = scmp.eq.s32.totalorder %s14, 0
    %p62 = por %p60, %p61
    %s63 = ssub.s32 %s8, %s15
    %p64 = scmp.eq.s32.totalorder %s63, 0
    %s66 = sadd.s32 %s65, 1
    %s67 = scalar_select %p64, %s65, %s66
    %p70 = pneg %p64
    %p71 = scmp.eq.s32.totalorder %s8, 1
    %p72 = por %p70, %p71
    %p73 = scmp.ne.s32.totalorder %s65, %s68
    %p74 = scmp.eq.s32.totalorder %s8, 0
    %p75 = por %p73, %p74
    %p76 = scmp.ne.s32.totalorder %s65, %s68
    %p77 = scmp.eq.s32.totalorder %s13, 1
    %p78 = por %p76, %p77
    %p79 = scmp.ne.s32.totalorder %s68, %s69
    %p80 = scmp.eq.s32.totalorder %s13, 0
    %p81 = por %p79, %p80
    %p82 = scmp.ne.s32.totalorder %s68, %s69
    %p83 = scmp.eq.s32.totalorder %s14, 1
    %p84 = por %p82, %p83
    %p86 = scmp.ne.s32.totalorder %s69, %s85
    %p87 = scmp.eq.s32.totalorder %s14, 0
    %p88 = por %p86, %p87
    %p89 = scmp.le.s32.totalorder 1, %s8
    %p90 = scmp.lt.s32.totalorder %s8, 3
    %p91 = pnand %p89, %p90
    %p92 = pneg %p91
    // Predicated region
    $region9: #{gcn_forward.3} parent=5 // pred_check
      _
    $region10: #{gcn_forward.3} parent=5 // pred_check_branch
      %94 = sbr.rel (%p91) target = $region12
    $region11: #{gcn_forward.3} parent=5 // pred_region
      %s95 = ssub.s32 %s8, 1
      // Predicated region
      $region13: #{gcn_forward.3} parent=11 // pred_check
        %p96 = pneg %p55
      $region14: #{gcn_forward.3} parent=11 // pred_check_branch
        %98 = sbr.rel (%p96) target = $region16
      $region15: #{gcn_forward.3} parent=11 // pred_region
        _
      $region16: #{gcn_forward.3} parent=11 // pred_fallthru
        _
    $region12: #{gcn_forward.3} parent=5 // pred_fallthru
      _
    %p99 = scmp.lt.s32.totalorder %s8, 2
    // Predicated region
    $region17: #{gcn_forward.3} parent=5 // pred_check
      %p100 = pneg %p99
    $region18: #{gcn_forward.3} parent=5 // pred_check_branch
      %102 = sbr.rel (%p100) target = $region20
    $region19: #{gcn_forward.3} parent=5 // pred_region
      // Predicated region
      $region21: #{gcn_forward.3} parent=19 // pred_check
        %p103 = pneg %p28
      $region22: #{gcn_forward.3} parent=19 // pred_check_branch
        %105 = sbr.rel (%p103) target = $region24
      $region23: #{gcn_forward.3} parent=19 // pred_region
        %s106 = smul.u32 32, %s8
        %p107 = scmp.lt.s32.totalorder %s106, 63
        %s108 = scalar_select %p107, %s106, 63
        %s109 = smul.addr %s108, 4
        %s110 = scalar_lea.vmem %s0, %s109
        %s111 = smul.u32 32, %s8
      $region24: #{gcn_forward.3} parent=19 // pred_fallthru
        _
    $region20: #{gcn_forward.3} parent=5 // pred_fallthru
      _
    %p112 = scmp.le.s32.totalorder 1, %s8
    %p113 = scmp.lt.s32.totalorder %s8, 3
    %p114 = pnand %p112, %p113
    %p115 = pneg %p114
    // Predicated region
    $region25: #{gcn_forward.3} parent=5 // pred_check
      _
    $region26: #{gcn_forward.3} parent=5 // pred_check_branch
      %117 = sbr.rel (%p114) target = $region28
    $region27: #{gcn_forward.3} parent=5 // pred_region
      %s118 = ssub.s32 %s8, 1
      %s119 = smul.u32 32, %s13
      %p120 = scmp.lt.s32.totalorder %s119, 63
      %s121 = scalar_select %p120, %s119, 63
      %s122 = smul.addr %s121, 4
      %s123 = scalar_lea.vmem %s0, %s122
      %p124 = pneg %p34
      %p125 = pneg %p31
      %p126 = pneg %p55
      %p127 = pneg %p52
      %p128 = pneg %p81
      %p129 = pneg %p78
      %s130 = smul.u32 32, %s13
      %p131 = scmp.lt.s32.totalorder %s130, 63
      %s132 = scalar_select %p131, %s130, 63
      %s133 = smul.addr %s132, 4
      %s134 = scalar_lea.vmem %s2, %s133
      %s135 = smul.u32 32, %s13
      %p136 = scmp.lt.s32.totalorder %s135, 63
      %s137 = scalar_select %p136, %s135, 63
      %s138 = smul.addr %s137, 4
      %s139 = scalar_lea.vmem %s0, %s138
      %s140 = smul.u32 32, %s13
      %s141 = smul.u32 32, %s13
      %p142 = scmp.lt.s32.totalorder %s141, 63
      %s143 = scalar_select %p142, %s141, 63
      %s144 = smul.addr %s143, 4
      %s145 = scalar_lea.vmem %s2, %s144
      %s146 = smul.u32 32, %s13
      %v148 = vld [vmem:[%s139] sm:$0xf]
      %v149 = vld [vmem:[%s139 + $0x4] sm:$0xf]
      %v150 = vld [vmem:[%s139 + $0x8] sm:$0xf]
      %v151 = vld [vmem:[%s139 + $0xc] sm:$0xf]
      %v152 = vld [vmem:[%s139 + $0x10] sm:$0xf]
      %v153 = vld [vmem:[%s139 + $0x14] sm:$0xf]
      %v154 = vld [vmem:[%s139 + $0x18] sm:$0xf]
      %v155 = vld [vmem:[%s139 + $0x1c] sm:$0xf]
      %v156 = vld [vmem:[%s139 + $0x20] sm:$0xf]
      %v157 = vld [vmem:[%s139 + $0x24] sm:$0xf]
      %v158 = vld [vmem:[%s139 + $0x28] sm:$0xf]
      %v159 = vld [vmem:[%s139 + $0x2c] sm:$0xf]
      %v160 = vld [vmem:[%s139 + $0x30] sm:$0xf]
      %v161 = vld [vmem:[%s139 + $0x34] sm:$0xf]
      %v162 = vld [vmem:[%s139 + $0x38] sm:$0xf]
      %v163 = vld [vmem:[%s139 + $0x3c] sm:$0xf]
      %v164 = vld [vmem:[%s139 + $0x40] sm:$0xf]
      %v165 = vld [vmem:[%s139 + $0x44] sm:$0xf]
      %v166 = vld [vmem:[%s139 + $0x48] sm:$0xf]
      %v167 = vld [vmem:[%s139 + $0x4c] sm:$0xf]
      %v168 = vld [vmem:[%s139 + $0x50] sm:$0xf]
      %v169 = vld [vmem:[%s139 + $0x54] sm:$0xf]
      %v170 = vld [vmem:[%s139 + $0x58] sm:$0xf]
      %v171 = vld [vmem:[%s139 + $0x5c] sm:$0xf]
      %v172 = vld [vmem:[%s139 + $0x60] sm:$0xf]
      %v173 = vld [vmem:[%s139 + $0x64] sm:$0xf]
      %v174 = vld [vmem:[%s139 + $0x68] sm:$0xf]
      %v175 = vld [vmem:[%s139 + $0x6c] sm:$0xf]
      %v176 = vld [vmem:[%s139 + $0x70] sm:$0xf]
      %v177 = vld [vmem:[%s139 + $0x74] sm:$0xf]
      %v178 = vld [vmem:[%s139 + $0x78] sm:$0xf]
      %v179 = vld [vmem:[%s139 + $0x7c] sm:$0xf]
      %v180 = vld [vmem:[%s1] sm:$0xf]
      %v181 = vld [vmem:[%s1 + $0x4] sm:$0xf]
      %v182 = vld [vmem:[%s1 + $0x8] sm:$0xf]
      %v183 = vld [vmem:[%s1 + $0xc] sm:$0xf]
      %v184 = vld [vmem:[%s1 + $0x10] sm:$0xf]
      %v185 = vld [vmem:[%s1 + $0x14] sm:$0xf]
      %v186 = vld [vmem:[%s1 + $0x18] sm:$0xf]
      %v187 = vld [vmem:[%s1 + $0x1c] sm:$0xf]
      %v188 = vld [vmem:[%s1 + $0x20] sm:$0xf]
      %v189 = vld [vmem:[%s1 + $0x24] sm:$0xf]
      %v190 = vld [vmem:[%s1 + $0x28] sm:$0xf]
      %v191 = vld [vmem:[%s1 + $0x2c] sm:$0xf]
      %v192 = vld [vmem:[%s1 + $0x30] sm:$0xf]
      %v193 = vld [vmem:[%s1 + $0x34] sm:$0xf]
      %v194 = vld [vmem:[%s1 + $0x38] sm:$0xf]
      %v195 = vld [vmem:[%s1 + $0x3c] sm:$0xf]
      %v228 = vunpack.c.l.b16 %v148
      %v229 = vunpack.c.l.b16 %v149
      %v230 = vunpack.c.l.b16 %v150
      %v231 = vunpack.c.l.b16 %v151
      %v232 = vunpack.c.l.b16 %v152
      %v233 = vunpack.c.l.b16 %v153
      %v234 = vunpack.c.l.b16 %v154
      %v235 = vunpack.c.l.b16 %v155
      %v236 = vunpack.c.l.b16 %v156
      %v237 = vunpack.c.l.b16 %v157
      %v238 = vunpack.c.l.b16 %v158
      %v239 = vunpack.c.l.b16 %v159
      %v240 = vunpack.c.l.b16 %v160
      %v241 = vunpack.c.l.b16 %v161
      %v242 = vunpack.c.l.b16 %v162
      %v243 = vunpack.c.l.b16 %v163
      %v244 = vunpack.c.l.b16 %v164
      %v245 = vunpack.c.l.b16 %v165
      %v246 = vunpack.c.l.b16 %v166
      %v247 = vunpack.c.l.b16 %v167
      %v248 = vunpack.c.l.b16 %v168
      %v249 = vunpack.c.l.b16 %v169
      %v250 = vunpack.c.l.b16 %v170
      %v251 = vunpack.c.l.b16 %v171
      %v252 = vunpack.c.l.b16 %v172
      %v253 = vunpack.c.l.b16 %v173
      %v254 = vunpack.c.l.b16 %v174
      %v255 = vunpack.c.l.b16 %v175
      %v256 = vunpack.c.l.b16 %v176
      %v257 = vunpack.c.l.b16 %v177
      %v258 = vunpack.c.l.b16 %v178
      %v259 = vunpack.c.l.b16 %v179
      %v260 = vpack.c.b16 %v229, %v228
      %v261 = vpack.c.b16 %v231, %v230
      %v262 = vpack.c.b16 %v233, %v232
      %v263 = vpack.c.b16 %v235, %v234
      %v264 = vpack.c.b16 %v237, %v236
      %v265 = vpack.c.b16 %v239, %v238
      %v266 = vpack.c.b16 %v241, %v240
      %v267 = vpack.c.b16 %v243, %v242
      %v268 = vpack.c.b16 %v245, %v244
      %v269 = vpack.c.b16 %v247, %v246
      %v270 = vpack.c.b16 %v249, %v248
      %v271 = vpack.c.b16 %v251, %v250
      %v272 = vpack.c.b16 %v253, %v252
      %v273 = vpack.c.b16 %v255, %v254
      %v274 = vpack.c.b16 %v257, %v256
      %v275 = vpack.c.b16 %v259, %v258
      %v308 = vunpack.c.l.b16 %v180
      %v309 = vunpack.c.l.b16 %v181
      %v310 = vunpack.c.l.b16 %v182
      %v311 = vunpack.c.l.b16 %v183
      %v312 = vunpack.c.l.b16 %v184
      %v313 = vunpack.c.l.b16 %v185
      %v314 = vunpack.c.l.b16 %v186
      %v315 = vunpack.c.l.b16 %v187
      %v316 = vunpack.c.l.b16 %v188
      %v317 = vunpack.c.l.b16 %v189
      %v318 = vunpack.c.l.b16 %v190
      %v319 = vunpack.c.l.b16 %v191
      %v320 = vunpack.c.l.b16 %v192
      %v321 = vunpack.c.l.b16 %v193
      %v322 = vunpack.c.l.b16 %v194
      %v323 = vunpack.c.l.b16 %v195
      %v324 = vpack.c.b16 %v309, %v308
      %v325 = vpack.c.b16 %v311, %v310
      %v326 = vpack.c.b16 %v313, %v312
      %v327 = vpack.c.b16 %v315, %v314
      %v328 = vpack.c.b16 %v317, %v316
      %v329 = vpack.c.b16 %v319, %v318
      %v330 = vpack.c.b16 %v321, %v320
      %v331 = vpack.c.b16 %v323, %v322
      %340 = vmatprep.subr.bf16.mxu0 0
      %341 = vmatpush1.bf16.msra.mxu0 %v331
      %342 = vmatprep.subr.bf16.mxu0 0
      %343 = vmatpush1.bf16.msra.mxu0 %v330
      %344 = vmatprep.subr.bf16.mxu0 0
      %345 = vmatpush1.bf16.msra.mxu0 %v329
      %346 = vmatprep.subr.bf16.mxu0 0
      %347 = vmatpush1.bf16.msra.mxu0 %v328
      %348 = vmatprep.subr.bf16.mxu0 0
      %349 = vmatpush1.bf16.msra.mxu0 %v327
      %350 = vmatprep.subr.bf16.mxu0 0
      %351 = vmatpush1.bf16.msra.mxu0 %v326
      %352 = vmatprep.subr.bf16.mxu0 0
      %353 = vmatpush1.bf16.msra.mxu0 %v325
      %354 = vmatprep.subr.bf16.mxu0 0
      %355 = vmatpush1.bf16.msra.mxu0 %v324
      %356 = vmatprep.subr.bf16.mxu0 0
      %357 = vmatpush2.bf16.msra.mxu0 0
      %358 = vmatprep.subr.bf16.mxu0 0
      %359 = vmatpush2.bf16.msra.mxu0 0
      %360 = vmatprep.subr.bf16.mxu0 0
      %361 = vmatpush2.bf16.msra.mxu0 0
      %362 = vmatprep.subr.bf16.mxu0 0
      %363 = vmatpush2.bf16.msra.mxu0 0
      %364 = vmatprep.subr.bf16.mxu0 0
      %365 = vmatpush2.bf16.msra.mxu0 0
      %366 = vmatprep.subr.bf16.mxu0 0
      %367 = vmatpush2.bf16.msra.mxu0 0
      %368 = vmatprep.subr.bf16.mxu0 0
      %369 = vmatpush2.bf16.msra.mxu0 0
      %370 = vmatprep.subr.bf16.mxu0 0
      %371 = vmatpush2.bf16.msra.mxu0 0
      %372 = vmatprep.mubr.bf16.mxu0 0
      %373 = vmatmul.mubr.bf16.gmra.mxu0 %v260
      %v374 = vpop.f32.mrf.mxu0
      %v375 = vadd.f32 0.0, %v374
      %v376 = vpop.f32.mrf.mxu0
      %v377 = vpop.f32.mrf.mxu0
      %v378 = vadd.f32 0.0, %v377
      %v379 = vpop.f32.mrf.mxu0
      %380 = vmatprep.mubr.bf16.mxu0 0
      %381 = vmatmul.mubr.bf16.gmra.mxu0 %v261
      %v382 = vpop.f32.mrf.mxu0
      %v383 = vadd.f32 0.0, %v382
      %v384 = vpop.f32.mrf.mxu0
      %v385 = vpop.f32.mrf.mxu0
      %v386 = vadd.f32 0.0, %v385
      %v387 = vpop.f32.mrf.mxu0
      %388 = vmatprep.mubr.bf16.mxu0 0
      %389 = vmatmul.mubr.bf16.gmra.mxu0 %v262
      %v390 = vpop.f32.mrf.mxu0
      %v391 = vadd.f32 0.0, %v390
      %v392 = vpop.f32.mrf.mxu0
      %v393 = vpop.f32.mrf.mxu0
      %v394 = vadd.f32 0.0, %v393
      %v395 = vpop.f32.mrf.mxu0
      %396 = vmatprep.mubr.bf16.mxu0 0
      %397 = vmatmul.mubr.bf16.gmra.mxu0 %v263
      %v398 = vpop.f32.mrf.mxu0
      %v399 = vadd.f32 0.0, %v398
      %v400 = vpop.f32.mrf.mxu0
      %v401 = vpop.f32.mrf.mxu0
      %v402 = vadd.f32 0.0, %v401
      %v403 = vpop.f32.mrf.mxu0
      %404 = vmatprep.mubr.bf16.mxu0 0
      %405 = vmatmul.mubr.bf16.gmra.mxu0 %v264
      %v406 = vpop.f32.mrf.mxu0
      %v407 = vadd.f32 0.0, %v406
      %v408 = vpop.f32.mrf.mxu0
      %v409 = vpop.f32.mrf.mxu0
      %v410 = vadd.f32 0.0, %v409
      %v411 = vpop.f32.mrf.mxu0
      %412 = vmatprep.mubr.bf16.mxu0 0
      %413 = vmatmul.mubr.bf16.gmra.mxu0 %v265
      %v414 = vpop.f32.mrf.mxu0
      %v415 = vadd.f32 0.0, %v414
      %v416 = vpop.f32.mrf.mxu0
      %v417 = vpop.f32.mrf.mxu0
      %v418 = vadd.f32 0.0, %v417
      %v419 = vpop.f32.mrf.mxu0
      %420 = vmatprep.mubr.bf16.mxu0 0
      %421 = vmatmul.mubr.bf16.gmra.mxu0 %v266
      %v422 = vpop.f32.mrf.mxu0
      %v423 = vadd.f32 0.0, %v422
      %v424 = vpop.f32.mrf.mxu0
      %v425 = vpop.f32.mrf.mxu0
      %v426 = vadd.f32 0.0, %v425
      %v427 = vpop.f32.mrf.mxu0
      %428 = vmatprep.mubr.bf16.mxu0 0
      %429 = vmatmul.mubr.bf16.gmra.mxu0 %v267
      %v430 = vpop.f32.mrf.mxu0
      %v431 = vadd.f32 0.0, %v430
      %v432 = vpop.f32.mrf.mxu0
      %v433 = vpop.f32.mrf.mxu0
      %v434 = vadd.f32 0.0, %v433
      %v435 = vpop.f32.mrf.mxu0
      %436 = vmatprep.mubr.bf16.mxu0 0
      %437 = vmatmul.mubr.bf16.gmra.mxu0 %v268
      %v438 = vpop.f32.mrf.mxu0
      %v439 = vadd.f32 0.0, %v438
      %v440 = vpop.f32.mrf.mxu0
      %v441 = vpop.f32.mrf.mxu0
      %v442 = vadd.f32 0.0, %v441
      %v443 = vpop.f32.mrf.mxu0
      %444 = vmatprep.mubr.bf16.mxu0 0
      %445 = vmatmul.mubr.bf16.gmra.mxu0 %v269
      %v446 = vpop.f32.mrf.mxu0
      %v447 = vadd.f32 0.0, %v446
      %v448 = vpop.f32.mrf.mxu0
      %v449 = vpop.f32.mrf.mxu0
      %v450 = vadd.f32 0.0, %v449
      %v451 = vpop.f32.mrf.mxu0
      %452 = vmatprep.mubr.bf16.mxu0 0
      %453 = vmatmul.mubr.bf16.gmra.mxu0 %v270
      %v454 = vpop.f32.mrf.mxu0
      %v455 = vadd.f32 0.0, %v454
      %v456 = vpop.f32.mrf.mxu0
      %v457 = vpop.f32.mrf.mxu0
      %v458 = vadd.f32 0.0, %v457
      %v459 = vpop.f32.mrf.mxu0
      %460 = vmatprep.mubr.bf16.mxu0 0
      %461 = vmatmul.mubr.bf16.gmra.mxu0 %v271
      %v462 = vpop.f32.mrf.mxu0
      %v463 = vadd.f32 0.0, %v462
      %v464 = vpop.f32.mrf.mxu0
      %v465 = vpop.f32.mrf.mxu0
      %v466 = vadd.f32 0.0, %v465
      %v467 = vpop.f32.mrf.mxu0
      %468 = vmatprep.mubr.bf16.mxu0 0
      %469 = vmatmul.mubr.bf16.gmra.mxu0 %v272
      %v470 = vpop.f32.mrf.mxu0
      %v471 = vadd.f32 0.0, %v470
      %v472 = vpop.f32.mrf.mxu0
      %v473 = vpop.f32.mrf.mxu0
      %v474 = vadd.f32 0.0, %v473
      %v475 = vpop.f32.mrf.mxu0
      %476 = vmatprep.mubr.bf16.mxu0 0
      %477 = vmatmul.mubr.bf16.gmra.mxu0 %v273
      %v478 = vpop.f32.mrf.mxu0
      %v479 = vadd.f32 0.0, %v478
      %v480 = vpop.f32.mrf.mxu0
      %v481 = vpop.f32.mrf.mxu0
      %v482 = vadd.f32 0.0, %v481
      %v483 = vpop.f32.mrf.mxu0
      %484 = vmatprep.mubr.bf16.mxu0 0
      %485 = vmatmul.mubr.bf16.gmra.mxu0 %v274
      %v486 = vpop.f32.mrf.mxu0
      %v487 = vadd.f32 0.0, %v486
      %v488 = vpop.f32.mrf.mxu0
      %v489 = vpop.f32.mrf.mxu0
      %v490 = vadd.f32 0.0, %v489
      %v491 = vpop.f32.mrf.mxu0
      %492 = vmatprep.mubr.bf16.mxu0 0
      %493 = vmatmul.mubr.bf16.gmra.mxu0 %v275
      %v494 = vpop.f32.mrf.mxu0
      %v495 = vadd.f32 0.0, %v494
      %v496 = vpop.f32.mrf.mxu0
      %v497 = vpop.f32.mrf.mxu0
      %v498 = vadd.f32 0.0, %v497
      %v499 = vpop.f32.mrf.mxu0
      %500 = vdwg.mxu0
      %v501 = vpack.c.bf16 %v378, %v375
      %v502 = vpack.c.bf16 %v386, %v383
      %v503 = vpack.c.bf16 %v394, %v391
      %v504 = vpack.c.bf16 %v402, %v399
      %v505 = vpack.c.bf16 %v410, %v407
      %v506 = vpack.c.bf16 %v418, %v415
      %v507 = vpack.c.bf16 %v426, %v423
      %v508 = vpack.c.bf16 %v434, %v431
      %v509 = vpack.c.bf16 %v442, %v439
      %v510 = vpack.c.bf16 %v450, %v447
      %v511 = vpack.c.bf16 %v458, %v455
      %v512 = vpack.c.bf16 %v466, %v463
      %v513 = vpack.c.bf16 %v474, %v471
      %v514 = vpack.c.bf16 %v482, %v479
      %v515 = vpack.c.bf16 %v490, %v487
      %v516 = vpack.c.bf16 %v498, %v495
      %v533 = vunpack.c.l.b16 %v501
      %v534 = vunpack.c.h.b16 %v501
      %v535 = vunpack.c.l.b16 %v502
      %v536 = vunpack.c.h.b16 %v502
      %v537 = vunpack.c.l.b16 %v503
      %v538 = vunpack.c.h.b16 %v503
      %v539 = vunpack.c.l.b16 %v504
      %v540 = vunpack.c.h.b16 %v504
      %v541 = vunpack.c.l.b16 %v505
      %v542 = vunpack.c.h.b16 %v505
      %v543 = vunpack.c.l.b16 %v506
      %v544 = vunpack.c.h.b16 %v506
      %v545 = vunpack.c.l.b16 %v507
      %v546 = vunpack.c.h.b16 %v507
      %v547 = vunpack.c.l.b16 %v508
      %v548 = vunpack.c.h.b16 %v508
      %v549 = vunpack.c.l.b16 %v509
      %v550 = vunpack.c.h.b16 %v509
      %v551 = vunpack.c.l.b16 %v510
      %v552 = vunpack.c.h.b16 %v510
      %v553 = vunpack.c.l.b16 %v511
      %v554 = vunpack.c.h.b16 %v511
      %v555 = vunpack.c.l.b16 %v512
      %v556 = vunpack.c.h.b16 %v512
      %v557 = vunpack.c.l.b16 %v513
      %v558 = vunpack.c.h.b16 %v513
      %v559 = vunpack.c.l.b16 %v514
      %v560 = vunpack.c.h.b16 %v514
      %v561 = vunpack.c.l.b16 %v515
      %v562 = vunpack.c.h.b16 %v515
      %v563 = vunpack.c.l.b16 %v516
      %v564 = vunpack.c.h.b16 %v516
      %v565 = vpack.c.b16 %v533, %v533
      %v566 = vpack.c.b16 %v534, %v534
      %v567 = vpack.c.b16 %v535, %v535
      %v568 = vpack.c.b16 %v536, %v536
      %v569 = vpack.c.b16 %v537, %v537
      %v570 = vpack.c.b16 %v538, %v538
      %v571 = vpack.c.b16 %v539, %v539
      %v572 = vpack.c.b16 %v540, %v540
      %v573 = vpack.c.b16 %v541, %v541
      %v574 = vpack.c.b16 %v542, %v542
      %v575 = vpack.c.b16 %v543, %v543
      %v576 = vpack.c.b16 %v544, %v544
      %v577 = vpack.c.b16 %v545, %v545
      %v578 = vpack.c.b16 %v546, %v546
      %v579 = vpack.c.b16 %v547, %v547
      %v580 = vpack.c.b16 %v548, %v548
      %v581 = vpack.c.b16 %v549, %v549
      %v582 = vpack.c.b16 %v550, %v550
      %v583 = vpack.c.b16 %v551, %v551
      %v584 = vpack.c.b16 %v552, %v552
      %v585 = vpack.c.b16 %v553, %v553
      %v586 = vpack.c.b16 %v554, %v554
      %v587 = vpack.c.b16 %v555, %v555
      %v588 = vpack.c.b16 %v556, %v556
      %v589 = vpack.c.b16 %v557, %v557
      %v590 = vpack.c.b16 %v558, %v558
      %v591 = vpack.c.b16 %v559, %v559
      %v592 = vpack.c.b16 %v560, %v560
      %v593 = vpack.c.b16 %v561, %v561
      %v594 = vpack.c.b16 %v562, %v562
      %v595 = vpack.c.b16 %v563, %v563
      %v596 = vpack.c.b16 %v564, %v564
      %vm629 = vcmask 125952
      %630 = vst.msk [vmem:[%s145] sm:$0xf] %vm629, %v565
      %631 = vst.msk [vmem:[%s145 + $0x4] sm:$0xf] %vm629, %v566
      %632 = vst.msk [vmem:[%s145 + $0x8] sm:$0xf] %vm629, %v567
      %633 = vst.msk [vmem:[%s145 + $0xc] sm:$0xf] %vm629, %v568
      %634 = vst.msk [vmem:[%s145 + $0x10] sm:$0xf] %vm629, %v569
      %635 = vst.msk [vmem:[%s145 + $0x14] sm:$0xf] %vm629, %v570
      %636 = vst.msk [vmem:[%s145 + $0x18] sm:$0xf] %vm629, %v571
      %637 = vst.msk [vmem:[%s145 + $0x1c] sm:$0xf] %vm629, %v572
      %638 = vst.msk [vmem:[%s145 + $0x20] sm:$0xf] %vm629, %v573
      %639 = vst.msk [vmem:[%s145 + $0x24] sm:$0xf] %vm629, %v574
      %640 = vst.msk [vmem:[%s145 + $0x28] sm:$0xf] %vm629, %v575
      %641 = vst.msk [vmem:[%s145 + $0x2c] sm:$0xf] %vm629, %v576
      %642 = vst.msk [vmem:[%s145 + $0x30] sm:$0xf] %vm629, %v577
      %643 = vst.msk [vmem:[%s145 + $0x34] sm:$0xf] %vm629, %v578
      %644 = vst.msk [vmem:[%s145 + $0x38] sm:$0xf] %vm629, %v579
      %645 = vst.msk [vmem:[%s145 + $0x3c] sm:$0xf] %vm629, %v580
      %646 = vst.msk [vmem:[%s145 + $0x40] sm:$0xf] %vm629, %v581
      %647 = vst.msk [vmem:[%s145 + $0x44] sm:$0xf] %vm629, %v582
      %648 = vst.msk [vmem:[%s145 + $0x48] sm:$0xf] %vm629, %v583
      %649 = vst.msk [vmem:[%s145 + $0x4c] sm:$0xf] %vm629, %v584
      %650 = vst.msk [vmem:[%s145 + $0x50] sm:$0xf] %vm629, %v585
      %651 = vst.msk [vmem:[%s145 + $0x54] sm:$0xf] %vm629, %v586
      %652 = vst.msk [vmem:[%s145 + $0x58] sm:$0xf] %vm629, %v587
      %653 = vst.msk [vmem:[%s145 + $0x5c] sm:$0xf] %vm629, %v588
      %654 = vst.msk [vmem:[%s145 + $0x60] sm:$0xf] %vm629, %v589
      %655 = vst.msk [vmem:[%s145 + $0x64] sm:$0xf] %vm629, %v590
      %656 = vst.msk [vmem:[%s145 + $0x68] sm:$0xf] %vm629, %v591
      %657 = vst.msk [vmem:[%s145 + $0x6c] sm:$0xf] %vm629, %v592
      %658 = vst.msk [vmem:[%s145 + $0x70] sm:$0xf] %vm629, %v593
      %659 = vst.msk [vmem:[%s145 + $0x74] sm:$0xf] %vm629, %v594
      %660 = vst.msk [vmem:[%s145 + $0x78] sm:$0xf] %vm629, %v595
      %661 = vst.msk [vmem:[%s145 + $0x7c] sm:$0xf] %vm629, %v596
      %s662 = smul.u32 32, %s13
      %p663 = scmp.lt.s32.totalorder %s662, 63
      %s664 = scalar_select %p663, %s662, 63
      %s665 = smul.addr %s664, 4
      %s666 = scalar_lea.vmem %s2, %s665
      // Predicated region
      $region29: #{gcn_forward.3} parent=27 // pred_check
        %p667 = pneg %p78
      $region30: #{gcn_forward.3} parent=27 // pred_check_branch
        %669 = sbr.rel (%p667) target = $region32
      $region31: #{gcn_forward.3} parent=27 // pred_region
        %s670 = smul.u32 32, %s13
      $region32: #{gcn_forward.3} parent=27 // pred_fallthru
        _
    $region28: #{gcn_forward.3} parent=5 // pred_fallthru
      _
    %p671 = scmp.le.s32.totalorder 2, %s8
    // Predicated region
    $region33: #{gcn_forward.3} parent=5 // pred_check
      %p672 = pneg %p671
    $region34: #{gcn_forward.3} parent=5 // pred_check_branch
      %674 = sbr.rel (%p672) target = $region36
    $region35: #{gcn_forward.3} parent=5 // pred_region
      %s675 = ssub.s32 %s8, 2
      // Predicated region
      $region37: #{gcn_forward.3} parent=35 // pred_check
        %p676 = pneg %p84
      $region38: #{gcn_forward.3} parent=35 // pred_check_branch
        %678 = sbr.rel (%p676) target = $region40
      $region39: #{gcn_forward.3} parent=35 // pred_region
        %s679 = smul.u32 32, %s14
        %p680 = scmp.lt.s32.totalorder %s679, 63
        %s681 = scalar_select %p680, %s679, 63
        %s682 = smul.addr %s681, 4
        %s683 = scalar_lea.vmem %s2, %s682
      $region40: #{gcn_forward.3} parent=35 // pred_fallthru
        _
    $region36: #{gcn_forward.3} parent=5 // pred_fallthru
      _
  $region6: #{gcn_forward.3} parent=0 // loop_footer
    %s12 = sadd.s32 1, %s8
  $region7: #{gcn_forward.3} parent=0 // loop_footer_branch
    %7 = sbr.rel target = $region3
  $region8: #{gcn_forward.3} parent=0 // loop_exit
    _

// kernel: gcn_forward.4
$region0: #{gcn_forward.4}
  #allocation0 [shape = 'u32[]', space=smem, size = 0x4, offset = 0x4, fixed_abs, tag = 'smem constant byte address 0x4 - core index']
  #allocation1 [shape = 'u32[144,128]{1,0:T(1,128)}', space=vmem, size = 0x12000, scoped, tag = 'internal scratch']
  #allocation2 [shape = 'f32[256,16]{1,0:T(8,128)}', space=vmem, size = 0x20000, scoped, tag = 'scratch operand']
  #allocation3 [shape = 's32[1]{0}', space=sflag, size = 0x4, scoped, tag = 'scoped memory for gcn_forward.4']
  #allocation4 [shape = 'u8[512]{0}', space=smem, size = 0x200, scoped, tag = 'prefetched SMEM operand 0']
  #allocation5 [shape = 'u8[512]{0}', space=smem, size = 0x200, scoped, tag = 'prefetched SMEM operand 1']
  %s0 = inlined_call_operand.vmem [shape: s32[4], index: 0, kind: input, shape index: {}]
  %s1 = inlined_call_operand.vmem [shape: s32[2], index: 1, kind: input, shape index: {}]
  %s2 = inlined_call_operand.vmem [shape: bf16[512,512], index: 2, kind: input, shape index: {}]
  %s3 = inlined_call_operand.vmem [shape: bf16[512,16], index: 3, kind: input, shape index: {}]
  %s4 = inlined_call_operand.vmem [shape: f32[1,16], index: 4, kind: input, shape index: {}]
  %s5 = inlined_call_operand.vmem [shape: bf16[16,8], index: 5, kind: input, shape index: {}]
  %s6 = inlined_call_operand.vmem [shape: bf16[512,8], index: 6, kind: output, shape index: {}]
  %s7 = sld [smem:[#allocation0]]
  $region99: #{gcn_forward.4} parent=0
    _
  %s9 = ssub.s32 1, %s7
  %s10 = scalar_select 0, %s9, %s7
  %s11 = sshll.u32 %s0, 4
  %s12 = int_to_ptr.vmem [resolvable:$true] %s11
  %14 = dma.vmem_to_smem %s12, 16, [#allocation4], [#allocation3]
  %s15 = sshll.u32 %s1, 4
  %s16 = int_to_ptr.vmem [resolvable:$true] %s15
  %18 = dma.vmem_to_smem %s16, 16, [#allocation5], [#allocation3]
  %19 = dma.done [#allocation3], 32
  %20 = sfence
  $region1: #{gcn_forward.4} parent=0
    #allocation6 [shape = 'u8[262144]{0}', space=vmem, size = 0x40000, scoped, tag = 'input window, operand 2']
    loop: start=0, step=1, limit=6
    $region2: #{gcn_forward.4} parent=1 // loop_pre_header
      _
    $region3: #{gcn_forward.4} parent=1 // loop_header
      %s22 = sphi 0, %s26
      %p23 = scmp.ge.s32.totalorder %s22, 6
      %s29 = sphi 0, %s41
      %s30 = sphi 0, %s37
      %s31 = sphi 0, %s29
      %s32 = sphi 0, %s30
      %s33 = sphi 0, %s31
      %s34 = sphi 0, %s32
      %s52 = sphi 0, %s54
      %s55 = sphi 0, %s52
      %s56 = sphi 0, %s55
      %s72 = sphi 0, %s56
      %s76 = sphi 0, %s76
      %s78 = sphi 0, %s76
      %s79 = sphi 0, %s78
      %s93 = sphi 0, %s79
      %s97 = sphi 0, %s97
      %s99 = sphi 0, %s97
      %s100 = sphi 0, %s99
      %s114 = sphi 0, %s100
      %s118 = sphi 0, %s118
      %s120 = sphi 0, %s118
      %s121 = sphi 0, %s120
      %s135 = sphi 0, %s121
      %s141 = sphi 0, %s143
      %s144 = sphi 0, %s141
      %s145 = sphi 0, %s144
      %s161 = sphi 0, %s145
    $region4: #{gcn_forward.4} parent=1 // loop_header_branch
      %25 = sbr.rel (%p23) target = $region8
    $region5: #{gcn_forward.4} parent=1 // loop_body
      %s27 = ssub.s32 %s22, 1
      %s28 = ssub.s32 %s22, 2
      %s35 = sadd.s32 1, %s30
      %p36 = scmp.ge.s32.totalorder %s35, 2
      %s37 = scalar_select %p36, 0, %s35
      %s38 = sadd.s32 1, %s29
      %s39 = scalar_select %p36, %s38, %s29
      %p40 = scmp.ge.s32.totalorder %s39, 2
      %s41 = scalar_select %p40, 0, %s39
      %s42 = smul.u32 %s29, 2
      %s43 = sadd.s32 %s42, %s30
      %s44 = sld [smem:[#allocation4 + %s43]]
      %s45 = smul.u32 %s41, 2
      %s46 = sadd.s32 %s45, %s37
      %s47 = sld [smem:[#allocation4 + %s46]]
      %s48 = ssub.s32 %s29, %s41
      %s49 = ssub.s32 %s44, %s47
      %s50 = sor.u32 %s48, %s49
      %p51 = scmp.eq.s32.totalorder %s50, 0
      %s53 = sadd.s32 %s52, 1
      %s54 = scalar_select %p51, %s52, %s53
      %p57 = pneg %p51
      %p58 = scmp.eq.s32.totalorder %s22, 3
      %p59 = por %p57, %p58
      %p60 = scmp.ne.s32.totalorder %s52, %s55
      %p61 = scmp.eq.s32.totalorder %s22, 0
      %p62 = por %p60, %p61
      %p63 = scmp.ne.s32.totalorder %s52, %s55
      %p64 = scmp.eq.s32.totalorder %s27, 3
      %p65 = por %p63, %p64
      %p66 = scmp.ne.s32.totalorder %s55, %s56
      %p67 = scmp.eq.s32.totalorder %s27, 0
      %p68 = por %p66, %p67
      %p69 = scmp.ne.s32.totalorder %s55, %s56
      %p70 = scmp.eq.s32.totalorder %s28, 3
      %p71 = por %p69, %p70
      %p73 = scmp.ne.s32.totalorder %s56, %s72
      %p74 = scmp.eq.s32.totalorder %s28, 0
      %p75 = por %p73, %p74
      %s77 = sadd.s32 %s76, 1
      %p80 = scmp.eq.s32.totalorder %s22, 3
      %p81 = scmp.ne.s32.totalorder %s76, %s78
      %p82 = scmp.eq.s32.totalorder %s22, 0
      %p83 = por %p81, %p82
      %p84 = scmp.ne.s32.totalorder %s76, %s78
      %p85 = scmp.eq.s32.totalorder %s27, 3
      %p86 = por %p84, %p85
      %p87 = scmp.ne.s32.totalorder %s78, %s79
      %p88 = scmp.eq.s32.totalorder %s27, 0
      %p89 = por %p87, %p88
      %p90 = scmp.ne.s32.totalorder %s78, %s79
      %p91 = scmp.eq.s32.totalorder %s28, 3
      %p92 = por %p90, %p91
      %p94 = scmp.ne.s32.totalorder %s79, %s93
      %p95 = scmp.eq.s32.totalorder %s28, 0
      %p96 = por %p94, %p95
      %s98 = sadd.s32 %s97, 1
      %p101 = scmp.eq.s32.totalorder %s22, 3
      %p102 = scmp.ne.s32.totalorder %s97, %s99
      %p103 = scmp.eq.s32.totalorder %s22, 0
      %p104 = por %p102, %p103
      %p105 = scmp.ne.s32.totalorder %s97, %s99
      %p106 = scmp.eq.s32.totalorder %s27, 3
      %p107 = por %p105, %p106
      %p108 = scmp.ne.s32.totalorder %s99, %s100
      %p109 = scmp.eq.s32.totalorder %s27, 0
      %p110 = por %p108, %p109
      %p111 = scmp.ne.s32.totalorder %s99, %s100
      %p112 = scmp.eq.s32.totalorder %s28, 3
      %p113 = por %p111, %p112
      %p115 = scmp.ne.s32.totalorder %s100, %s114
      %p116 = scmp.eq.s32.totalorder %s28, 0
      %p117 = por %p115, %p116
      %s119 = sadd.s32 %s118, 1
      %p122 = scmp.eq.s32.totalorder %s22, 3
      %p123 = scmp.ne.s32.totalorder %s118, %s120
      %p124 = scmp.eq.s32.totalorder %s22, 0
      %p125 = por %p123, %p124
      %p126 = scmp.ne.s32.totalorder %s118, %s120
      %p127 = scmp.eq.s32.totalorder %s27, 3
      %p128 = por %p126, %p127
      %p129 = scmp.ne.s32.totalorder %s120, %s121
      %p130 = scmp.eq.s32.totalorder %s27, 0
      %p131 = por %p129, %p130
      %p132 = scmp.ne.s32.totalorder %s120, %s121
      %p133 = scmp.eq.s32.totalorder %s28, 3
      %p134 = por %p132, %p133
      %p136 = scmp.ne.s32.totalorder %s121, %s135
      %p137 = scmp.eq.s32.totalorder %s28, 0
      %p138 = por %p136, %p137
      %s139 = ssub.s32 %s29, %s41
      %p140 = scmp.eq.s32.totalorder %s139, 0
      %s142 = sadd.s32 %s141, 1
      %s143 = scalar_select %p140, %s141, %s142
      %p146 = pneg %p140
      %p147 = scmp.eq.s32.totalorder %s22, 3
      %p148 = por %p146, %p147
      %p149 = scmp.ne.s32.totalorder %s141, %s144
      %p150 = scmp.eq.s32.totalorder %s22, 0
      %p151 = por %p149, %p150
      %p152 = scmp.ne.s32.totalorder %s141, %s144
      %p153 = scmp.eq.s32.totalorder %s27, 3
      %p154 = por %p152, %p153
      %p155 = scmp.ne.s32.totalorder %s144, %s145
      %p156 = scmp.eq.s32.totalorder %s27, 0
      %p157 = por %p155, %p156
      %p158 = scmp.ne.s32.totalorder %s144, %s145
      %p159 = scmp.eq.s32.totalorder %s28, 3
      %p160 = por %p158, %p159
      %p162 = scmp.ne.s32.totalorder %s145, %s161
      %p163 = scmp.eq.s32.totalorder %s28, 0
      %p164 = por %p162, %p163
      %p165 = scmp.le.s32.totalorder 1, %s22
      %p166 = scmp.lt.s32.totalorder %s22, 5
      %p167 = pnand %p165, %p166
      %p168 = pneg %p167
      // Predicated region
      $region9: #{gcn_forward.4} parent=5 // pred_check
        _
      $region10: #{gcn_forward.4} parent=5 // pred_check_branch
        %170 = sbr.rel (%p167) target = $region12
      $region11: #{gcn_forward.4} parent=5 // pred_region
        %s171 = ssub.s32 %s22, 1
        // Predicated region
        $region13: #{gcn_forward.4} parent=11 // pred_check
          %p172 = pneg %p89
        $region14: #{gcn_forward.4} parent=11 // pred_check_branch
          %174 = sbr.rel (%p172) target = $region16
        $region15: #{gcn_forward.4} parent=11 // pred_region
          _
        $region16: #{gcn_forward.4} parent=11 // pred_fallthru
          _
        // Predicated region
        $region17: #{gcn_forward.4} parent=11 // pred_check
          %p175 = pneg %p110
        $region18: #{gcn_forward.4} parent=11 // pred_check_branch
          %177 = sbr.rel (%p175) target = $region20
        $region19: #{gcn_forward.4} parent=11 // pred_region
          _
        $region20: #{gcn_forward.4} parent=11 // pred_fallthru
          _
        // Predicated region
        $region21: #{gcn_forward.4} parent=11 // pred_check
          %p178 = pneg %p131
        $region22: #{gcn_forward.4} parent=11 // pred_check_branch
          %180 = sbr.rel (%p178) target = $region24
        $region23: #{gcn_forward.4} parent=11 // pred_region
          _
        $region24: #{gcn_forward.4} parent=11 // pred_fallthru
          _
      $region12: #{gcn_forward.4} parent=5 // pred_fallthru
        _
      %p181 = scmp.lt.s32.totalorder %s22, 4
      // Predicated region
      $region25: #{gcn_forward.4} parent=5 // pred_check
        %p182 = pneg %p181
      $region26: #{gcn_forward.4} parent=5 // pred_check_branch
        %184 = sbr.rel (%p182) target = $region28
      $region27: #{gcn_forward.4} parent=5 // pred_region
        // Predicated region
        $region29: #{gcn_forward.4} parent=27 // pred_check
          %p185 = pneg %p62
        $region30: #{gcn_forward.4} parent=27 // pred_check_branch
          %187 = sbr.rel (%p185) target = $region32
        $region31: #{gcn_forward.4} parent=27 // pred_region
          %s188 = sand.u32 %s52, 1
          %s189 = sand.u32 %s52, 1
          %s190 = smul.addr %s189, 256
          %s191 = scalar_lea.vmem [#allocation6], %s190
          %s192 = smul.u32 %s29, 2
          %s193 = sadd.s32 %s192, %s30
          %s194 = sld [smem:[#allocation4 + %s193]]
          %s195 = smul.u32 32, %s29
          %s196 = smul.u32 2, %s194
          %s197 = smul.addr %s195, 4
          %s198 = sadd.s32 %s196, %s197
          %s199 = smul.addr %s198, 4
          %s200 = scalar_lea.vmem %s2, %s199
          // Predicated region
          $region33: #{gcn_forward.4} parent=31 // pred_check
            _
          $region34: #{gcn_forward.4} parent=31 // pred_check_branch
            %202 = sbr.rel (0) target = $region36
          $region35: #{gcn_forward.4} parent=31 // pred_region
            // Predicated region
            $region37: #{gcn_forward.4} parent=35 // pred_check
              _
            $region38: #{gcn_forward.4} parent=35 // pred_check_branch
              %204 = sbr.rel (0) target = $region40
            $region39: #{gcn_forward.4} parent=35 // pred_region
              // Predicated region
              $region52: #{gcn_forward.4} parent=39 // pred_check
                _
              $region53: #{gcn_forward.4} parent=39 // pred_check_branch
                %282 = sbr.rel (0) target = $region55
              $region54: #{gcn_forward.4} parent=39 // pred_region
                loop: start=0, step=1, limit=1
                $region56: #{gcn_forward.4} parent=54 // loop_pre_header
                  _
                $region57: #{gcn_forward.4} parent=54 // loop_header
                  %s284 = sphi 0, %s288
                  %p285 = scmp.ge.s32.totalorder %s284, 1
                  %s289 = sphi %s200, %s200
                  %s290 = sphi %s191, %s191
                $region58: #{gcn_forward.4} parent=54 // loop_header_branch
                  %287 = sbr.rel (%p285) target = $region62
                $region59: #{gcn_forward.4} parent=54 // loop_body
                  %v291 = vld [vmem:[%s289] sm:$0xff]
                  %292 = vst [vmem:[%s290] sm:$0xff] %v291
                  %v293 = vld [vmem:[%s289 + $0x10] sm:$0xff]
                  %294 = vst [vmem:[%s290 + $0x8] sm:$0xff] %v293
                  %v295 = vld [vmem:[%s289 + $0x20] sm:$0xff]
                  %296 = vst [vmem:[%s290 + $0x10] sm:$0xff] %v295
                  %v297 = vld [vmem:[%s289 + $0x30] sm:$0xff]
                  %298 = vst [vmem:[%s290 + $0x18] sm:$0xff] %v297
                  %v299 = vld [vmem:[%s289 + $0x40] sm:$0xff]
                  %300 = vst [vmem:[%s290 + $0x20] sm:$0xff] %v299
                  %v301 = vld [vmem:[%s289 + $0x50] sm:$0xff]
                  %302 = vst [vmem:[%s290 + $0x28] sm:$0xff] %v301
                  %v303 = vld [vmem:[%s289 + $0x60] sm:$0xff]
                  %304 = vst [vmem:[%s290 + $0x30] sm:$0xff] %v303
                  %v305 = vld [vmem:[%s289 + $0x70] sm:$0xff]
                  %306 = vst [vmem:[%s290 + $0x38] sm:$0xff] %v305
                  %v307 = vld [vmem:[%s289 + $0x80] sm:$0xff]
                  %308 = vst [vmem:[%s290 + $0x40] sm:$0xff] %v307
                  %v309 = vld [vmem:[%s289 + $0x90] sm:$0xff]
                  %310 = vst [vmem:[%s290 + $0x48] sm:$0xff] %v309
                  %v311 = vld [vmem:[%s289 + $0xa0] sm:$0xff]
                  %312 = vst [vmem:[%s290 + $0x50] sm:$0xff] %v311
                  %v313 = vld [vmem:[%s289 + $0xb0] sm:$0xff]
                  %314 = vst [vmem:[%s290 + $0x58] sm:$0xff] %v313
                  %v315 = vld [vmem:[%s289 + $0xc0] sm:$0xff]
                  %316 = vst [vmem:[%s290 + $0x60] sm:$0xff] %v315
                  %v317 = vld [vmem:[%s289 + $0xd0] sm:$0xff]
                  %318 = vst [vmem:[%s290 + $0x68] sm:$0xff] %v317
                  %v319 = vld [vmem:[%s289 + $0xe0] sm:$0xff]
                  %320 = vst [vmem:[%s290 + $0x70] sm:$0xff] %v319
                  %v321 = vld [vmem:[%s289 + $0xf0] sm:$0xff]
                  %322 = vst [vmem:[%s290 + $0x78] sm:$0xff] %v321
                  %v323 = vld [vmem:[%s289 + $0x100] sm:$0xff]
                  %324 = vst [vmem:[%s290 + $0x80] sm:$0xff] %v323
                  %v325 = vld [vmem:[%s289 + $0x110] sm:$0xff]
                  %326 = vst [vmem:[%s290 + $0x88] sm:$0xff] %v325
                  %v327 = vld [vmem:[%s289 + $0x120] sm:$0xff]
                  %328 = vst [vmem:[%s290 + $0x90] sm:$0xff] %v327
                  %v329 = vld [vmem:[%s289 + $0x130] sm:$0xff]
                  %330 = vst [vmem:[%s290 + $0x98] sm:$0xff] %v329
                  %v331 = vld [vmem:[%s289 + $0x140] sm:$0xff]
                  %332 = vst [vmem:[%s290 + $0xa0] sm:$0xff] %v331
                  %v333 = vld [vmem:[%s289 + $0x150] sm:$0xff]
                  %334 = vst [vmem:[%s290 + $0xa8] sm:$0xff] %v333
                  %v335 = vld [vmem:[%s289 + $0x160] sm:$0xff]
                  %336 = vst [vmem:[%s290 + $0xb0] sm:$0xff] %v335
                  %v337 = vld [vmem:[%s289 + $0x170] sm:$0xff]
                  %338 = vst [vmem:[%s290 + $0xb8] sm:$0xff] %v337
                  %v339 = vld [vmem:[%s289 + $0x180] sm:$0xff]
                  %340 = vst [vmem:[%s290 + $0xc0] sm:$0xff] %v339
                  %v341 = vld [vmem:[%s289 + $0x190] sm:$0xff]
                  %342 = vst [vmem:[%s290 + $0xc8] sm:$0xff] %v341
                  %v343 = vld [vmem:[%s289 + $0x1a0] sm:$0xff]
                  %344 = vst [vmem:[%s290 + $0xd0] sm:$0xff] %v343
                  %v345 = vld [vmem:[%s289 + $0x1b0] sm:$0xff]
                  %346 = vst [vmem:[%s290 + $0xd8] sm:$0xff] %v345
                  %v347 = vld [vmem:[%s289 + $0x1c0] sm:$0xff]
                  %348 = vst [vmem:[%s290 + $0xe0] sm:$0xff] %v347
                  %v349 = vld [vmem:[%s289 + $0x1d0] sm:$0xff]
                  %350 = vst [vmem:[%s290 + $0xe8] sm:$0xff] %v349
                  %v351 = vld [vmem:[%s289 + $0x1e0] sm:$0xff]
                  %352 = vst [vmem:[%s290 + $0xf0] sm:$0xff] %v351
                  %v353 = vld [vmem:[%s289 + $0x1f0] sm:$0xff]
                  %354 = vst [vmem:[%s290 + $0xf8] sm:$0xff] %v353
                $region60: #{gcn_forward.4} parent=54 // loop_footer
                  %s288 = sadd.s32 1, %s284
                $region61: #{gcn_forward.4} parent=54 // loop_footer_branch
                  %283 = sbr.rel target = $region57
                $region62: #{gcn_forward.4} parent=54 // loop_exit
                  _
              $region55: #{gcn_forward.4} parent=39 // pred_fallthru
                _
              // Predicated region
              $region63: #{gcn_forward.4} parent=39 // pred_check
                _
              $region64: #{gcn_forward.4} parent=39 // pred_check_branch
                %356 = sbr.rel target = $region66
              $region65: #{gcn_forward.4} parent=39 // pred_region
                _
              $region66: #{gcn_forward.4} parent=39 // pred_fallthru
                _
            $region40: #{gcn_forward.4} parent=35 // pred_fallthru
              _
            // Predicated region
            $region41: #{gcn_forward.4} parent=35 // pred_check
              _
            $region42: #{gcn_forward.4} parent=35 // pred_check_branch
              %206 = sbr.rel target = $region44
            $region43: #{gcn_forward.4} parent=35 // pred_region
              %s208 = ssub.s32 256, 1
              loop: start=0, step=1, limit=1
              $region45: #{gcn_forward.4} parent=43 // loop_pre_header
                _
              $region46: #{gcn_forward.4} parent=43 // loop_header
                %s210 = sphi 0, %s214
                %p211 = scmp.ge.s32.totalorder %s210, 1
                %s215 = sphi %s200, %s200
                %s216 = sphi %s191, %s191
              $region47: #{gcn_forward.4} parent=43 // loop_header_branch
                %213 = sbr.rel (%p211) target = $region51
              $region48: #{gcn_forward.4} parent=43 // loop_body
                %v217 = vld [vmem:[%s215] sm:%s208]
                %218 = vst [vmem:[%s216] sm:%s208] %v217
                %v219 = vld [vmem:[%s215 + $0x10] sm:%s208]
                %220 = vst [vmem:[%s216 + $0x8] sm:%s208] %v219
                %v221 = vld [vmem:[%s215 + $0x20] sm:%s208]
                %222 = vst [vmem:[%s216 + $0x10] sm:%s208] %v221
                %v223 = vld [vmem:[%s215 + $0x30] sm:%s208]
                %224 = vst [vmem:[%s216 + $0x18] sm:%s208] %v223
                %v225 = vld [vmem:[%s215 + $0x40] sm:%s208]
                %226 = vst [vmem:[%s216 + $0x20] sm:%s208] %v225
                %v227 = vld [vmem:[%s215 + $0x50] sm:%s208]
                %228 = vst [vmem:[%s216 + $0x28] sm:%s208] %v227
                %v229 = vld [vmem:[%s215 + $0x60] sm:%s208]
                %230 = vst [vmem:[%s216 + $0x30] sm:%s208] %v229
                %v231 = vld [vmem:[%s215 + $0x70] sm:%s208]
                %232 = vst [vmem:[%s216 + $0x38] sm:%s208] %v231
                %v233 = vld [vmem:[%s215 + $0x80] sm:%s208]
                %234 = vst [vmem:[%s216 + $0x40] sm:%s208] %v233
                %v235 = vld [vmem:[%s215 + $0x90] sm:%s208]
                %236 = vst [vmem:[%s216 + $0x48] sm:%s208] %v235
                %v237 = vld [vmem:[%s215 + $0xa0] sm:%s208]
                %238 = vst [vmem:[%s216 + $0x50] sm:%s208] %v237
                %v239 = vld [vmem:[%s215 + $0xb0] sm:%s208]
                %240 = vst [vmem:[%s216 + $0x58] sm:%s208] %v239
                %v241 = vld [vmem:[%s215 + $0xc0] sm:%s208]
                %242 = vst [vmem:[%s216 + $0x60] sm:%s208] %v241
                %v243 = vld [vmem:[%s215 + $0xd0] sm:%s208]
                %244 = vst [vmem:[%s216 + $0x68] sm:%s208] %v243
                %v245 = vld [vmem:[%s215 + $0xe0] sm:%s208]
                %246 = vst [vmem:[%s216 + $0x70] sm:%s208] %v245
                %v247 = vld [vmem:[%s215 + $0xf0] sm:%s208]
                %248 = vst [vmem:[%s216 + $0x78] sm:%s208] %v247
                %v249 = vld [vmem:[%s215 + $0x100] sm:%s208]
                %250 = vst [vmem:[%s216 + $0x80] sm:%s208] %v249
                %v251 = vld [vmem:[%s215 + $0x110] sm:%s208]
                %252 = vst [vmem:[%s216 + $0x88] sm:%s208] %v251
                %v253 = vld [vmem:[%s215 + $0x120] sm:%s208]
                %254 = vst [vmem:[%s216 + $0x90] sm:%s208] %v253
                %v255 = vld [vmem:[%s215 + $0x130] sm:%s208]
                %256 = vst [vmem:[%s216 + $0x98] sm:%s208] %v255
                %v257 = vld [vmem:[%s215 + $0x140] sm:%s208]
                %258 = vst [vmem:[%s216 + $0xa0] sm:%s208] %v257
                %v259 = vld [vmem:[%s215 + $0x150] sm:%s208]
                %260 = vst [vmem:[%s216 + $0xa8] sm:%s208] %v259
                %v261 = vld [vmem:[%s215 + $0x160] sm:%s208]
                %262 = vst [vmem:[%s216 + $0xb0] sm:%s208] %v261
                %v263 = vld [vmem:[%s215 + $0x170] sm:%s208]
                %264 = vst [vmem:[%s216 + $0xb8] sm:%s208] %v263
                %v265 = vld [vmem:[%s215 + $0x180] sm:%s208]
                %266 = vst [vmem:[%s216 + $0xc0] sm:%s208] %v265
                %v267 = vld [vmem:[%s215 + $0x190] sm:%s208]
                %268 = vst [vmem:[%s216 + $0xc8] sm:%s208] %v267
                %v269 = vld [vmem:[%s215 + $0x1a0] sm:%s208]
                %270 = vst [vmem:[%s216 + $0xd0] sm:%s208] %v269
                %v271 = vld [vmem:[%s215 + $0x1b0] sm:%s208]
                %272 = vst [vmem:[%s216 + $0xd8] sm:%s208] %v271
                %v273 = vld [vmem:[%s215 + $0x1c0] sm:%s208]
                %274 = vst [vmem:[%s216 + $0xe0] sm:%s208] %v273
                %v275 = vld [vmem:[%s215 + $0x1d0] sm:%s208]
                %276 = vst [vmem:[%s216 + $0xe8] sm:%s208] %v275
                %v277 = vld [vmem:[%s215 + $0x1e0] sm:%s208]
                %278 = vst [vmem:[%s216 + $0xf0] sm:%s208] %v277
                %v279 = vld [vmem:[%s215 + $0x1f0] sm:%s208]
                %280 = vst [vmem:[%s216 + $0xf8] sm:%s208] %v279
              $region49: #{gcn_forward.4} parent=43 // loop_footer
                %s214 = sadd.s32 1, %s210
              $region50: #{gcn_forward.4} parent=43 // loop_footer_branch
                %209 = sbr.rel target = $region46
              $region51: #{gcn_forward.4} parent=43 // loop_exit
                _
            $region44: #{gcn_forward.4} parent=35 // pred_fallthru
              _
          $region36: #{gcn_forward.4} parent=31 // pred_fallthru
            _
          %357 = vnop
        $region32: #{gcn_forward.4} parent=27 // pred_fallthru
          _
      $region28: #{gcn_forward.4} parent=5 // pred_fallthru
        _
      %p358 = scmp.le.s32.totalorder 1, %s22
      %p359 = scmp.lt.s32.totalorder %s22, 5
      %p360 = pnand %p358, %p359
      %p361 = pneg %p360
      // Predicated region
      $region67: #{gcn_forward.4} parent=5 // pred_check
        _
      $region68: #{gcn_forward.4} parent=5 // pred_check_branch
        %363 = sbr.rel (%p360) target = $region70
      $region69: #{gcn_forward.4} parent=5 // pred_region
        %s364 = ssub.s32 %s22, 1
        %s365 = sand.u32 %s55, 1
        %s366 = sand.u32 %s55, 1
        %s367 = smul.addr %s366, 256
        %s368 = scalar_lea.vmem [#allocation6], %s367
        // Predicated region
        $region71: #{gcn_forward.4} parent=69 // pred_check
          %p369 = pneg %p68
        $region72: #{gcn_forward.4} parent=69 // pred_check_branch
          %371 = sbr.rel (%p369) target = $region74
        $region73: #{gcn_forward.4} parent=69 // pred_region
          _
        $region74: #{gcn_forward.4} parent=69 // pred_fallthru
          _
        %s372 = sand.u32 %s55, 1
        %s373 = sand.u32 %s55, 1
        %s374 = smul.addr %s373, 256
        %s375 = scalar_lea.vmem [#allocation6], %s374
        %p376 = pneg %p68
        %p377 = pneg %p65
        %p378 = pneg %p89
        %p379 = pneg %p86
        %p380 = pneg %p110
        %p381 = pneg %p107
        %p382 = pneg %p131
        %p383 = pneg %p128
        %p384 = pneg %p157
        %p385 = pneg %p154
        %s386 = smul.u32 32, %s31
        %p387 = scmp.lt.s32.totalorder %s386, 63
        %s388 = scalar_select %p387, %s386, 63
        %s389 = smul.addr %s388, 4
        %s390 = scalar_lea.vmem %s6, %s389
        %s391 = smul.u32 %s31, 2
        %s392 = sadd.s32 %s391, %s32
        %s393 = sld [smem:[#allocation4 + %s392]]
        %s394 = smul.u32 32, %s31
        %s395 = smul.u32 2, %s393
        %s396 = smul.u32 32, %s31
        %p397 = scmp.lt.s32.totalorder %s396, 63
        %s398 = scalar_select %p397, %s396, 63
        %s399 = smul.addr %s398, 4
        %s400 = scalar_lea.vmem %s6, %s399
        %s401 = smul.u32 32, %s31
        %p403 = scmp.eq.s32.totalorder %s32, 0
        // Predicated region
        $region75: #{gcn_forward.4} parent=69 // pred_check
          %p404 = pneg %p403
        $region76: #{gcn_forward.4} parent=69 // pred_check_branch
          %406 = sbr.rel (%p404) target = $region78
        $region77: #{gcn_forward.4} parent=69 // pred_region
          %vm407 = vcmask 130048
          %408 = vst.msk [vmem:[#allocation2] sm:$0xff] %vm407, 0.0
          %409 = vst.msk [vmem:[#allocation2 + $0x8] sm:$0xff] %vm407, 0.0
          %410 = vst.msk [vmem:[#allocation2 + $0x10] sm:$0xff] %vm407, 0.0
          %411 = vst.msk [vmem:[#allocation2 + $0x18] sm:$0xff] %vm407, 0.0
          %412 = vst.msk [vmem:[#allocation2 + $0x20] sm:$0xff] %vm407, 0.0
          %413 = vst.msk [vmem:[#allocation2 + $0x28] sm:$0xff] %vm407, 0.0
          %414 = vst.msk [vmem:[#allocation2 + $0x30] sm:$0xff] %vm407, 0.0
          %415 = vst.msk [vmem:[#allocation2 + $0x38] sm:$0xff] %vm407, 0.0
          %416 = vst.msk [vmem:[#allocation2 + $0x40] sm:$0xff] %vm407, 0.0
          %417 = vst.msk [vmem:[#allocation2 + $0x48] sm:$0xff] %vm407, 0.0
          %418 = vst.msk [vmem:[#allocation2 + $0x50] sm:$0xff] %vm407, 0.0
          %419 = vst.msk [vmem:[#allocation2 + $0x58] sm:$0xff] %vm407, 0.0
          %420 = vst.msk [vmem:[#allocation2 + $0x60] sm:$0xff] %vm407, 0.0
          %421 = vst.msk [vmem:[#allocation2 + $0x68] sm:$0xff] %vm407, 0.0
          %422 = vst.msk [vmem:[#allocation2 + $0x70] sm:$0xff] %vm407, 0.0
          %423 = vst.msk [vmem:[#allocation2 + $0x78] sm:$0xff] %vm407, 0.0
          %424 = vst.msk [vmem:[#allocation2 + $0x80] sm:$0xff] %vm407, 0.0
          %425 = vst.msk [vmem:[#allocation2 + $0x88] sm:$0xff] %vm407, 0.0
          %426 = vst.msk [vmem:[#allocation2 + $0x90] sm:$0xff] %vm407, 0.0
          %427 = vst.msk [vmem:[#allocation2 + $0x98] sm:$0xff] %vm407, 0.0
          %428 = vst.msk [vmem:[#allocation2 + $0xa0] sm:$0xff] %vm407, 0.0
          %429 = vst.msk [vmem:[#allocation2 + $0xa8] sm:$0xff] %vm407, 0.0
          %430 = vst.msk [vmem:[#allocation2 + $0xb0] sm:$0xff] %vm407, 0.0
          %431 = vst.msk [vmem:[#allocation2 + $0xb8] sm:$0xff] %vm407, 0.0
          %432 = vst.msk [vmem:[#allocation2 + $0xc0] sm:$0xff] %vm407, 0.0
          %433 = vst.msk [vmem:[#allocation2 + $0xc8] sm:$0xff] %vm407, 0.0
          %434 = vst.msk [vmem:[#allocation2 + $0xd0] sm:$0xff] %vm407, 0.0
          %435 = vst.msk [vmem:[#allocation2 + $0xd8] sm:$0xff] %vm407, 0.0
          %436 = vst.msk [vmem:[#allocation2 + $0xe0] sm:$0xff] %vm407, 0.0
          %437 = vst.msk [vmem:[#allocation2 + $0xe8] sm:$0xff] %vm407, 0.0
          %438 = vst.msk [vmem:[#allocation2 + $0xf0] sm:$0xff] %vm407, 0.0
          %439 = vst.msk [vmem:[#allocation2 + $0xf8] sm:$0xff] %vm407, 0.0
        $region78: #{gcn_forward.4} parent=69 // pred_fallthru
          _
        %s440 = sld [smem:[#allocation5 + %s31]]
        %p441 = scmp.lt.s32.totalorder %s32, %s440
        // Predicated region
        $region79: #{gcn_forward.4} parent=69 // pred_check
          %p442 = pneg %p441
        $region80: #{gcn_forward.4} parent=69 // pred_check_branch
          %444 = sbr.rel (%p442) target = $region82
        $region81: #{gcn_forward.4} parent=69 // pred_region
          %s445 = smul.u32 %s31, 2
          %s446 = sadd.s32 %s445, %s32
          %s447 = sld [smem:[#allocation4 + %s446]]
          %s448 = smul.u32 %s447, 256
          %s449 = sshra.s32 %s448, 3
          %s450 = sand.u32 %s448, 7
          %s451 = smul.addr %s449, 4
          %s452 = scalar_lea.vmem %s3, %s451
          %v453 = vld [vmem:[%s452] sm:$0xf]
          %v454 = vld [vmem:[%s452 + $0x4] sm:$0xf]
          %v455 = vld [vmem:[%s452 + $0x8] sm:$0xf]
          %v456 = vld [vmem:[%s452 + $0xc] sm:$0xf]
          %v457 = vld [vmem:[%s452 + $0x10] sm:$0xf]
          %v458 = vld [vmem:[%s452 + $0x14] sm:$0xf]
          %v459 = vld [vmem:[%s452 + $0x18] sm:$0xf]
          %v460 = vld [vmem:[%s452 + $0x1c] sm:$0xf]
          %v461 = vld [vmem:[%s452 + $0x20] sm:$0xf]
          %v462 = vld [vmem:[%s452 + $0x24] sm:$0xf]
          %v463 = vld [vmem:[%s452 + $0x28] sm:$0xf]
          %v464 = vld [vmem:[%s452 + $0x2c] sm:$0xf]
          %v465 = vld [vmem:[%s452 + $0x30] sm:$0xf]
          %v466 = vld [vmem:[%s452 + $0x34] sm:$0xf]
          %v467 = vld [vmem:[%s452 + $0x38] sm:$0xf]
          %v468 = vld [vmem:[%s452 + $0x3c] sm:$0xf]
          %v469 = vld [vmem:[%s452 + $0x40] sm:$0xf]
          %v470 = vld [vmem:[%s452 + $0x44] sm:$0xf]
          %v471 = vld [vmem:[%s452 + $0x48] sm:$0xf]
          %v472 = vld [vmem:[%s452 + $0x4c] sm:$0xf]
          %v473 = vld [vmem:[%s452 + $0x50] sm:$0xf]
          %v474 = vld [vmem:[%s452 + $0x54] sm:$0xf]
          %v475 = vld [vmem:[%s452 + $0x58] sm:$0xf]
          %v476 = vld [vmem:[%s452 + $0x5c] sm:$0xf]
          %v477 = vld [vmem:[%s452 + $0x60] sm:$0xf]
          %v478 = vld [vmem:[%s452 + $0x64] sm:$0xf]
          %v479 = vld [vmem:[%s452 + $0x68] sm:$0xf]
          %v480 = vld [vmem:[%s452 + $0x6c] sm:$0xf]
          %v481 = vld [vmem:[%s452 + $0x70] sm:$0xf]
          %v482 = vld [vmem:[%s452 + $0x74] sm:$0xf]
          %v483 = vld [vmem:[%s452 + $0x78] sm:$0xf]
          %v484 = vld [vmem:[%s452 + $0x7c] sm:$0xf]
          %v485 = vld [vmem:[#allocation2] sm:$0xff]
          %v486 = vld [vmem:[#allocation2 + $0x8] sm:$0xff]
          %v487 = vld [vmem:[#allocation2 + $0x10] sm:$0xff]
          %v488 = vld [vmem:[#allocation2 + $0x18] sm:$0xff]
          %v489 = vld [vmem:[#allocation2 + $0x20] sm:$0xff]
          %v490 = vld [vmem:[#allocation2 + $0x28] sm:$0xff]
          %v491 = vld [vmem:[#allocation2 + $0x30] sm:$0xff]
          %v492 = vld [vmem:[#allocation2 + $0x38] sm:$0xff]
          %v493 = vld [vmem:[#allocation2 + $0x40] sm:$0xff]
          %v494 = vld [vmem:[#allocation2 + $0x48] sm:$0xff]
          %v495 = vld [vmem:[#allocation2 + $0x50] sm:$0xff]
          %v496 = vld [vmem:[#allocation2 + $0x58] sm:$0xff]
          %v497 = vld [vmem:[#allocation2 + $0x60] sm:$0xff]
          %v498 = vld [vmem:[#allocation2 + $0x68] sm:$0xff]
          %v499 = vld [vmem:[#allocation2 + $0x70] sm:$0xff]
          %v500 = vld [vmem:[#allocation2 + $0x78] sm:$0xff]
          %v501 = vld [vmem:[#allocation2 + $0x80] sm:$0xff]
          %v502 = vld [vmem:[#allocation2 + $0x88] sm:$0xff]
          %v503 = vld [vmem:[#allocation2 + $0x90] sm:$0xff]
          %v504 = vld [vmem:[#allocation2 + $0x98] sm:$0xff]
          %v505 = vld [vmem:[#allocation2 + $0xa0] sm:$0xff]
          %v506 = vld [vmem:[#allocation2 + $0xa8] sm:$0xff]
          %v507 = vld [vmem:[#allocation2 + $0xb0] sm:$0xff]
          %v508 = vld [vmem:[#allocation2 + $0xb8] sm:$0xff]
          %v509 = vld [vmem:[#allocation2 + $0xc0] sm:$0xff]
          %v510 = vld [vmem:[#allocation2 + $0xc8] sm:$0xff]
          %v511 = vld [vmem:[#allocation2 + $0xd0] sm:$0xff]
          %v512 = vld [vmem:[#allocation2 + $0xd8] sm:$0xff]
          %v513 = vld [vmem:[#allocation2 + $0xe0] sm:$0xff]
          %v514 = vld [vmem:[#allocation2 + $0xe8] sm:$0xff]
          %v515 = vld [vmem:[#allocation2 + $0xf0] sm:$0xff]
          %v516 = vld [vmem:[#allocation2 + $0xf8] sm:$0xff]
          %v517 = vld [vmem:[%s368] sm:$0xff]
          %v518 = vld [vmem:[%s368 + $0x8] sm:$0xff]
          %v519 = vld [vmem:[%s368 + $0x10] sm:$0xff]
          %v520 = vld [vmem:[%s368 + $0x18] sm:$0xff]
          %v521 = vld [vmem:[%s368 + $0x20] sm:$0xff]
          %v522 = vld [vmem:[%s368 + $0x28] sm:$0xff]
          %v523 = vld [vmem:[%s368 + $0x30] sm:$0xff]
          %v524 = vld [vmem:[%s368 + $0x38] sm:$0xff]
          %v525 = vld [vmem:[%s368 + $0x40] sm:$0xff]
          %v526 = vld [vmem:[%s368 + $0x48] sm:$0xff]
          %v527 = vld [vmem:[%s368 + $0x50] sm:$0xff]
          %v528 = vld [vmem:[%s368 + $0x58] sm:$0xff]
          %v529 = vld [vmem:[%s368 + $0x60] sm:$0xff]
          %v530 = vld [vmem:[%s368 + $0x68] sm:$0xff]
          %v531 = vld [vmem:[%s368 + $0x70] sm:$0xff]
          %v532 = vld [vmem:[%s368 + $0x78] sm:$0xff]
          %v533 = vld [vmem:[%s368 + $0x80] sm:$0xff]
          %v534 = vld [vmem:[%s368 + $0x88] sm:$0xff]
          %v535 = vld [vmem:[%s368 + $0x90] sm:$0xff]
          %v536 = vld [vmem:[%s368 + $0x98] sm:$0xff]
          %v537 = vld [vmem:[%s368 + $0xa0] sm:$0xff]
          %v538 = vld [vmem:[%s368 + $0xa8] sm:$0xff]
          %v539 = vld [vmem:[%s368 + $0xb0] sm:$0xff]
          %v540 = vld [vmem:[%s368 + $0xb8] sm:$0xff]
          %v541 = vld [vmem:[%s368 + $0xc0] sm:$0xff]
          %v542 = vld [vmem:[%s368 + $0xc8] sm:$0xff]
          %v543 = vld [vmem:[%s368 + $0xd0] sm:$0xff]
          %v544 = vld [vmem:[%s368 + $0xd8] sm:$0xff]
          %v545 = vld [vmem:[%s368 + $0xe0] sm:$0xff]
          %v546 = vld [vmem:[%s368 + $0xe8] sm:$0xff]
          %v547 = vld [vmem:[%s368 + $0xf0] sm:$0xff]
          %v548 = vld [vmem:[%s368 + $0xf8] sm:$0xff]
          %v581 = vunpack.c.l.b16 %v517
          %v582 = vunpack.c.h.b16 %v517
          %v583 = vunpack.c.l.b16 %v518
          %v584 = vunpack.c.h.b16 %v518
          %v585 = vunpack.c.l.b16 %v519
          %v586 = vunpack.c.h.b16 %v519
          %v587 = vunpack.c.l.b16 %v520
          %v588 = vunpack.c.h.b16 %v520
          %v589 = vunpack.c.l.b16 %v521
          %v590 = vunpack.c.h.b16 %v521
          %v591 = vunpack.c.l.b16 %v522
          %v592 = vunpack.c.h.b16 %v522
          %v593 = vunpack.c.l.b16 %v523
          %v594 = vunpack.c.h.b16 %v523
          %v595 = vunpack.c.l.b16 %v524
          %v596 = vunpack.c.h.b16 %v524
          %v597 = vunpack.c.l.b16 %v525
          %v598 = vunpack.c.h.b16 %v525
          %v599 = vunpack.c.l.b16 %v526
          %v600 = vunpack.c.h.b16 %v526
          %v601 = vunpack.c.l.b16 %v527
          %v602 = vunpack.c.h.b16 %v527
          %v603 = vunpack.c.l.b16 %v528
          %v604 = vunpack.c.h.b16 %v528
          %v605 = vunpack.c.l.b16 %v529
          %v606 = vunpack.c.h.b16 %v529
          %v607 = vunpack.c.l.b16 %v530
          %v608 = vunpack.c.h.b16 %v530
          %v609 = vunpack.c.l.b16 %v531
          %v610 = vunpack.c.h.b16 %v531
          %v611 = vunpack.c.l.b16 %v532
          %v612 = vunpack.c.h.b16 %v532
          %v613 = vunpack.c.l.b16 %v533
          %v614 = vunpack.c.h.b16 %v533
          %v615 = vunpack.c.l.b16 %v534
          %v616 = vunpack.c.h.b16 %v534
          %v617 = vunpack.c.l.b16 %v535
          %v618 = vunpack.c.h.b16 %v535
          %v619 = vunpack.c.l.b16 %v536
          %v620 = vunpack.c.h.b16 %v536
          %v621 = vunpack.c.l.b16 %v537
          %v622 = vunpack.c.h.b16 %v537
          %v623 = vunpack.c.l.b16 %v538
          %v624 = vunpack.c.h.b16 %v538
          %v625 = vunpack.c.l.b16 %v539
          %v626 = vunpack.c.h.b16 %v539
          %v627 = vunpack.c.l.b16 %v540
          %v628 = vunpack.c.h.b16 %v540
          %v629 = vunpack.c.l.b16 %v541
          %v630 = vunpack.c.h.b16 %v541
          %v631 = vunpack.c.l.b16 %v542
          %v632 = vunpack.c.h.b16 %v542
          %v633 = vunpack.c.l.b16 %v543
          %v634 = vunpack.c.h.b16 %v543
          %v635 = vunpack.c.l.b16 %v544
          %v636 = vunpack.c.h.b16 %v544
          %v637 = vunpack.c.l.b16 %v545
          %v638 = vunpack.c.h.b16 %v545
          %v639 = vunpack.c.l.b16 %v546
          %v640 = vunpack.c.h.b16 %v546
          %v641 = vunpack.c.l.b16 %v547
          %v642 = vunpack.c.h.b16 %v547
          %v643 = vunpack.c.l.b16 %v548
          %v644 = vunpack.c.h.b16 %v548
          %v645 = vpack.c.b16 %v583, %v581
          %v646 = vpack.c.b16 %v584, %v582
          %v647 = vpack.c.b16 %v587, %v585
          %v648 = vpack.c.b16 %v588, %v586
          %v649 = vpack.c.b16 %v591, %v589
          %v650 = vpack.c.b16 %v592, %v590
          %v651 = vpack.c.b16 %v595, %v593
          %v652 = vpack.c.b16 %v596, %v594
          %v653 = vpack.c.b16 %v599, %v597
          %v654 = vpack.c.b16 %v600, %v598
          %v655 = vpack.c.b16 %v603, %v601
          %v656 = vpack.c.b16 %v604, %v602
          %v657 = vpack.c.b16 %v607, %v605
          %v658 = vpack.c.b16 %v608, %v606
          %v659 = vpack.c.b16 %v611, %v609
          %v660 = vpack.c.b16 %v612, %v610
          %v661 = vpack.c.b16 %v615, %v613
          %v662 = vpack.c.b16 %v616, %v614
          %v663 = vpack.c.b16 %v619, %v617
          %v664 = vpack.c.b16 %v620, %v618
          %v665 = vpack.c.b16 %v623, %v621
          %v666 = vpack.c.b16 %v624, %v622
          %v667 = vpack.c.b16 %v627, %v625
          %v668 = vpack.c.b16 %v628, %v626
          %v669 = vpack.c.b16 %v631, %v629
          %v670 = vpack.c.b16 %v632, %v630
          %v671 = vpack.c.b16 %v635, %v633
          %v672 = vpack.c.b16 %v636, %v634
          %v673 = vpack.c.b16 %v639, %v637
          %v674 = vpack.c.b16 %v640, %v638
          %v675 = vpack.c.b16 %v643, %v641
          %v676 = vpack.c.b16 %v644, %v642
          %v741 = vunpack.c.l.b16 %v453
          %v742 = vunpack.c.l.b16 %v454
          %v743 = vunpack.c.l.b16 %v455
          %v744 = vunpack.c.l.b16 %v456
          %v745 = vunpack.c.l.b16 %v457
          %v746 = vunpack.c.l.b16 %v458
          %v747 = vunpack.c.l.b16 %v459
          %v748 = vunpack.c.l.b16 %v460
          %v749 = vunpack.c.l.b16 %v461
          %v750 = vunpack.c.l.b16 %v462
          %v751 = vunpack.c.l.b16 %v463
          %v752 = vunpack.c.l.b16 %v464
          %v753 = vunpack.c.l.b16 %v465
          %v754 = vunpack.c.l.b16 %v466
          %v755 = vunpack.c.l.b16 %v467
          %v756 = vunpack.c.l.b16 %v468
          %v757 = vunpack.c.l.b16 %v469
          %v758 = vunpack.c.l.b16 %v470
          %v759 = vunpack.c.l.b16 %v471
          %v760 = vunpack.c.l.b16 %v472
          %v761 = vunpack.c.l.b16 %v473
          %v762 = vunpack.c.l.b16 %v474
          %v763 = vunpack.c.l.b16 %v475
          %v764 = vunpack.c.l.b16 %v476
          %v765 = vunpack.c.l.b16 %v477
          %v766 = vunpack.c.l.b16 %v478
          %v767 = vunpack.c.l.b16 %v479
          %v768 = vunpack.c.l.b16 %v480
          %v769 = vunpack.c.l.b16 %v481
          %v770 = vunpack.c.l.b16 %v482
          %v771 = vunpack.c.l.b16 %v483
          %v772 = vunpack.c.l.b16 %v484
          %v773 = vpack.c.b16 %v742, %v741
          %v774 = vpack.c.b16 %v744, %v743
          %v775 = vpack.c.b16 %v746, %v745
          %v776 = vpack.c.b16 %v748, %v747
          %v777 = vpack.c.b16 %v750, %v749
          %v778 = vpack.c.b16 %v752, %v751
          %v779 = vpack.c.b16 %v754, %v753
          %v780 = vpack.c.b16 %v756, %v755
          %v781 = vpack.c.b16 %v758, %v757
          %v782 = vpack.c.b16 %v760, %v759
          %v783 = vpack.c.b16 %v762, %v761
          %v784 = vpack.c.b16 %v764, %v763
          %v785 = vpack.c.b16 %v766, %v765
          %v786 = vpack.c.b16 %v768, %v767
          %v787 = vpack.c.b16 %v770, %v769
          %v788 = vpack.c.b16 %v772, %v771
          %805 = vmatprep.subr.bf16.mxu0 0
          %806 = vmatpush1.bf16.msra.mxu0 %v780
          %807 = vmatprep.subr.bf16.mxu0 0
          %808 = vmatpush1.bf16.msra.mxu0 %v779
          %809 = vmatprep.subr.bf16.mxu0 0
          %810 = vmatpush1.bf16.msra.mxu0 %v778
          %811 = vmatprep.subr.bf16.mxu0 0
          %812 = vmatpush1.bf16.msra.mxu0 %v777
          %813 = vmatprep.subr.bf16.mxu0 0
          %814 = vmatpush1.bf16.msra.mxu0 %v776
          %815 = vmatprep.subr.bf16.mxu0 0
          %816 = vmatpush1.bf16.msra.mxu0 %v775
          %817 = vmatprep.subr.bf16.mxu0 0
          %818 = vmatpush1.bf16.msra.mxu0 %v774
          %819 = vmatprep.subr.bf16.mxu0 0
          %820 = vmatpush1.bf16.msra.mxu0 %v773
          %821 = vmatprep.subr.bf16.mxu0 0
          %822 = vmatpush2.bf16.msra.mxu0 %v788
          %823 = vmatprep.subr.bf16.mxu0 0
          %824 = vmatpush2.bf16.msra.mxu0 %v787
          %825 = vmatprep.subr.bf16.mxu0 0
          %826 = vmatpush2.bf16.msra.mxu0 %v786
          %827 = vmatprep.subr.bf16.mxu0 0
          %828 = vmatpush2.bf16.msra.mxu0 %v785
          %829 = vmatprep.subr.bf16.mxu0 0
          %830 = vmatpush2.bf16.msra.mxu0 %v784
          %831 = vmatprep.subr.bf16.mxu0 0
          %832 = vmatpush2.bf16.msra.mxu0 %v783
          %833 = vmatprep.subr.bf16.mxu0 0
          %834 = vmatpush2.bf16.msra.mxu0 %v782
          %835 = vmatprep.subr.bf16.mxu0 0
          %836 = vmatpush2.bf16.msra.mxu0 %v781
          %837 = vmatprep.mubr.bf16.mxu0 %v646
          %838 = vmatmul.mubr.bf16.gmra.mxu0 %v645
          %v839 = vpop.f32.mrf.mxu0
          %v840 = vadd.f32 0.0, %v839
          %v841 = vpop.f32.mrf.mxu0
          %v842 = vpop.f32.mrf.mxu0
          %v843 = vadd.f32 0.0, %v842
          %v844 = vpop.f32.mrf.mxu0
          %845 = vmatprep.mubr.bf16.mxu0 %v648
          %846 = vmatmul.mubr.bf16.gmra.mxu0 %v647
          %v847 = vpop.f32.mrf.mxu0
          %v848 = vadd.f32 0.0, %v847
          %v849 = vpop.f32.mrf.mxu0
          %v850 = vpop.f32.mrf.mxu0
          %v851 = vadd.f32 0.0, %v850
          %v852 = vpop.f32.mrf.mxu0
          %853 = vmatprep.mubr.bf16.mxu0 %v650
          %854 = vmatmul.mubr.bf16.gmra.mxu0 %v649
          %v855 = vpop.f32.mrf.mxu0
          %v856 = vadd.f32 0.0, %v855
          %v857 = vpop.f32.mrf.mxu0
          %v858 = vpop.f32.mrf.mxu0
          %v859 = vadd.f32 0.0, %v858
          %v860 = vpop.f32.mrf.mxu0
          %861 = vmatprep.mubr.bf16.mxu0 %v652
          %862 = vmatmul.mubr.bf16.gmra.mxu0 %v651
          %v863 = vpop.f32.mrf.mxu0
          %v864 = vadd.f32 0.0, %v863
          %v865 = vpop.f32.mrf.mxu0
          %v866 = vpop.f32.mrf.mxu0
          %v867 = vadd.f32 0.0, %v866
          %v868 = vpop.f32.mrf.mxu0
          %869 = vmatprep.mubr.bf16.mxu0 %v654
          %870 = vmatmul.mubr.bf16.gmra.mxu0 %v653
          %v871 = vpop.f32.mrf.mxu0
          %v872 = vadd.f32 0.0, %v871
          %v873 = vpop.f32.mrf.mxu0
          %v874 = vpop.f32.mrf.mxu0
          %v875 = vadd.f32 0.0, %v874
          %v876 = vpop.f32.mrf.mxu0
          %877 = vmatprep.mubr.bf16.mxu0 %v656
          %878 = vmatmul.mubr.bf16.gmra.mxu0 %v655
          %v879 = vpop.f32.mrf.mxu0
          %v880 = vadd.f32 0.0, %v879
          %v881 = vpop.f32.mrf.mxu0
          %v882 = vpop.f32.mrf.mxu0
          %v883 = vadd.f32 0.0, %v882
          %v884 = vpop.f32.mrf.mxu0
          %885 = vmatprep.mubr.bf16.mxu0 %v658
          %886 = vmatmul.mubr.bf16.gmra.mxu0 %v657
          %v887 = vpop.f32.mrf.mxu0
          %v888 = vadd.f32 0.0, %v887
          %v889 = vpop.f32.mrf.mxu0
          %v890 = vpop.f32.mrf.mxu0
          %v891 = vadd.f32 0.0, %v890
          %v892 = vpop.f32.mrf.mxu0
          %893 = vmatprep.mubr.bf16.mxu0 %v660
          %894 = vmatmul.mubr.bf16.gmra.mxu0 %v659
          %v895 = vpop.f32.mrf.mxu0
          %v896 = vadd.f32 0.0, %v895
          %v897 = vpop.f32.mrf.mxu0
          %v898 = vpop.f32.mrf.mxu0
          %v899 = vadd.f32 0.0, %v898
          %v900 = vpop.f32.mrf.mxu0
          %901 = vmatprep.mubr.bf16.mxu0 %v662
          %902 = vmatmul.mubr.bf16.gmra.mxu0 %v661
          %v903 = vpop.f32.mrf.mxu0
          %v904 = vadd.f32 0.0, %v903
          %v905 = vpop.f32.mrf.mxu0
          %v906 = vpop.f32.mrf.mxu0
          %v907 = vadd.f32 0.0, %v906
          %v908 = vpop.f32.mrf.mxu0
          %909 = vmatprep.mubr.bf16.mxu0 %v664
          %910 = vmatmul.mubr.bf16.gmra.mxu0 %v663
          %v911 = vpop.f32.mrf.mxu0
          %v912 = vadd.f32 0.0, %v911
          %v913 = vpop.f32.mrf.mxu0
          %v914 = vpop.f32.mrf.mxu0
          %v915 = vadd.f32 0.0, %v914
          %v916 = vpop.f32.mrf.mxu0
          %917 = vmatprep.mubr.bf16.mxu0 %v666
          %918 = vmatmul.mubr.bf16.gmra.mxu0 %v665
          %v919 = vpop.f32.mrf.mxu0
          %v920 = vadd.f32 0.0, %v919
          %v921 = vpop.f32.mrf.mxu0
          %v922 = vpop.f32.mrf.mxu0
          %v923 = vadd.f32 0.0, %v922
          %v924 = vpop.f32.mrf.mxu0
          %925 = vmatprep.mubr.bf16.mxu0 %v668
          %926 = vmatmul.mubr.bf16.gmra.mxu0 %v667
          %v927 = vpop.f32.mrf.mxu0
          %v928 = vadd.f32 0.0, %v927
          %v929 = vpop.f32.mrf.mxu0
          %v930 = vpop.f32.mrf.mxu0
          %v931 = vadd.f32 0.0, %v930
          %v932 = vpop.f32.mrf.mxu0
          %933 = vmatprep.mubr.bf16.mxu0 %v670
          %934 = vmatmul.mubr.bf16.gmra.mxu0 %v669
          %v935 = vpop.f32.mrf.mxu0
          %v936 = vadd.f32 0.0, %v935
          %v937 = vpop.f32.mrf.mxu0
          %v938 = vpop.f32.mrf.mxu0
          %v939 = vadd.f32 0.0, %v938
          %v940 = vpop.f32.mrf.mxu0
          %941 = vmatprep.mubr.bf16.mxu0 %v672
          %942 = vmatmul.mubr.bf16.gmra.mxu0 %v671
          %v943 = vpop.f32.mrf.mxu0
          %v944 = vadd.f32 0.0, %v943
          %v945 = vpop.f32.mrf.mxu0
          %v946 = vpop.f32.mrf.mxu0
          %v947 = vadd.f32 0.0, %v946
          %v948 = vpop.f32.mrf.mxu0
          %949 = vmatprep.mubr.bf16.mxu0 %v674
          %950 = vmatmul.mubr.bf16.gmra.mxu0 %v673
          %v951 = vpop.f32.mrf.mxu0
          %v952 = vadd.f32 0.0, %v951
          %v953 = vpop.f32.mrf.mxu0
          %v954 = vpop.f32.mrf.mxu0
          %v955 = vadd.f32 0.0, %v954
          %v956 = vpop.f32.mrf.mxu0
          %957 = vmatprep.mubr.bf16.mxu0 %v676
          %958 = vmatmul.mubr.bf16.gmra.mxu0 %v675
          %v959 = vpop.f32.mrf.mxu0
          %v960 = vadd.f32 0.0, %v959
          %v961 = vpop.f32.mrf.mxu0
          %v962 = vpop.f32.mrf.mxu0
          %v963 = vadd.f32 0.0, %v962
          %v964 = vpop.f32.mrf.mxu0
          %965 = vdwg.mxu0
          %v966 = vadd.f32 %v485, %v840
          %v967 = vadd.f32 %v486, %v843
          %v968 = vadd.f32 %v487, %v848
          %v969 = vadd.f32 %v488, %v851
          %v970 = vadd.f32 %v489, %v856
          %v971 = vadd.f32 %v490, %v859
          %v972 = vadd.f32 %v491, %v864
          %v973 = vadd.f32 %v492, %v867
          %v974 = vadd.f32 %v493, %v872
          %v975 = vadd.f32 %v494, %v875
          %v976 = vadd.f32 %v495, %v880
          %v977 = vadd.f32 %v496, %v883
          %v978 = vadd.f32 %v497, %v888
          %v979 = vadd.f32 %v498, %v891
          %v980 = vadd.f32 %v499, %v896
          %v981 = vadd.f32 %v500, %v899
          %v982 = vadd.f32 %v501, %v904
          %v983 = vadd.f32 %v502, %v907
          %v984 = vadd.f32 %v503, %v912
          %v985 = vadd.f32 %v504, %v915
          %v986 = vadd.f32 %v505, %v920
          %v987 = vadd.f32 %v506, %v923
          %v988 = vadd.f32 %v507, %v928
          %v989 = vadd.f32 %v508, %v931
          %v990 = vadd.f32 %v509, %v936
          %v991 = vadd.f32 %v510, %v939
          %v992 = vadd.f32 %v511, %v944
          %v993 = vadd.f32 %v512, %v947
          %v994 = vadd.f32 %v513, %v952
          %v995 = vadd.f32 %v514, %v955
          %v996 = vadd.f32 %v515, %v960
          %v997 = vadd.f32 %v516, %v963
          %vm998 = vcmask 130048
          %999 = vst.msk [vmem:[#allocation2] sm:$0xff] %vm998, %v966
          %1000 = vst.msk [vmem:[#allocation2 + $0x8] sm:$0xff] %vm998, %v967
          %1001 = vst.msk [vmem:[#allocation2 + $0x10] sm:$0xff] %vm998, %v968
          %1002 = vst.msk [vmem:[#allocation2 + $0x18] sm:$0xff] %vm998, %v969
          %1003 = vst.msk [vmem:[#allocation2 + $0x20] sm:$0xff] %vm998, %v970
          %1004 = vst.msk [vmem:[#allocation2 + $0x28] sm:$0xff] %vm998, %v971
          %1005 = vst.msk [vmem:[#allocation2 + $0x30] sm:$0xff] %vm998, %v972
          %1006 = vst.msk [vmem:[#allocation2 + $0x38] sm:$0xff] %vm998, %v973
          %1007 = vst.msk [vmem:[#allocation2 + $0x40] sm:$0xff] %vm998, %v974
          %1008 = vst.msk [vmem:[#allocation2 + $0x48] sm:$0xff] %vm998, %v975
          %1009 = vst.msk [vmem:[#allocation2 + $0x50] sm:$0xff] %vm998, %v976
          %1010 = vst.msk [vmem:[#allocation2 + $0x58] sm:$0xff] %vm998, %v977
          %1011 = vst.msk [vmem:[#allocation2 + $0x60] sm:$0xff] %vm998, %v978
          %1012 = vst.msk [vmem:[#allocation2 + $0x68] sm:$0xff] %vm998, %v979
          %1013 = vst.msk [vmem:[#allocation2 + $0x70] sm:$0xff] %vm998, %v980
          %1014 = vst.msk [vmem:[#allocation2 + $0x78] sm:$0xff] %vm998, %v981
          %1015 = vst.msk [vmem:[#allocation2 + $0x80] sm:$0xff] %vm998, %v982
          %1016 = vst.msk [vmem:[#allocation2 + $0x88] sm:$0xff] %vm998, %v983
          %1017 = vst.msk [vmem:[#allocation2 + $0x90] sm:$0xff] %vm998, %v984
          %1018 = vst.msk [vmem:[#allocation2 + $0x98] sm:$0xff] %vm998, %v985
          %1019 = vst.msk [vmem:[#allocation2 + $0xa0] sm:$0xff] %vm998, %v986
          %1020 = vst.msk [vmem:[#allocation2 + $0xa8] sm:$0xff] %vm998, %v987
          %1021 = vst.msk [vmem:[#allocation2 + $0xb0] sm:$0xff] %vm998, %v988
          %1022 = vst.msk [vmem:[#allocation2 + $0xb8] sm:$0xff] %vm998, %v989
          %1023 = vst.msk [vmem:[#allocation2 + $0xc0] sm:$0xff] %vm998, %v990
          %1024 = vst.msk [vmem:[#allocation2 + $0xc8] sm:$0xff] %vm998, %v991
          %1025 = vst.msk [vmem:[#allocation2 + $0xd0] sm:$0xff] %vm998, %v992
          %1026 = vst.msk [vmem:[#allocation2 + $0xd8] sm:$0xff] %vm998, %v993
          %1027 = vst.msk [vmem:[#allocation2 + $0xe0] sm:$0xff] %vm998, %v994
          %1028 = vst.msk [vmem:[#allocation2 + $0xe8] sm:$0xff] %vm998, %v995
          %1029 = vst.msk [vmem:[#allocation2 + $0xf0] sm:$0xff] %vm998, %v996
          %1030 = vst.msk [vmem:[#allocation2 + $0xf8] sm:$0xff] %vm998, %v997
        $region82: #{gcn_forward.4} parent=69 // pred_fallthru
          _
        %p1031 = scmp.eq.s32.totalorder %s32, 1
        // Predicated region
        $region83: #{gcn_forward.4} parent=69 // pred_check
          %p1032 = pneg %p1031
        $region84: #{gcn_forward.4} parent=69 // pred_check_branch
          %1034 = sbr.rel (%p1032) target = $region86
        $region85: #{gcn_forward.4} parent=69 // pred_region
          %v1035 = vld [vmem:[#allocation2] sm:$0xff]
          %v1036 = vld [vmem:[#allocation2 + $0x8] sm:$0xff]
          %v1037 = vld [vmem:[#allocation2 + $0x10] sm:$0xff]
          %v1038 = vld [vmem:[#allocation2 + $0x18] sm:$0xff]
          %v1039 = vld [vmem:[#allocation2 + $0x20] sm:$0xff]
          %v1040 = vld [vmem:[#allocation2 + $0x28] sm:$0xff]
          %v1041 = vld [vmem:[#allocation2 + $0x30] sm:$0xff]
          %v1042 = vld [vmem:[#allocation2 + $0x38] sm:$0xff]
          %v1043 = vld [vmem:[#allocation2 + $0x40] sm:$0xff]
          %v1044 = vld [vmem:[#allocation2 + $0x48] sm:$0xff]
          %v1045 = vld [vmem:[#allocation2 + $0x50] sm:$0xff]
          %v1046 = vld [vmem:[#allocation2 + $0x58] sm:$0xff]
          %v1047 = vld [vmem:[#allocation2 + $0x60] sm:$0xff]
          %v1048 = vld [vmem:[#allocation2 + $0x68] sm:$0xff]
          %v1049 = vld [vmem:[#allocation2 + $0x70] sm:$0xff]
          %v1050 = vld [vmem:[#allocation2 + $0x78] sm:$0xff]
          %v1051 = vld [vmem:[#allocation2 + $0x80] sm:$0xff]
          %v1052 = vld [vmem:[#allocation2 + $0x88] sm:$0xff]
          %v1053 = vld [vmem:[#allocation2 + $0x90] sm:$0xff]
          %v1054 = vld [vmem:[#allocation2 + $0x98] sm:$0xff]
          %v1055 = vld [vmem:[#allocation2 + $0xa0] sm:$0xff]
          %v1056 = vld [vmem:[#allocation2 + $0xa8] sm:$0xff]
          %v1057 = vld [vmem:[#allocation2 + $0xb0] sm:$0xff]
          %v1058 = vld [vmem:[#allocation2 + $0xb8] sm:$0xff]
          %v1059 = vld [vmem:[#allocation2 + $0xc0] sm:$0xff]
          %v1060 = vld [vmem:[#allocation2 + $0xc8] sm:$0xff]
          %v1061 = vld [vmem:[#allocation2 + $0xd0] sm:$0xff]
          %v1062 = vld [vmem:[#allocation2 + $0xd8] sm:$0xff]
          %v1063 = vld [vmem:[#allocation2 + $0xe0] sm:$0xff]
          %v1064 = vld [vmem:[#allocation2 + $0xe8] sm:$0xff]
          %v1065 = vld [vmem:[#allocation2 + $0xf0] sm:$0xff]
          %v1066 = vld [vmem:[#allocation2 + $0xf8] sm:$0xff]
          %v1067 = vld [vmem:[%s4] sm:$0x1]
          %v1069 = vlaneseq
          %v1070 = vshrl.u32 %v1069, 7
          %v1071 = vsub.s32 0, %v1070
          %v1072 = vrot.slane %v1067, %v1071
          %v1074 = vadd.f32 %v1035, %v1072
          %v1075 = vadd.f32 %v1036, %v1072
          %v1076 = vadd.f32 %v1037, %v1072
          %v1077 = vadd.f32 %v1038, %v1072
          %v1078 = vadd.f32 %v1039, %v1072
          %v1079 = vadd.f32 %v1040, %v1072
          %v1080 = vadd.f32 %v1041, %v1072
          %v1081 = vadd.f32 %v1042, %v1072
          %v1082 = vadd.f32 %v1043, %v1072
          %v1083 = vadd.f32 %v1044, %v1072
          %v1084 = vadd.f32 %v1045, %v1072
          %v1085 = vadd.f32 %v1046, %v1072
          %v1086 = vadd.f32 %v1047, %v1072
          %v1087 = vadd.f32 %v1048, %v1072
          %v1088 = vadd.f32 %v1049, %v1072
          %v1089 = vadd.f32 %v1050, %v1072
          %v1090 = vadd.f32 %v1051, %v1072
          %v1091 = vadd.f32 %v1052, %v1072
          %v1092 = vadd.f32 %v1053, %v1072
          %v1093 = vadd.f32 %v1054, %v1072
          %v1094 = vadd.f32 %v1055, %v1072
          %v1095 = vadd.f32 %v1056, %v1072
          %v1096 = vadd.f32 %v1057, %v1072
          %v1097 = vadd.f32 %v1058, %v1072
          %v1098 = vadd.f32 %v1059, %v1072
          %v1099 = vadd.f32 %v1060, %v1072
          %v1100 = vadd.f32 %v1061, %v1072
          %v1101 = vadd.f32 %v1062, %v1072
          %v1102 = vadd.f32 %v1063, %v1072
          %v1103 = vadd.f32 %v1064, %v1072
          %v1104 = vadd.f32 %v1065, %v1072
          %v1105 = vadd.f32 %v1066, %v1072
          %v1106 = vmax.f32 %v1074, 0.0
          %v1107 = vmax.f32 %v1075, 0.0
          %v1108 = vmax.f32 %v1076, 0.0
          %v1109 = vmax.f32 %v1077, 0.0
          %v1110 = vmax.f32 %v1078, 0.0
          %v1111 = vmax.f32 %v1079, 0.0
          %v1112 = vmax.f32 %v1080, 0.0
          %v1113 = vmax.f32 %v1081, 0.0
          %v1114 = vmax.f32 %v1082, 0.0
          %v1115 = vmax.f32 %v1083, 0.0
          %v1116 = vmax.f32 %v1084, 0.0
          %v1117 = vmax.f32 %v1085, 0.0
          %v1118 = vmax.f32 %v1086, 0.0
          %v1119 = vmax.f32 %v1087, 0.0
          %v1120 = vmax.f32 %v1088, 0.0
          %v1121 = vmax.f32 %v1089, 0.0
          %v1122 = vmax.f32 %v1090, 0.0
          %v1123 = vmax.f32 %v1091, 0.0
          %v1124 = vmax.f32 %v1092, 0.0
          %v1125 = vmax.f32 %v1093, 0.0
          %v1126 = vmax.f32 %v1094, 0.0
          %v1127 = vmax.f32 %v1095, 0.0
          %v1128 = vmax.f32 %v1096, 0.0
          %v1129 = vmax.f32 %v1097, 0.0
          %v1130 = vmax.f32 %v1098, 0.0
          %v1131 = vmax.f32 %v1099, 0.0
          %v1132 = vmax.f32 %v1100, 0.0
          %v1133 = vmax.f32 %v1101, 0.0
          %v1134 = vmax.f32 %v1102, 0.0
          %v1135 = vmax.f32 %v1103, 0.0
          %v1136 = vmax.f32 %v1104, 0.0
          %v1137 = vmax.f32 %v1105, 0.0
          %v1138 = vpack.c.bf16 %v1107, %v1106
          %v1139 = vpack.c.bf16 %v1109, %v1108
          %v1140 = vpack.c.bf16 %v1111, %v1110
          %v1141 = vpack.c.bf16 %v1113, %v1112
          %v1142 = vpack.c.bf16 %v1115, %v1114
          %v1143 = vpack.c.bf16 %v1117, %v1116
          %v1144 = vpack.c.bf16 %v1119, %v1118
          %v1145 = vpack.c.bf16 %v1121, %v1120
          %v1146 = vpack.c.bf16 %v1123, %v1122
          %v1147 = vpack.c.bf16 %v1125, %v1124
          %v1148 = vpack.c.bf16 %v1127, %v1126
          %v1149 = vpack.c.bf16 %v1129, %v1128
          %v1150 = vpack.c.bf16 %v1131, %v1130
          %v1151 = vpack.c.bf16 %v1133, %v1132
          %v1152 = vpack.c.bf16 %v1135, %v1134
          %v1153 = vpack.c.bf16 %v1137, %v1136
          %v1154 = vld [vmem:[%s5] sm:$0xf]
          %v1155 = vld [vmem:[%s5 + $0x4] sm:$0xf]
          %v1158 = vunpack.c.l.b16 %v1154
          %v1159 = vunpack.c.l.b16 %v1155
          %v1160 = vpack.c.b16 %v1159, %v1158
          %vm1162 = vcmask 130048
          %v1164 = vsel %vm1162, %v1138, 0
          %v1167 = vsel %vm1162, %v1139, 0
          %v1170 = vsel %vm1162, %v1140, 0
          %v1173 = vsel %vm1162, %v1141, 0
          %v1176 = vsel %vm1162, %v1142, 0
          %v1179 = vsel %vm1162, %v1143, 0
          %v1182 = vsel %vm1162, %v1144, 0
          %v1185 = vsel %vm1162, %v1145, 0
          %v1188 = vsel %vm1162, %v1146, 0
          %v1191 = vsel %vm1162, %v1147, 0
          %v1194 = vsel %vm1162, %v1148, 0
          %v1197 = vsel %vm1162, %v1149, 0
          %v1200 = vsel %vm1162, %v1150, 0
          %v1203 = vsel %vm1162, %v1151, 0
          %v1206 = vsel %vm1162, %v1152, 0
          %v1209 = vsel %vm1162, %v1153, 0
          %1211 = vmatprep.subr.bf16.mxu0 0
          %1212 = vmatpush1.bf16.msra.mxu0 0
          %1213 = vmatprep.subr.bf16.mxu0 0
          %1214 = vmatpush1.bf16.msra.mxu0 0
          %1215 = vmatprep.subr.bf16.mxu0 0
          %1216 = vmatpush1.bf16.msra.mxu0 0
          %1217 = vmatprep.subr.bf16.mxu0 0
          %1218 = vmatpush1.bf16.msra.mxu0 0
          %1219 = vmatprep.subr.bf16.mxu0 0
          %1220 = vmatpush1.bf16.msra.mxu0 0
          %1221 = vmatprep.subr.bf16.mxu0 0
          %1222 = vmatpush1.bf16.msra.mxu0 0
          %1223 = vmatprep.subr.bf16.mxu0 0
          %1224 = vmatpush1.bf16.msra.mxu0 0
          %1225 = vmatprep.subr.bf16.mxu0 0
          %1226 = vmatpush1.bf16.msra.mxu0 %v1160
          %1227 = vmatprep.subr.bf16.mxu0 0
          %1228 = vmatpush2.bf16.msra.mxu0 0
          %1229 = vmatprep.subr.bf16.mxu0 0
          %1230 = vmatpush2.bf16.msra.mxu0 0
          %1231 = vmatprep.subr.bf16.mxu0 0
          %1232 = vmatpush2.bf16.msra.mxu0 0
          %1233 = vmatprep.subr.bf16.mxu0 0
          %1234 = vmatpush2.bf16.msra.mxu0 0
          %1235 = vmatprep.subr.bf16.mxu0 0
          %1236 = vmatpush2.bf16.msra.mxu0 0
          %1237 = vmatprep.subr.bf16.mxu0 0
          %1238 = vmatpush2.bf16.msra.mxu0 0
          %1239 = vmatprep.subr.bf16.mxu0 0
          %1240 = vmatpush2.bf16.msra.mxu0 0
          %1241 = vmatprep.subr.bf16.mxu0 0
          %1242 = vmatpush2.bf16.msra.mxu0 0
          %1243 = vmatprep.mubr.bf16.mxu0 0
          %1244 = vmatmul.mubr.bf16.gmra.mxu0 %v1164
          %v1245 = vpop.f32.mrf.mxu0
          %v1246 = vadd.f32 0.0, %v1245
          %v1247 = vpop.f32.mrf.mxu0
          %v1248 = vpop.f32.mrf.mxu0
          %v1249 = vadd.f32 0.0, %v1248
          %v1250 = vpop.f32.mrf.mxu0
          %1251 = vmatprep.mubr.bf16.mxu0 0
          %1252 = vmatmul.mubr.bf16.gmra.mxu0 %v1167
          %v1253 = vpop.f32.mrf.mxu0
          %v1254 = vadd.f32 0.0, %v1253
          %v1255 = vpop.f32.mrf.mxu0
          %v1256 = vpop.f32.mrf.mxu0
          %v1257 = vadd.f32 0.0, %v1256
          %v1258 = vpop.f32.mrf.mxu0
          %1259 = vmatprep.mubr.bf16.mxu0 0
          %1260 = vmatmul.mubr.bf16.gmra.mxu0 %v1170
          %v1261 = vpop.f32.mrf.mxu0
          %v1262 = vadd.f32 0.0, %v1261
          %v1263 = vpop.f32.mrf.mxu0
          %v1264 = vpop.f32.mrf.mxu0
          %v1265 = vadd.f32 0.0, %v1264
          %v1266 = vpop.f32.mrf.mxu0
          %1267 = vmatprep.mubr.bf16.mxu0 0
          %1268 = vmatmul.mubr.bf16.gmra.mxu0 %v1173
          %v1269 = vpop.f32.mrf.mxu0
          %v1270 = vadd.f32 0.0, %v1269
          %v1271 = vpop.f32.mrf.mxu0
          %v1272 = vpop.f32.mrf.mxu0
          %v1273 = vadd.f32 0.0, %v1272
          %v1274 = vpop.f32.mrf.mxu0
          %1275 = vmatprep.mubr.bf16.mxu0 0
          %1276 = vmatmul.mubr.bf16.gmra.mxu0 %v1176
          %v1277 = vpop.f32.mrf.mxu0
          %v1278 = vadd.f32 0.0, %v1277
          %v1279 = vpop.f32.mrf.mxu0
          %v1280 = vpop.f32.mrf.mxu0
          %v1281 = vadd.f32 0.0, %v1280
          %v1282 = vpop.f32.mrf.mxu0
          %1283 = vmatprep.mubr.bf16.mxu0 0
          %1284 = vmatmul.mubr.bf16.gmra.mxu0 %v1179
          %v1285 = vpop.f32.mrf.mxu0
          %v1286 = vadd.f32 0.0, %v1285
          %v1287 = vpop.f32.mrf.mxu0
          %v1288 = vpop.f32.mrf.mxu0
          %v1289 = vadd.f32 0.0, %v1288
          %v1290 = vpop.f32.mrf.mxu0
          %1291 = vmatprep.mubr.bf16.mxu0 0
          %1292 = vmatmul.mubr.bf16.gmra.mxu0 %v1182
          %v1293 = vpop.f32.mrf.mxu0
          %v1294 = vadd.f32 0.0, %v1293
          %v1295 = vpop.f32.mrf.mxu0
          %v1296 = vpop.f32.mrf.mxu0
          %v1297 = vadd.f32 0.0, %v1296
          %v1298 = vpop.f32.mrf.mxu0
          %1299 = vmatprep.mubr.bf16.mxu0 0
          %1300 = vmatmul.mubr.bf16.gmra.mxu0 %v1185
          %v1301 = vpop.f32.mrf.mxu0
          %v1302 = vadd.f32 0.0, %v1301
          %v1303 = vpop.f32.mrf.mxu0
          %v1304 = vpop.f32.mrf.mxu0
          %v1305 = vadd.f32 0.0, %v1304
          %v1306 = vpop.f32.mrf.mxu0
          %1307 = vmatprep.mubr.bf16.mxu0 0
          %1308 = vmatmul.mubr.bf16.gmra.mxu0 %v1188
          %v1309 = vpop.f32.mrf.mxu0
          %v1310 = vadd.f32 0.0, %v1309
          %v1311 = vpop.f32.mrf.mxu0
          %v1312 = vpop.f32.mrf.mxu0
          %v1313 = vadd.f32 0.0, %v1312
          %v1314 = vpop.f32.mrf.mxu0
          %1315 = vmatprep.mubr.bf16.mxu0 0
          %1316 = vmatmul.mubr.bf16.gmra.mxu0 %v1191
          %v1317 = vpop.f32.mrf.mxu0
          %v1318 = vadd.f32 0.0, %v1317
          %v1319 = vpop.f32.mrf.mxu0
          %v1320 = vpop.f32.mrf.mxu0
          %v1321 = vadd.f32 0.0, %v1320
          %v1322 = vpop.f32.mrf.mxu0
          %1323 = vmatprep.mubr.bf16.mxu0 0
          %1324 = vmatmul.mubr.bf16.gmra.mxu0 %v1194
          %v1325 = vpop.f32.mrf.mxu0
          %v1326 = vadd.f32 0.0, %v1325
          %v1327 = vpop.f32.mrf.mxu0
          %v1328 = vpop.f32.mrf.mxu0
          %v1329 = vadd.f32 0.0, %v1328
          %v1330 = vpop.f32.mrf.mxu0
          %1331 = vmatprep.mubr.bf16.mxu0 0
          %1332 = vmatmul.mubr.bf16.gmra.mxu0 %v1197
          %v1333 = vpop.f32.mrf.mxu0
          %v1334 = vadd.f32 0.0, %v1333
          %v1335 = vpop.f32.mrf.mxu0
          %v1336 = vpop.f32.mrf.mxu0
          %v1337 = vadd.f32 0.0, %v1336
          %v1338 = vpop.f32.mrf.mxu0
          %1339 = vmatprep.mubr.bf16.mxu0 0
          %1340 = vmatmul.mubr.bf16.gmra.mxu0 %v1200
          %v1341 = vpop.f32.mrf.mxu0
          %v1342 = vadd.f32 0.0, %v1341
          %v1343 = vpop.f32.mrf.mxu0
          %v1344 = vpop.f32.mrf.mxu0
          %v1345 = vadd.f32 0.0, %v1344
          %v1346 = vpop.f32.mrf.mxu0
          %1347 = vmatprep.mubr.bf16.mxu0 0
          %1348 = vmatmul.mubr.bf16.gmra.mxu0 %v1203
          %v1349 = vpop.f32.mrf.mxu0
          %v1350 = vadd.f32 0.0, %v1349
          %v1351 = vpop.f32.mrf.mxu0
          %v1352 = vpop.f32.mrf.mxu0
          %v1353 = vadd.f32 0.0, %v1352
          %v1354 = vpop.f32.mrf.mxu0
          %1355 = vmatprep.mubr.bf16.mxu0 0
          %1356 = vmatmul.mubr.bf16.gmra.mxu0 %v1206
          %v1357 = vpop.f32.mrf.mxu0
          %v1358 = vadd.f32 0.0, %v1357
          %v1359 = vpop.f32.mrf.mxu0
          %v1360 = vpop.f32.mrf.mxu0
          %v1361 = vadd.f32 0.0, %v1360
          %v1362 = vpop.f32.mrf.mxu0
          %1363 = vmatprep.mubr.bf16.mxu0 0
          %1364 = vmatmul.mubr.bf16.gmra.mxu0 %v1209
          %v1365 = vpop.f32.mrf.mxu0
          %v1366 = vadd.f32 0.0, %v1365
          %v1367 = vpop.f32.mrf.mxu0
          %v1368 = vpop.f32.mrf.mxu0
          %v1369 = vadd.f32 0.0, %v1368
          %v1370 = vpop.f32.mrf.mxu0
          %1371 = vdwg.mxu0
          %v1372 = vpack.c.bf16 %v1249, %v1246
          %v1373 = vpack.c.bf16 %v1257, %v1254
          %v1374 = vpack.c.bf16 %v1265, %v1262
          %v1375 = vpack.c.bf16 %v1273, %v1270
          %v1376 = vpack.c.bf16 %v1281, %v1278
          %v1377 = vpack.c.bf16 %v1289, %v1286
          %v1378 = vpack.c.bf16 %v1297, %v1294
          %v1379 = vpack.c.bf16 %v1305, %v1302
          %v1380 = vpack.c.bf16 %v1313, %v1310
          %v1381 = vpack.c.bf16 %v1321, %v1318
          %v1382 = vpack.c.bf16 %v1329, %v1326
          %v1383 = vpack.c.bf16 %v1337, %v1334
          %v1384 = vpack.c.bf16 %v1345, %v1342
          %v1385 = vpack.c.bf16 %v1353, %v1350
          %v1386 = vpack.c.bf16 %v1361, %v1358
          %v1387 = vpack.c.bf16 %v1369, %v1366
          %v1404 = vunpack.c.l.b16 %v1372
          %v1405 = vunpack.c.h.b16 %v1372
          %v1406 = vunpack.c.l.b16 %v1373
          %v1407 = vunpack.c.h.b16 %v1373
          %v1408 = vunpack.c.l.b16 %v1374
          %v1409 = vunpack.c.h.b16 %v1374
          %v1410 = vunpack.c.l.b16 %v1375
          %v1411 = vunpack.c.h.b16 %v1375
          %v1412 = vunpack.c.l.b16 %v1376
          %v1413 = vunpack.c.h.b16 %v1376
          %v1414 = vunpack.c.l.b16 %v1377
          %v1415 = vunpack.c.h.b16 %v1377
          %v1416 = vunpack.c.l.b16 %v1378
          %v1417 = vunpack.c.h.b16 %v1378
          %v1418 = vunpack.c.l.b16 %v1379
          %v1419 = vunpack.c.h.b16 %v1379
          %v1420 = vunpack.c.l.b16 %v1380
          %v1421 = vunpack.c.h.b16 %v1380
          %v1422 = vunpack.c.l.b16 %v1381
          %v1423 = vunpack.c.h.b16 %v1381
          %v1424 = vunpack.c.l.b16 %v1382
          %v1425 = vunpack.c.h.b16 %v1382
          %v1426 = vunpack.c.l.b16 %v1383
          %v1427 = vunpack.c.h.b16 %v1383
          %v1428 = vunpack.c.l.b16 %v1384
          %v1429 = vunpack.c.h.b16 %v1384
          %v1430 = vunpack.c.l.b16 %v1385
          %v1431 = vunpack.c.h.b16 %v1385
          %v1432 = vunpack.c.l.b16 %v1386
          %v1433 = vunpack.c.h.b16 %v1386
          %v1434 = vunpack.c.l.b16 %v1387
          %v1435 = vunpack.c.h.b16 %v1387
          %v1436 = vpack.c.b16 %v1404, %v1404
          %v1437 = vpack.c.b16 %v1405, %v1405
          %v1438 = vpack.c.b16 %v1406, %v1406
          %v1439 = vpack.c.b16 %v1407, %v1407
          %v1440 = vpack.c.b16 %v1408, %v1408
          %v1441 = vpack.c.b16 %v1409, %v1409
          %v1442 = vpack.c.b16 %v1410, %v1410
          %v1443 = vpack.c.b16 %v1411, %v1411
          %v1444 = vpack.c.b16 %v1412, %v1412
          %v1445 = vpack.c.b16 %v1413, %v1413
          %v1446 = vpack.c.b16 %v1414, %v1414
          %v1447 = vpack.c.b16 %v1415, %v1415
          %v1448 = vpack.c.b16 %v1416, %v1416
          %v1449 = vpack.c.b16 %v1417, %v1417
          %v1450 = vpack.c.b16 %v1418, %v1418
          %v1451 = vpack.c.b16 %v1419, %v1419
          %v1452 = vpack.c.b16 %v1420, %v1420
          %v1453 = vpack.c.b16 %v1421, %v1421
          %v1454 = vpack.c.b16 %v1422, %v1422
          %v1455 = vpack.c.b16 %v1423, %v1423
          %v1456 = vpack.c.b16 %v1424, %v1424
          %v1457 = vpack.c.b16 %v1425, %v1425
          %v1458 = vpack.c.b16 %v1426, %v1426
          %v1459 = vpack.c.b16 %v1427, %v1427
          %v1460 = vpack.c.b16 %v1428, %v1428
          %v1461 = vpack.c.b16 %v1429, %v1429
          %v1462 = vpack.c.b16 %v1430, %v1430
          %v1463 = vpack.c.b16 %v1431, %v1431
          %v1464 = vpack.c.b16 %v1432, %v1432
          %v1465 = vpack.c.b16 %v1433, %v1433
          %v1466 = vpack.c.b16 %v1434, %v1434
          %v1467 = vpack.c.b16 %v1435, %v1435
          %vm1500 = vcmask 60416
          %1501 = vst.msk [vmem:[%s400] sm:$0xf] %vm1500, %v1436
          %1502 = vst.msk [vmem:[%s400 + $0x4] sm:$0xf] %vm1500, %v1437
          %1503 = vst.msk [vmem:[%s400 + $0x8] sm:$0xf] %vm1500, %v1438
          %1504 = vst.msk [vmem:[%s400 + $0xc] sm:$0xf] %vm1500, %v1439
          %1505 = vst.msk [vmem:[%s400 + $0x10] sm:$0xf] %vm1500, %v1440
          %1506 = vst.msk [vmem:[%s400 + $0x14] sm:$0xf] %vm1500, %v1441
          %1507 = vst.msk [vmem:[%s400 + $0x18] sm:$0xf] %vm1500, %v1442
          %1508 = vst.msk [vmem:[%s400 + $0x1c] sm:$0xf] %vm1500, %v1443
          %1509 = vst.msk [vmem:[%s400 + $0x20] sm:$0xf] %vm1500, %v1444
          %1510 = vst.msk [vmem:[%s400 + $0x24] sm:$0xf] %vm1500, %v1445
          %1511 = vst.msk [vmem:[%s400 + $0x28] sm:$0xf] %vm1500, %v1446
          %1512 = vst.msk [vmem:[%s400 + $0x2c] sm:$0xf] %vm1500, %v1447
          %1513 = vst.msk [vmem:[%s400 + $0x30] sm:$0xf] %vm1500, %v1448
          %1514 = vst.msk [vmem:[%s400 + $0x34] sm:$0xf] %vm1500, %v1449
          %1515 = vst.msk [vmem:[%s400 + $0x38] sm:$0xf] %vm1500, %v1450
          %1516 = vst.msk [vmem:[%s400 + $0x3c] sm:$0xf] %vm1500, %v1451
          %1517 = vst.msk [vmem:[%s400 + $0x40] sm:$0xf] %vm1500, %v1452
          %1518 = vst.msk [vmem:[%s400 + $0x44] sm:$0xf] %vm1500, %v1453
          %1519 = vst.msk [vmem:[%s400 + $0x48] sm:$0xf] %vm1500, %v1454
          %1520 = vst.msk [vmem:[%s400 + $0x4c] sm:$0xf] %vm1500, %v1455
          %1521 = vst.msk [vmem:[%s400 + $0x50] sm:$0xf] %vm1500, %v1456
          %1522 = vst.msk [vmem:[%s400 + $0x54] sm:$0xf] %vm1500, %v1457
          %1523 = vst.msk [vmem:[%s400 + $0x58] sm:$0xf] %vm1500, %v1458
          %1524 = vst.msk [vmem:[%s400 + $0x5c] sm:$0xf] %vm1500, %v1459
          %1525 = vst.msk [vmem:[%s400 + $0x60] sm:$0xf] %vm1500, %v1460
          %1526 = vst.msk [vmem:[%s400 + $0x64] sm:$0xf] %vm1500, %v1461
          %1527 = vst.msk [vmem:[%s400 + $0x68] sm:$0xf] %vm1500, %v1462
          %1528 = vst.msk [vmem:[%s400 + $0x6c] sm:$0xf] %vm1500, %v1463
          %1529 = vst.msk [vmem:[%s400 + $0x70] sm:$0xf] %vm1500, %v1464
          %1530 = vst.msk [vmem:[%s400 + $0x74] sm:$0xf] %vm1500, %v1465
          %1531 = vst.msk [vmem:[%s400 + $0x78] sm:$0xf] %vm1500, %v1466
          %1532 = vst.msk [vmem:[%s400 + $0x7c] sm:$0xf] %vm1500, %v1467
        $region86: #{gcn_forward.4} parent=69 // pred_fallthru
          _
        %s1533 = smul.u32 32, %s31
        %p1534 = scmp.lt.s32.totalorder %s1533, 63
        %s1535 = scalar_select %p1534, %s1533, 63
        %s1536 = smul.addr %s1535, 4
        %s1537 = scalar_lea.vmem %s6, %s1536
        // Predicated region
        $region87: #{gcn_forward.4} parent=69 // pred_check
          %p1538 = pneg %p154
        $region88: #{gcn_forward.4} parent=69 // pred_check_branch
          %1540 = sbr.rel (%p1538) target = $region90
        $region89: #{gcn_forward.4} parent=69 // pred_region
          %s1541 = smul.u32 32, %s31
        $region90: #{gcn_forward.4} parent=69 // pred_fallthru
          _
      $region70: #{gcn_forward.4} parent=5 // pred_fallthru
        _
      %p1542 = scmp.le.s32.totalorder 2, %s22
      // Predicated region
      $region91: #{gcn_forward.4} parent=5 // pred_check
        %p1543 = pneg %p1542
      $region92: #{gcn_forward.4} parent=5 // pred_check_branch
        %1545 = sbr.rel (%p1543) target = $region94
      $region93: #{gcn_forward.4} parent=5 // pred_region
        %s1546 = ssub.s32 %s22, 2
        // Predicated region
        $region95: #{gcn_forward.4} parent=93 // pred_check
          %p1547 = pneg %p160
        $region96: #{gcn_forward.4} parent=93 // pred_check_branch
          %1549 = sbr.rel (%p1547) target = $region98
        $region97: #{gcn_forward.4} parent=93 // pred_region
          %s1550 = smul.u32 32, %s33
          %p1551 = scmp.lt.s32.totalorder %s1550, 63
          %s1552 = scalar_select %p1551, %s1550, 63
          %s1553 = smul.addr %s1552, 4
          %s1554 = scalar_lea.vmem %s6, %s1553
        $region98: #{gcn_forward.4} parent=93 // pred_fallthru
          _
      $region94: #{gcn_forward.4} parent=5 // pred_fallthru
        _
    $region6: #{gcn_forward.4} parent=1 // loop_footer
      %s26 = sadd.s32 1, %s22
    $region7: #{gcn_forward.4} parent=1 // loop_footer_branch
      %21 = sbr.rel target = $region3
    $region8: #{gcn_forward.4} parent=1 // loop_exit
      _

// kernel: gcn_forward.5
$region0: #{gcn_forward.5}
  #allocation0 [shape = 'u32[]', space=smem, size = 0x4, offset = 0x4, fixed_abs, tag = 'smem constant byte address 0x4 - core index']
  #allocation1 [shape = 'u32[144,128]{1,0:T(1,128)}', space=vmem, size = 0x12000, scoped, tag = 'internal scratch']
  #allocation2 [shape = 'f32[256,8]{1,0:T(8,128)}', space=vmem, size = 0x20000, scoped, tag = 'scratch operand']
  #allocation3 [shape = 's32[1]{0}', space=sflag, size = 0x4, scoped, tag = 'scoped memory for gcn_forward.5']
  #allocation4 [shape = 'u8[512]{0}', space=smem, size = 0x200, scoped, tag = 'prefetched SMEM operand 0']
  #allocation5 [shape = 'u8[512]{0}', space=smem, size = 0x200, scoped, tag = 'prefetched SMEM operand 1']
  %s0 = inlined_call_operand.vmem [shape: s32[4], index: 0, kind: input, shape index: {}]
  %s1 = inlined_call_operand.vmem [shape: s32[2], index: 1, kind: input, shape index: {}]
  %s2 = inlined_call_operand.vmem [shape: bf16[512,512], index: 2, kind: input, shape index: {}]
  %s3 = inlined_call_operand.vmem [shape: bf16[512,8], index: 3, kind: input, shape index: {}]
  %s4 = inlined_call_operand.vmem [shape: f32[1,8], index: 4, kind: input, shape index: {}]
  %s5 = inlined_call_operand.vmem [shape: f32[512,8], index: 5, kind: output, shape index: {}]
  %s6 = sld [smem:[#allocation0]]
  $region95: #{gcn_forward.5} parent=0
    _
  %s8 = ssub.s32 1, %s6
  %s9 = scalar_select 0, %s8, %s6
  %s10 = sshll.u32 %s0, 4
  %s11 = int_to_ptr.vmem [resolvable:$true] %s10
  %13 = dma.vmem_to_smem %s11, 16, [#allocation4], [#allocation3]
  %s14 = sshll.u32 %s1, 4
  %s15 = int_to_ptr.vmem [resolvable:$true] %s14
  %17 = dma.vmem_to_smem %s15, 16, [#allocation5], [#allocation3]
  %18 = dma.done [#allocation3], 32
  %19 = sfence
  $region1: #{gcn_forward.5} parent=0
    #allocation6 [shape = 'u8[262144]{0}', space=vmem, size = 0x40000, scoped, tag = 'input window, operand 2']
    loop: start=0, step=1, limit=6
    $region2: #{gcn_forward.5} parent=1 // loop_pre_header
      _
    $region3: #{gcn_forward.5} parent=1 // loop_header
      %s21 = sphi 0, %s25
      %p22 = scmp.ge.s32.totalorder %s21, 6
      %s28 = sphi 0, %s40
      %s29 = sphi 0, %s36
      %s30 = sphi 0, %s28
      %s31 = sphi 0, %s29
      %s32 = sphi 0, %s30
      %s33 = sphi 0, %s31
      %s51 = sphi 0, %s53
      %s54 = sphi 0, %s51
      %s55 = sphi 0, %s54
      %s71 = sphi 0, %s55
      %s75 = sphi 0, %s75
      %s77 = sphi 0, %s75
      %s78 = sphi 0, %s77
      %s92 = sphi 0, %s78
      %s96 = sphi 0, %s96
      %s98 = sphi 0, %s96
      %s99 = sphi 0, %s98
      %s113 = sphi 0, %s99
      %s119 = sphi 0, %s121
      %s122 = sphi 0, %s119
      %s123 = sphi 0, %s122
      %s139 = sphi 0, %s123
    $region4: #{gcn_forward.5} parent=1 // loop_header_branch
      %24 = sbr.rel (%p22) target = $region8
    $region5: #{gcn_forward.5} parent=1 // loop_body
      %s26 = ssub.s32 %s21, 1
      %s27 = ssub.s32 %s21, 2
      %s34 = sadd.s32 1, %s29
      %p35 = scmp.ge.s32.totalorder %s34, 2
      %s36 = scalar_select %p35, 0, %s34
      %s37 = sadd.s32 1, %s28
      %s38 = scalar_select %p35, %s37, %s28
      %p39 = scmp.ge.s32.totalorder %s38, 2
      %s40 = scalar_select %p39, 0, %s38
      %s41 = smul.u32 %s28, 2
      %s42 = sadd.s32 %s41, %s29
      %s43 = sld [smem:[#allocation4 + %s42]]
      %s44 = smul.u32 %s40, 2
      %s45 = sadd.s32 %s44, %s36
      %s46 = sld [smem:[#allocation4 + %s45]]
      %s47 = ssub.s32 %s28, %s40
      %s48 = ssub.s32 %s43, %s46
      %s49 = sor.u32 %s47, %s48
      %p50 = scmp.eq.s32.totalorder %s49, 0
      %s52 = sadd.s32 %s51, 1
      %s53 = scalar_select %p50, %s51, %s52
      %p56 = pneg %p50
      %p57 = scmp.eq.s32.totalorder %s21, 3
      %p58 = por %p56, %p57
      %p59 = scmp.ne.s32.totalorder %s51, %s54
      %p60 = scmp.eq.s32.totalorder %s21, 0
      %p61 = por %p59, %p60
      %p62 = scmp.ne.s32.totalorder %s51, %s54
      %p63 = scmp.eq.s32.totalorder %s26, 3
      %p64 = por %p62, %p63
      %p65 = scmp.ne.s32.totalorder %s54, %s55
      %p66 = scmp.eq.s32.totalorder %s26, 0
      %p67 = por %p65, %p66
      %p68 = scmp.ne.s32.totalorder %s54, %s55
      %p69 = scmp.eq.s32.totalorder %s27, 3
      %p70 = por %p68, %p69
      %p72 = scmp.ne.s32.totalorder %s55, %s71
      %p73 = scmp.eq.s32.totalorder %s27, 0
      %p74 = por %p72, %p73
      %s76 = sadd.s32 %s75, 1
      %p79 = scmp.eq.s32.totalorder %s21, 3
      %p80 = scmp.ne.s32.totalorder %s75, %s77
      %p81 = scmp.eq.s32.totalorder %s21, 0
      %p82 = por %p80, %p81
      %p83 = scmp.ne.s32.totalorder %s75, %s77
      %p84 = scmp.eq.s32.totalorder %s26, 3
      %p85 = por %p83, %p84
      %p86 = scmp.ne.s32.totalorder %s77, %s78
      %p87 = scmp.eq.s32.totalorder %s26, 0
      %p88 = por %p86, %p87
      %p89 = scmp.ne.s32.totalorder %s77, %s78
      %p90 = scmp.eq.s32.totalorder %s27, 3
      %p91 = por %p89, %p90
      %p93 = scmp.ne.s32.totalorder %s78, %s92
      %p94 = scmp.eq.s32.totalorder %s27, 0
      %p95 = por %p93, %p94
      %s97 = sadd.s32 %s96, 1
      %p100 = scmp.eq.s32.totalorder %s21, 3
      %p101 = scmp.ne.s32.totalorder %s96, %s98
      %p102 = scmp.eq.s32.totalorder %s21, 0
      %p103 = por %p101, %p102
      %p104 = scmp.ne.s32.totalorder %s96, %s98
      %p105 = scmp.eq.s32.totalorder %s26, 3
      %p106 = por %p104, %p105
      %p107 = scmp.ne.s32.totalorder %s98, %s99
      %p108 = scmp.eq.s32.totalorder %s26, 0
      %p109 = por %p107, %p108
      %p110 = scmp.ne.s32.totalorder %s98, %s99
      %p111 = scmp.eq.s32.totalorder %s27, 3
      %p112 = por %p110, %p111
      %p114 = scmp.ne.s32.totalorder %s99, %s113
      %p115 = scmp.eq.s32.totalorder %s27, 0
      %p116 = por %p114, %p115
      %s117 = ssub.s32 %s28, %s40
      %p118 = scmp.eq.s32.totalorder %s117, 0
      %s120 = sadd.s32 %s119, 1
      %s121 = scalar_select %p118, %s119, %s120
      %p124 = pneg %p118
      %p125 = scmp.eq.s32.totalorder %s21, 3
      %p126 = por %p124, %p125
      %p127 = scmp.ne.s32.totalorder %s119, %s122
      %p128 = scmp.eq.s32.totalorder %s21, 0
      %p129 = por %p127, %p128
      %p130 = scmp.ne.s32.totalorder %s119, %s122
      %p131 = scmp.eq.s32.totalorder %s26, 3
      %p132 = por %p130, %p131
      %p133 = scmp.ne.s32.totalorder %s122, %s123
      %p134 = scmp.eq.s32.totalorder %s26, 0
      %p135 = por %p133, %p134
      %p136 = scmp.ne.s32.totalorder %s122, %s123
      %p137 = scmp.eq.s32.totalorder %s27, 3
      %p138 = por %p136, %p137
      %p140 = scmp.ne.s32.totalorder %s123, %s139
      %p141 = scmp.eq.s32.totalorder %s27, 0
      %p142 = por %p140, %p141
      %p143 = scmp.le.s32.totalorder 1, %s21
      %p144 = scmp.lt.s32.totalorder %s21, 5
      %p145 = pnand %p143, %p144
      %p146 = pneg %p145
      // Predicated region
      $region9: #{gcn_forward.5} parent=5 // pred_check
        _
      $region10: #{gcn_forward.5} parent=5 // pred_check_branch
        %148 = sbr.rel (%p145) target = $region12
      $region11: #{gcn_forward.5} parent=5 // pred_region
        %s149 = ssub.s32 %s21, 1
        // Predicated region
        $region13: #{gcn_forward.5} parent=11 // pred_check
          %p150 = pneg %p88
        $region14: #{gcn_forward.5} parent=11 // pred_check_branch
          %152 = sbr.rel (%p150) target = $region16
        $region15: #{gcn_forward.5} parent=11 // pred_region
          _
        $region16: #{gcn_forward.5} parent=11 // pred_fallthru
          _
        // Predicated region
        $region17: #{gcn_forward.5} parent=11 // pred_check
          %p153 = pneg %p109
        $region18: #{gcn_forward.5} parent=11 // pred_check_branch
          %155 = sbr.rel (%p153) target = $region20
        $region19: #{gcn_forward.5} parent=11 // pred_region
          _
        $region20: #{gcn_forward.5} parent=11 // pred_fallthru
          _
      $region12: #{gcn_forward.5} parent=5 // pred_fallthru
        _
      %p156 = scmp.lt.s32.totalorder %s21, 4
      // Predicated region
      $region21: #{gcn_forward.5} parent=5 // pred_check
        %p157 = pneg %p156
      $region22: #{gcn_forward.5} parent=5 // pred_check_branch
        %159 = sbr.rel (%p157) target = $region24
      $region23: #{gcn_forward.5} parent=5 // pred_region
        // Predicated region
        $region25: #{gcn_forward.5} parent=23 // pred_check
          %p160 = pneg %p61
        $region26: #{gcn_forward.5} parent=23 // pred_check_branch
          %162 = sbr.rel (%p160) target = $region28
        $region27: #{gcn_forward.5} parent=23 // pred_region
          %s163 = sand.u32 %s51, 1
          %s164 = sand.u32 %s51, 1
          %s165 = smul.addr %s164, 256
          %s166 = scalar_lea.vmem [#allocation6], %s165
          %s167 = smul.u32 %s28, 2
          %s168 = sadd.s32 %s167, %s29
          %s169 = sld [smem:[#allocation4 + %s168]]
          %s170 = smul.u32 32, %s28
          %s171 = smul.u32 2, %s169
          %s172 = smul.addr %s170, 4
          %s173 = sadd.s32 %s171, %s172
          %s174 = smul.addr %s173, 4
          %s175 = scalar_lea.vmem %s2, %s174
          // Predicated region
          $region29: #{gcn_forward.5} parent=27 // pred_check
            _
          $region30: #{gcn_forward.5} parent=27 // pred_check_branch
            %177 = sbr.rel (0) target = $region32
          $region31: #{gcn_forward.5} parent=27 // pred_region
            // Predicated region
            $region33: #{gcn_forward.5} parent=31 // pred_check
              _
            $region34: #{gcn_forward.5} parent=31 // pred_check_branch
              %179 = sbr.rel (0) target = $region36
            $region35: #{gcn_forward.5} parent=31 // pred_region
              // Predicated region
              $region48: #{gcn_forward.5} parent=35 // pred_check
                _
              $region49: #{gcn_forward.5} parent=35 // pred_check_branch
                %257 = sbr.rel (0) target = $region51
              $region50: #{gcn_forward.5} parent=35 // pred_region
                loop: start=0, step=1, limit=1
                $region52: #{gcn_forward.5} parent=50 // loop_pre_header
                  _
                $region53: #{gcn_forward.5} parent=50 // loop_header
                  %s259 = sphi 0, %s263
                  %p260 = scmp.ge.s32.totalorder %s259, 1
                  %s264 = sphi %s175, %s175
                  %s265 = sphi %s166, %s166
                $region54: #{gcn_forward.5} parent=50 // loop_header_branch
                  %262 = sbr.rel (%p260) target = $region58
                $region55: #{gcn_forward.5} parent=50 // loop_body
                  %v266 = vld [vmem:[%s264] sm:$0xff]
                  %267 = vst [vmem:[%s265] sm:$0xff] %v266
                  %v268 = vld [vmem:[%s264 + $0x10] sm:$0xff]
                  %269 = vst [vmem:[%s265 + $0x8] sm:$0xff] %v268
                  %v270 = vld [vmem:[%s264 + $0x20] sm:$0xff]
                  %271 = vst [vmem:[%s265 + $0x10] sm:$0xff] %v270
                  %v272 = vld [vmem:[%s264 + $0x30] sm:$0xff]
                  %273 = vst [vmem:[%s265 + $0x18] sm:$0xff] %v272
                  %v274 = vld [vmem:[%s264 + $0x40] sm:$0xff]
                  %275 = vst [vmem:[%s265 + $0x20] sm:$0xff] %v274
                  %v276 = vld [vmem:[%s264 + $0x50] sm:$0xff]
                  %277 = vst [vmem:[%s265 + $0x28] sm:$0xff] %v276
                  %v278 = vld [vmem:[%s264 + $0x60] sm:$0xff]
                  %279 = vst [vmem:[%s265 + $0x30] sm:$0xff] %v278
                  %v280 = vld [vmem:[%s264 + $0x70] sm:$0xff]
                  %281 = vst [vmem:[%s265 + $0x38] sm:$0xff] %v280
                  %v282 = vld [vmem:[%s264 + $0x80] sm:$0xff]
                  %283 = vst [vmem:[%s265 + $0x40] sm:$0xff] %v282
                  %v284 = vld [vmem:[%s264 + $0x90] sm:$0xff]
                  %285 = vst [vmem:[%s265 + $0x48] sm:$0xff] %v284
                  %v286 = vld [vmem:[%s264 + $0xa0] sm:$0xff]
                  %287 = vst [vmem:[%s265 + $0x50] sm:$0xff] %v286
                  %v288 = vld [vmem:[%s264 + $0xb0] sm:$0xff]
                  %289 = vst [vmem:[%s265 + $0x58] sm:$0xff] %v288
                  %v290 = vld [vmem:[%s264 + $0xc0] sm:$0xff]
                  %291 = vst [vmem:[%s265 + $0x60] sm:$0xff] %v290
                  %v292 = vld [vmem:[%s264 + $0xd0] sm:$0xff]
                  %293 = vst [vmem:[%s265 + $0x68] sm:$0xff] %v292
                  %v294 = vld [vmem:[%s264 + $0xe0] sm:$0xff]
                  %295 = vst [vmem:[%s265 + $0x70] sm:$0xff] %v294
                  %v296 = vld [vmem:[%s264 + $0xf0] sm:$0xff]
                  %297 = vst [vmem:[%s265 + $0x78] sm:$0xff] %v296
                  %v298 = vld [vmem:[%s264 + $0x100] sm:$0xff]
                  %299 = vst [vmem:[%s265 + $0x80] sm:$0xff] %v298
                  %v300 = vld [vmem:[%s264 + $0x110] sm:$0xff]
                  %301 = vst [vmem:[%s265 + $0x88] sm:$0xff] %v300
                  %v302 = vld [vmem:[%s264 + $0x120] sm:$0xff]
                  %303 = vst [vmem:[%s265 + $0x90] sm:$0xff] %v302
                  %v304 = vld [vmem:[%s264 + $0x130] sm:$0xff]
                  %305 = vst [vmem:[%s265 + $0x98] sm:$0xff] %v304
                  %v306 = vld [vmem:[%s264 + $0x140] sm:$0xff]
                  %307 = vst [vmem:[%s265 + $0xa0] sm:$0xff] %v306
                  %v308 = vld [vmem:[%s264 + $0x150] sm:$0xff]
                  %309 = vst [vmem:[%s265 + $0xa8] sm:$0xff] %v308
                  %v310 = vld [vmem:[%s264 + $0x160] sm:$0xff]
                  %311 = vst [vmem:[%s265 + $0xb0] sm:$0xff] %v310
                  %v312 = vld [vmem:[%s264 + $0x170] sm:$0xff]
                  %313 = vst [vmem:[%s265 + $0xb8] sm:$0xff] %v312
                  %v314 = vld [vmem:[%s264 + $0x180] sm:$0xff]
                  %315 = vst [vmem:[%s265 + $0xc0] sm:$0xff] %v314
                  %v316 = vld [vmem:[%s264 + $0x190] sm:$0xff]
                  %317 = vst [vmem:[%s265 + $0xc8] sm:$0xff] %v316
                  %v318 = vld [vmem:[%s264 + $0x1a0] sm:$0xff]
                  %319 = vst [vmem:[%s265 + $0xd0] sm:$0xff] %v318
                  %v320 = vld [vmem:[%s264 + $0x1b0] sm:$0xff]
                  %321 = vst [vmem:[%s265 + $0xd8] sm:$0xff] %v320
                  %v322 = vld [vmem:[%s264 + $0x1c0] sm:$0xff]
                  %323 = vst [vmem:[%s265 + $0xe0] sm:$0xff] %v322
                  %v324 = vld [vmem:[%s264 + $0x1d0] sm:$0xff]
                  %325 = vst [vmem:[%s265 + $0xe8] sm:$0xff] %v324
                  %v326 = vld [vmem:[%s264 + $0x1e0] sm:$0xff]
                  %327 = vst [vmem:[%s265 + $0xf0] sm:$0xff] %v326
                  %v328 = vld [vmem:[%s264 + $0x1f0] sm:$0xff]
                  %329 = vst [vmem:[%s265 + $0xf8] sm:$0xff] %v328
                $region56: #{gcn_forward.5} parent=50 // loop_footer
                  %s263 = sadd.s32 1, %s259
                $region57: #{gcn_forward.5} parent=50 // loop_footer_branch
                  %258 = sbr.rel target = $region53
                $region58: #{gcn_forward.5} parent=50 // loop_exit
                  _
              $region51: #{gcn_forward.5} parent=35 // pred_fallthru
                _
              // Predicated region
              $region59: #{gcn_forward.5} parent=35 // pred_check
                _
              $region60: #{gcn_forward.5} parent=35 // pred_check_branch
                %331 = sbr.rel target = $region62
              $region61: #{gcn_forward.5} parent=35 // pred_region
                _
              $region62: #{gcn_forward.5} parent=35 // pred_fallthru
                _
            $region36: #{gcn_forward.5} parent=31 // pred_fallthru
              _
            // Predicated region
            $region37: #{gcn_forward.5} parent=31 // pred_check
              _
            $region38: #{gcn_forward.5} parent=31 // pred_check_branch
              %181 = sbr.rel target = $region40
            $region39: #{gcn_forward.5} parent=31 // pred_region
              %s183 = ssub.s32 256, 1
              loop: start=0, step=1, limit=1
              $region41: #{gcn_forward.5} parent=39 // loop_pre_header
                _
              $region42: #{gcn_forward.5} parent=39 // loop_header
                %s185 = sphi 0, %s189
                %p186 = scmp.ge.s32.totalorder %s185, 1
                %s190 = sphi %s175, %s175
                %s191 = sphi %s166, %s166
              $region43: #{gcn_forward.5} parent=39 // loop_header_branch
                %188 = sbr.rel (%p186) target = $region47
              $region44: #{gcn_forward.5} parent=39 // loop_body
                %v192 = vld [vmem:[%s190] sm:%s183]
                %193 = vst [vmem:[%s191] sm:%s183] %v192
                %v194 = vld [vmem:[%s190 + $0x10] sm:%s183]
                %195 = vst [vmem:[%s191 + $0x8] sm:%s183] %v194
                %v196 = vld [vmem:[%s190 + $0x20] sm:%s183]
                %197 = vst [vmem:[%s191 + $0x10] sm:%s183] %v196
                %v198 = vld [vmem:[%s190 + $0x30] sm:%s183]
                %199 = vst [vmem:[%s191 + $0x18] sm:%s183] %v198
                %v200 = vld [vmem:[%s190 + $0x40] sm:%s183]
                %201 = vst [vmem:[%s191 + $0x20] sm:%s183] %v200
                %v202 = vld [vmem:[%s190 + $0x50] sm:%s183]
                %203 = vst [vmem:[%s191 + $0x28] sm:%s183] %v202
                %v204 = vld [vmem:[%s190 + $0x60] sm:%s183]
                %205 = vst [vmem:[%s191 + $0x30] sm:%s183] %v204
                %v206 = vld [vmem:[%s190 + $0x70] sm:%s183]
                %207 = vst [vmem:[%s191 + $0x38] sm:%s183] %v206
                %v208 = vld [vmem:[%s190 + $0x80] sm:%s183]
                %209 = vst [vmem:[%s191 + $0x40] sm:%s183] %v208
                %v210 = vld [vmem:[%s190 + $0x90] sm:%s183]
                %211 = vst [vmem:[%s191 + $0x48] sm:%s183] %v210
                %v212 = vld [vmem:[%s190 + $0xa0] sm:%s183]
                %213 = vst [vmem:[%s191 + $0x50] sm:%s183] %v212
                %v214 = vld [vmem:[%s190 + $0xb0] sm:%s183]
                %215 = vst [vmem:[%s191 + $0x58] sm:%s183] %v214
                %v216 = vld [vmem:[%s190 + $0xc0] sm:%s183]
                %217 = vst [vmem:[%s191 + $0x60] sm:%s183] %v216
                %v218 = vld [vmem:[%s190 + $0xd0] sm:%s183]
                %219 = vst [vmem:[%s191 + $0x68] sm:%s183] %v218
                %v220 = vld [vmem:[%s190 + $0xe0] sm:%s183]
                %221 = vst [vmem:[%s191 + $0x70] sm:%s183] %v220
                %v222 = vld [vmem:[%s190 + $0xf0] sm:%s183]
                %223 = vst [vmem:[%s191 + $0x78] sm:%s183] %v222
                %v224 = vld [vmem:[%s190 + $0x100] sm:%s183]
                %225 = vst [vmem:[%s191 + $0x80] sm:%s183] %v224
                %v226 = vld [vmem:[%s190 + $0x110] sm:%s183]
                %227 = vst [vmem:[%s191 + $0x88] sm:%s183] %v226
                %v228 = vld [vmem:[%s190 + $0x120] sm:%s183]
                %229 = vst [vmem:[%s191 + $0x90] sm:%s183] %v228
                %v230 = vld [vmem:[%s190 + $0x130] sm:%s183]
                %231 = vst [vmem:[%s191 + $0x98] sm:%s183] %v230
                %v232 = vld [vmem:[%s190 + $0x140] sm:%s183]
                %233 = vst [vmem:[%s191 + $0xa0] sm:%s183] %v232
                %v234 = vld [vmem:[%s190 + $0x150] sm:%s183]
                %235 = vst [vmem:[%s191 + $0xa8] sm:%s183] %v234
                %v236 = vld [vmem:[%s190 + $0x160] sm:%s183]
                %237 = vst [vmem:[%s191 + $0xb0] sm:%s183] %v236
                %v238 = vld [vmem:[%s190 + $0x170] sm:%s183]
                %239 = vst [vmem:[%s191 + $0xb8] sm:%s183] %v238
                %v240 = vld [vmem:[%s190 + $0x180] sm:%s183]
                %241 = vst [vmem:[%s191 + $0xc0] sm:%s183] %v240
                %v242 = vld [vmem:[%s190 + $0x190] sm:%s183]
                %243 = vst [vmem:[%s191 + $0xc8] sm:%s183] %v242
                %v244 = vld [vmem:[%s190 + $0x1a0] sm:%s183]
                %245 = vst [vmem:[%s191 + $0xd0] sm:%s183] %v244
                %v246 = vld [vmem:[%s190 + $0x1b0] sm:%s183]
                %247 = vst [vmem:[%s191 + $0xd8] sm:%s183] %v246
                %v248 = vld [vmem:[%s190 + $0x1c0] sm:%s183]
                %249 = vst [vmem:[%s191 + $0xe0] sm:%s183] %v248
                %v250 = vld [vmem:[%s190 + $0x1d0] sm:%s183]
                %251 = vst [vmem:[%s191 + $0xe8] sm:%s183] %v250
                %v252 = vld [vmem:[%s190 + $0x1e0] sm:%s183]
                %253 = vst [vmem:[%s191 + $0xf0] sm:%s183] %v252
                %v254 = vld [vmem:[%s190 + $0x1f0] sm:%s183]
                %255 = vst [vmem:[%s191 + $0xf8] sm:%s183] %v254
              $region45: #{gcn_forward.5} parent=39 // loop_footer
                %s189 = sadd.s32 1, %s185
              $region46: #{gcn_forward.5} parent=39 // loop_footer_branch
                %184 = sbr.rel target = $region42
              $region47: #{gcn_forward.5} parent=39 // loop_exit
                _
            $region40: #{gcn_forward.5} parent=31 // pred_fallthru
              _
          $region32: #{gcn_forward.5} parent=27 // pred_fallthru
            _
          %332 = vnop
        $region28: #{gcn_forward.5} parent=23 // pred_fallthru
          _
      $region24: #{gcn_forward.5} parent=5 // pred_fallthru
        _
      %p333 = scmp.le.s32.totalorder 1, %s21
      %p334 = scmp.lt.s32.totalorder %s21, 5
      %p335 = pnand %p333, %p334
      %p336 = pneg %p335
      // Predicated region
      $region63: #{gcn_forward.5} parent=5 // pred_check
        _
      $region64: #{gcn_forward.5} parent=5 // pred_check_branch
        %338 = sbr.rel (%p335) target = $region66
      $region65: #{gcn_forward.5} parent=5 // pred_region
        %s339 = ssub.s32 %s21, 1
        %s340 = sand.u32 %s54, 1
        %s341 = sand.u32 %s54, 1
        %s342 = smul.addr %s341, 256
        %s343 = scalar_lea.vmem [#allocation6], %s342
        // Predicated region
        $region67: #{gcn_forward.5} parent=65 // pred_check
          %p344 = pneg %p67
        $region68: #{gcn_forward.5} parent=65 // pred_check_branch
          %346 = sbr.rel (%p344) target = $region70
        $region69: #{gcn_forward.5} parent=65 // pred_region
          _
        $region70: #{gcn_forward.5} parent=65 // pred_fallthru
          _
        %s347 = sand.u32 %s54, 1
        %s348 = sand.u32 %s54, 1
        %s349 = smul.addr %s348, 256
        %s350 = scalar_lea.vmem [#allocation6], %s349
        %p351 = pneg %p67
        %p352 = pneg %p64
        %p353 = pneg %p88
        %p354 = pneg %p85
        %p355 = pneg %p109
        %p356 = pneg %p106
        %p357 = pneg %p135
        %p358 = pneg %p132
        %s359 = smul.u32 32, %s30
        %p360 = scmp.lt.s32.totalorder %s359, 63
        %s361 = scalar_select %p360, %s359, 63
        %s362 = smul.addr %s361, 8
        %s363 = scalar_lea.vmem %s5, %s362
        %s364 = smul.u32 %s30, 2
        %s365 = sadd.s32 %s364, %s31
        %s366 = sld [smem:[#allocation4 + %s365]]
        %s367 = smul.u32 32, %s30
        %s368 = smul.u32 2, %s366
        %s369 = smul.u32 32, %s30
        %p370 = scmp.lt.s32.totalorder %s369, 63
        %s371 = scalar_select %p370, %s369, 63
        %s372 = smul.addr %s371, 8
        %s373 = scalar_lea.vmem %s5, %s372
        %s374 = smul.u32 32, %s30
        %p376 = scmp.eq.s32.totalorder %s31, 0
        // Predicated region
        $region71: #{gcn_forward.5} parent=65 // pred_check
          %p377 = pneg %p376
        $region72: #{gcn_forward.5} parent=65 // pred_check_branch
          %379 = sbr.rel (%p377) target = $region74
        $region73: #{gcn_forward.5} parent=65 // pred_region
          %vm380 = vcmask 64512
          %381 = vst.msk [vmem:[#allocation2] sm:$0xff] %vm380, 0.0
          %382 = vst.msk [vmem:[#allocation2 + $0x8] sm:$0xff] %vm380, 0.0
          %383 = vst.msk [vmem:[#allocation2 + $0x10] sm:$0xff] %vm380, 0.0
          %384 = vst.msk [vmem:[#allocation2 + $0x18] sm:$0xff] %vm380, 0.0
          %385 = vst.msk [vmem:[#allocation2 + $0x20] sm:$0xff] %vm380, 0.0
          %386 = vst.msk [vmem:[#allocation2 + $0x28] sm:$0xff] %vm380, 0.0
          %387 = vst.msk [vmem:[#allocation2 + $0x30] sm:$0xff] %vm380, 0.0
          %388 = vst.msk [vmem:[#allocation2 + $0x38] sm:$0xff] %vm380, 0.0
          %389 = vst.msk [vmem:[#allocation2 + $0x40] sm:$0xff] %vm380, 0.0
          %390 = vst.msk [vmem:[#allocation2 + $0x48] sm:$0xff] %vm380, 0.0
          %391 = vst.msk [vmem:[#allocation2 + $0x50] sm:$0xff] %vm380, 0.0
          %392 = vst.msk [vmem:[#allocation2 + $0x58] sm:$0xff] %vm380, 0.0
          %393 = vst.msk [vmem:[#allocation2 + $0x60] sm:$0xff] %vm380, 0.0
          %394 = vst.msk [vmem:[#allocation2 + $0x68] sm:$0xff] %vm380, 0.0
          %395 = vst.msk [vmem:[#allocation2 + $0x70] sm:$0xff] %vm380, 0.0
          %396 = vst.msk [vmem:[#allocation2 + $0x78] sm:$0xff] %vm380, 0.0
          %397 = vst.msk [vmem:[#allocation2 + $0x80] sm:$0xff] %vm380, 0.0
          %398 = vst.msk [vmem:[#allocation2 + $0x88] sm:$0xff] %vm380, 0.0
          %399 = vst.msk [vmem:[#allocation2 + $0x90] sm:$0xff] %vm380, 0.0
          %400 = vst.msk [vmem:[#allocation2 + $0x98] sm:$0xff] %vm380, 0.0
          %401 = vst.msk [vmem:[#allocation2 + $0xa0] sm:$0xff] %vm380, 0.0
          %402 = vst.msk [vmem:[#allocation2 + $0xa8] sm:$0xff] %vm380, 0.0
          %403 = vst.msk [vmem:[#allocation2 + $0xb0] sm:$0xff] %vm380, 0.0
          %404 = vst.msk [vmem:[#allocation2 + $0xb8] sm:$0xff] %vm380, 0.0
          %405 = vst.msk [vmem:[#allocation2 + $0xc0] sm:$0xff] %vm380, 0.0
          %406 = vst.msk [vmem:[#allocation2 + $0xc8] sm:$0xff] %vm380, 0.0
          %407 = vst.msk [vmem:[#allocation2 + $0xd0] sm:$0xff] %vm380, 0.0
          %408 = vst.msk [vmem:[#allocation2 + $0xd8] sm:$0xff] %vm380, 0.0
          %409 = vst.msk [vmem:[#allocation2 + $0xe0] sm:$0xff] %vm380, 0.0
          %410 = vst.msk [vmem:[#allocation2 + $0xe8] sm:$0xff] %vm380, 0.0
          %411 = vst.msk [vmem:[#allocation2 + $0xf0] sm:$0xff] %vm380, 0.0
          %412 = vst.msk [vmem:[#allocation2 + $0xf8] sm:$0xff] %vm380, 0.0
        $region74: #{gcn_forward.5} parent=65 // pred_fallthru
          _
        %s413 = sld [smem:[#allocation5 + %s30]]
        %p414 = scmp.lt.s32.totalorder %s31, %s413
        // Predicated region
        $region75: #{gcn_forward.5} parent=65 // pred_check
          %p415 = pneg %p414
        $region76: #{gcn_forward.5} parent=65 // pred_check_branch
          %417 = sbr.rel (%p415) target = $region78
        $region77: #{gcn_forward.5} parent=65 // pred_region
          %s418 = smul.u32 %s30, 2
          %s419 = sadd.s32 %s418, %s31
          %s420 = sld [smem:[#allocation4 + %s419]]
          %s421 = smul.u32 %s420, 256
          %s422 = sshra.s32 %s421, 3
          %s423 = sand.u32 %s421, 7
          %s424 = smul.addr %s422, 4
          %s425 = scalar_lea.vmem %s3, %s424
          %v426 = vld [vmem:[%s425] sm:$0xf]
          %v427 = vld [vmem:[%s425 + $0x4] sm:$0xf]
          %v428 = vld [vmem:[%s425 + $0x8] sm:$0xf]
          %v429 = vld [vmem:[%s425 + $0xc] sm:$0xf]
          %v430 = vld [vmem:[%s425 + $0x10] sm:$0xf]
          %v431 = vld [vmem:[%s425 + $0x14] sm:$0xf]
          %v432 = vld [vmem:[%s425 + $0x18] sm:$0xf]
          %v433 = vld [vmem:[%s425 + $0x1c] sm:$0xf]
          %v434 = vld [vmem:[%s425 + $0x20] sm:$0xf]
          %v435 = vld [vmem:[%s425 + $0x24] sm:$0xf]
          %v436 = vld [vmem:[%s425 + $0x28] sm:$0xf]
          %v437 = vld [vmem:[%s425 + $0x2c] sm:$0xf]
          %v438 = vld [vmem:[%s425 + $0x30] sm:$0xf]
          %v439 = vld [vmem:[%s425 + $0x34] sm:$0xf]
          %v440 = vld [vmem:[%s425 + $0x38] sm:$0xf]
          %v441 = vld [vmem:[%s425 + $0x3c] sm:$0xf]
          %v442 = vld [vmem:[%s425 + $0x40] sm:$0xf]
          %v443 = vld [vmem:[%s425 + $0x44] sm:$0xf]
          %v444 = vld [vmem:[%s425 + $0x48] sm:$0xf]
          %v445 = vld [vmem:[%s425 + $0x4c] sm:$0xf]
          %v446 = vld [vmem:[%s425 + $0x50] sm:$0xf]
          %v447 = vld [vmem:[%s425 + $0x54] sm:$0xf]
          %v448 = vld [vmem:[%s425 + $0x58] sm:$0xf]
          %v449 = vld [vmem:[%s425 + $0x5c] sm:$0xf]
          %v450 = vld [vmem:[%s425 + $0x60] sm:$0xf]
          %v451 = vld [vmem:[%s425 + $0x64] sm:$0xf]
          %v452 = vld [vmem:[%s425 + $0x68] sm:$0xf]
          %v453 = vld [vmem:[%s425 + $0x6c] sm:$0xf]
          %v454 = vld [vmem:[%s425 + $0x70] sm:$0xf]
          %v455 = vld [vmem:[%s425 + $0x74] sm:$0xf]
          %v456 = vld [vmem:[%s425 + $0x78] sm:$0xf]
          %v457 = vld [vmem:[%s425 + $0x7c] sm:$0xf]
          %v458 = vld [vmem:[#allocation2] sm:$0xff]
          %v459 = vld [vmem:[#allocation2 + $0x8] sm:$0xff]
          %v460 = vld [vmem:[#allocation2 + $0x10] sm:$0xff]
          %v461 = vld [vmem:[#allocation2 + $0x18] sm:$0xff]
          %v462 = vld [vmem:[#allocation2 + $0x20] sm:$0xff]
          %v463 = vld [vmem:[#allocation2 + $0x28] sm:$0xff]
          %v464 = vld [vmem:[#allocation2 + $0x30] sm:$0xff]
          %v465 = vld [vmem:[#allocation2 + $0x38] sm:$0xff]
          %v466 = vld [vmem:[#allocation2 + $0x40] sm:$0xff]
          %v467 = vld [vmem:[#allocation2 + $0x48] sm:$0xff]
          %v468 = vld [vmem:[#allocation2 + $0x50] sm:$0xff]
          %v469 = vld [vmem:[#allocation2 + $0x58] sm:$0xff]
          %v470 = vld [vmem:[#allocation2 + $0x60] sm:$0xff]
          %v471 = vld [vmem:[#allocation2 + $0x68] sm:$0xff]
          %v472 = vld [vmem:[#allocation2 + $0x70] sm:$0xff]
          %v473 = vld [vmem:[#allocation2 + $0x78] sm:$0xff]
          %v474 = vld [vmem:[#allocation2 + $0x80] sm:$0xff]
          %v475 = vld [vmem:[#allocation2 + $0x88] sm:$0xff]
          %v476 = vld [vmem:[#allocation2 + $0x90] sm:$0xff]
          %v477 = vld [vmem:[#allocation2 + $0x98] sm:$0xff]
          %v478 = vld [vmem:[#allocation2 + $0xa0] sm:$0xff]
          %v479 = vld [vmem:[#allocation2 + $0xa8] sm:$0xff]
          %v480 = vld [vmem:[#allocation2 + $0xb0] sm:$0xff]
          %v481 = vld [vmem:[#allocation2 + $0xb8] sm:$0xff]
          %v482 = vld [vmem:[#allocation2 + $0xc0] sm:$0xff]
          %v483 = vld [vmem:[#allocation2 + $0xc8] sm:$0xff]
          %v484 = vld [vmem:[#allocation2 + $0xd0] sm:$0xff]
          %v485 = vld [vmem:[#allocation2 + $0xd8] sm:$0xff]
          %v486 = vld [vmem:[#allocation2 + $0xe0] sm:$0xff]
          %v487 = vld [vmem:[#allocation2 + $0xe8] sm:$0xff]
          %v488 = vld [vmem:[#allocation2 + $0xf0] sm:$0xff]
          %v489 = vld [vmem:[#allocation2 + $0xf8] sm:$0xff]
          %v490 = vld [vmem:[%s343] sm:$0xff]
          %v491 = vld [vmem:[%s343 + $0x8] sm:$0xff]
          %v492 = vld [vmem:[%s343 + $0x10] sm:$0xff]
          %v493 = vld [vmem:[%s343 + $0x18] sm:$0xff]
          %v494 = vld [vmem:[%s343 + $0x20] sm:$0xff]
          %v495 = vld [vmem:[%s343 + $0x28] sm:$0xff]
          %v496 = vld [vmem:[%s343 + $0x30] sm:$0xff]
          %v497 = vld [vmem:[%s343 + $0x38] sm:$0xff]
          %v498 = vld [vmem:[%s343 + $0x40] sm:$0xff]
          %v499 = vld [vmem:[%s343 + $0x48] sm:$0xff]
          %v500 = vld [vmem:[%s343 + $0x50] sm:$0xff]
          %v501 = vld [vmem:[%s343 + $0x58] sm:$0xff]
          %v502 = vld [vmem:[%s343 + $0x60] sm:$0xff]
          %v503 = vld [vmem:[%s343 + $0x68] sm:$0xff]
          %v504 = vld [vmem:[%s343 + $0x70] sm:$0xff]
          %v505 = vld [vmem:[%s343 + $0x78] sm:$0xff]
          %v506 = vld [vmem:[%s343 + $0x80] sm:$0xff]
          %v507 = vld [vmem:[%s343 + $0x88] sm:$0xff]
          %v508 = vld [vmem:[%s343 + $0x90] sm:$0xff]
          %v509 = vld [vmem:[%s343 + $0x98] sm:$0xff]
          %v510 = vld [vmem:[%s343 + $0xa0] sm:$0xff]
          %v511 = vld [vmem:[%s343 + $0xa8] sm:$0xff]
          %v512 = vld [vmem:[%s343 + $0xb0] sm:$0xff]
          %v513 = vld [vmem:[%s343 + $0xb8] sm:$0xff]
          %v514 = vld [vmem:[%s343 + $0xc0] sm:$0xff]
          %v515 = vld [vmem:[%s343 + $0xc8] sm:$0xff]
          %v516 = vld [vmem:[%s343 + $0xd0] sm:$0xff]
          %v517 = vld [vmem:[%s343 + $0xd8] sm:$0xff]
          %v518 = vld [vmem:[%s343 + $0xe0] sm:$0xff]
          %v519 = vld [vmem:[%s343 + $0xe8] sm:$0xff]
          %v520 = vld [vmem:[%s343 + $0xf0] sm:$0xff]
          %v521 = vld [vmem:[%s343 + $0xf8] sm:$0xff]
          %v554 = vunpack.c.l.b16 %v490
          %v555 = vunpack.c.h.b16 %v490
          %v556 = vunpack.c.l.b16 %v491
          %v557 = vunpack.c.h.b16 %v491
          %v558 = vunpack.c.l.b16 %v492
          %v559 = vunpack.c.h.b16 %v492
          %v560 = vunpack.c.l.b16 %v493
          %v561 = vunpack.c.h.b16 %v493
          %v562 = vunpack.c.l.b16 %v494
          %v563 = vunpack.c.h.b16 %v494
          %v564 = vunpack.c.l.b16 %v495
          %v565 = vunpack.c.h.b16 %v495
          %v566 = vunpack.c.l.b16 %v496
          %v567 = vunpack.c.h.b16 %v496
          %v568 = vunpack.c.l.b16 %v497
          %v569 = vunpack.c.h.b16 %v497
          %v570 = vunpack.c.l.b16 %v498
          %v571 = vunpack.c.h.b16 %v498
          %v572 = vunpack.c.l.b16 %v499
          %v573 = vunpack.c.h.b16 %v499
          %v574 = vunpack.c.l.b16 %v500
          %v575 = vunpack.c.h.b16 %v500
          %v576 = vunpack.c.l.b16 %v501
          %v577 = vunpack.c.h.b16 %v501
          %v578 = vunpack.c.l.b16 %v502
          %v579 = vunpack.c.h.b16 %v502
          %v580 = vunpack.c.l.b16 %v503
          %v581 = vunpack.c.h.b16 %v503
          %v582 = vunpack.c.l.b16 %v504
          %v583 = vunpack.c.h.b16 %v504
          %v584 = vunpack.c.l.b16 %v505
          %v585 = vunpack.c.h.b16 %v505
          %v586 = vunpack.c.l.b16 %v506
          %v587 = vunpack.c.h.b16 %v506
          %v588 = vunpack.c.l.b16 %v507
          %v589 = vunpack.c.h.b16 %v507
          %v590 = vunpack.c.l.b16 %v508
          %v591 = vunpack.c.h.b16 %v508
          %v592 = vunpack.c.l.b16 %v509
          %v593 = vunpack.c.h.b16 %v509
          %v594 = vunpack.c.l.b16 %v510
          %v595 = vunpack.c.h.b16 %v510
          %v596 = vunpack.c.l.b16 %v511
          %v597 = vunpack.c.h.b16 %v511
          %v598 = vunpack.c.l.b16 %v512
          %v599 = vunpack.c.h.b16 %v512
          %v600 = vunpack.c.l.b16 %v513
          %v601 = vunpack.c.h.b16 %v513
          %v602 = vunpack.c.l.b16 %v514
          %v603 = vunpack.c.h.b16 %v514
          %v604 = vunpack.c.l.b16 %v515
          %v605 = vunpack.c.h.b16 %v515
          %v606 = vunpack.c.l.b16 %v516
          %v607 = vunpack.c.h.b16 %v516
          %v608 = vunpack.c.l.b16 %v517
          %v609 = vunpack.c.h.b16 %v517
          %v610 = vunpack.c.l.b16 %v518
          %v611 = vunpack.c.h.b16 %v518
          %v612 = vunpack.c.l.b16 %v519
          %v613 = vunpack.c.h.b16 %v519
          %v614 = vunpack.c.l.b16 %v520
          %v615 = vunpack.c.h.b16 %v520
          %v616 = vunpack.c.l.b16 %v521
          %v617 = vunpack.c.h.b16 %v521
          %v618 = vpack.c.b16 %v556, %v554
          %v619 = vpack.c.b16 %v557, %v555
          %v620 = vpack.c.b16 %v560, %v558
          %v621 = vpack.c.b16 %v561, %v559
          %v622 = vpack.c.b16 %v564, %v562
          %v623 = vpack.c.b16 %v565, %v563
          %v624 = vpack.c.b16 %v568, %v566
          %v625 = vpack.c.b16 %v569, %v567
          %v626 = vpack.c.b16 %v572, %v570
          %v627 = vpack.c.b16 %v573, %v571
          %v628 = vpack.c.b16 %v576, %v574
          %v629 = vpack.c.b16 %v577, %v575
          %v630 = vpack.c.b16 %v580, %v578
          %v631 = vpack.c.b16 %v581, %v579
          %v632 = vpack.c.b16 %v584, %v582
          %v633 = vpack.c.b16 %v585, %v583
          %v634 = vpack.c.b16 %v588, %v586
          %v635 = vpack.c.b16 %v589, %v587
          %v636 = vpack.c.b16 %v592, %v590
          %v637 = vpack.c.b16 %v593, %v591
          %v638 = vpack.c.b16 %v596, %v594
          %v639 = vpack.c.b16 %v597, %v595
          %v640 = vpack.c.b16 %v600, %v598
          %v641 = vpack.c.b16 %v601, %v599
          %v642 = vpack.c.b16 %v604, %v602
          %v643 = vpack.c.b16 %v605, %v603
          %v644 = vpack.c.b16 %v608, %v606
          %v645 = vpack.c.b16 %v609, %v607
          %v646 = vpack.c.b16 %v612, %v610
          %v647 = vpack.c.b16 %v613, %v611
          %v648 = vpack.c.b16 %v616, %v614
          %v649 = vpack.c.b16 %v617, %v615
          %v714 = vunpack.c.l.b16 %v426
          %v715 = vunpack.c.l.b16 %v427
          %v716 = vunpack.c.l.b16 %v428
          %v717 = vunpack.c.l.b16 %v429
          %v718 = vunpack.c.l.b16 %v430
          %v719 = vunpack.c.l.b16 %v431
          %v720 = vunpack.c.l.b16 %v432
          %v721 = vunpack.c.l.b16 %v433
          %v722 = vunpack.c.l.b16 %v434
          %v723 = vunpack.c.l.b16 %v435
          %v724 = vunpack.c.l.b16 %v436
          %v725 = vunpack.c.l.b16 %v437
          %v726 = vunpack.c.l.b16 %v438
          %v727 = vunpack.c.l.b16 %v439
          %v728 = vunpack.c.l.b16 %v440
          %v729 = vunpack.c.l.b16 %v441
          %v730 = vunpack.c.l.b16 %v442
          %v731 = vunpack.c.l.b16 %v443
          %v732 = vunpack.c.l.b16 %v444
          %v733 = vunpack.c.l.b16 %v445
          %v734 = vunpack.c.l.b16 %v446
          %v735 = vunpack.c.l.b16 %v447
          %v736 = vunpack.c.l.b16 %v448
          %v737 = vunpack.c.l.b16 %v449
          %v738 = vunpack.c.l.b16 %v450
          %v739 = vunpack.c.l.b16 %v451
          %v740 = vunpack.c.l.b16 %v452
          %v741 = vunpack.c.l.b16 %v453
          %v742 = vunpack.c.l.b16 %v454
          %v743 = vunpack.c.l.b16 %v455
          %v744 = vunpack.c.l.b16 %v456
          %v745 = vunpack.c.l.b16 %v457
          %v746 = vpack.c.b16 %v715, %v714
          %v747 = vpack.c.b16 %v717, %v716
          %v748 = vpack.c.b16 %v719, %v718
          %v749 = vpack.c.b16 %v721, %v720
          %v750 = vpack.c.b16 %v723, %v722
          %v751 = vpack.c.b16 %v725, %v724
          %v752 = vpack.c.b16 %v727, %v726
          %v753 = vpack.c.b16 %v729, %v728
          %v754 = vpack.c.b16 %v731, %v730
          %v755 = vpack.c.b16 %v733, %v732
          %v756 = vpack.c.b16 %v735, %v734
          %v757 = vpack.c.b16 %v737, %v736
          %v758 = vpack.c.b16 %v739, %v738
          %v759 = vpack.c.b16 %v741, %v740
          %v760 = vpack.c.b16 %v743, %v742
          %v761 = vpack.c.b16 %v745, %v744
          %778 = vmatprep.subr.bf16.mxu0 0
          %779 = vmatpush1.bf16.msra.mxu0 %v753
          %780 = vmatprep.subr.bf16.mxu0 0
          %781 = vmatpush1.bf16.msra.mxu0 %v752
          %782 = vmatprep.subr.bf16.mxu0 0
          %783 = vmatpush1.bf16.msra.mxu0 %v751
          %784 = vmatprep.subr.bf16.mxu0 0
          %785 = vmatpush1.bf16.msra.mxu0 %v750
          %786 = vmatprep.subr.bf16.mxu0 0
          %787 = vmatpush1.bf16.msra.mxu0 %v749
          %788 = vmatprep.subr.bf16.mxu0 0
          %789 = vmatpush1.bf16.msra.mxu0 %v748
          %790 = vmatprep.subr.bf16.mxu0 0
          %791 = vmatpush1.bf16.msra.mxu0 %v747
          %792 = vmatprep.subr.bf16.mxu0 0
          %793 = vmatpush1.bf16.msra.mxu0 %v746
          %794 = vmatprep.subr.bf16.mxu0 0
          %795 = vmatpush2.bf16.msra.mxu0 %v761
          %796 = vmatprep.subr.bf16.mxu0 0
          %797 = vmatpush2.bf16.msra.mxu0 %v760
          %798 = vmatprep.subr.bf16.mxu0 0
          %799 = vmatpush2.bf16.msra.mxu0 %v759
          %800 = vmatprep.subr.bf16.mxu0 0
          %801 = vmatpush2.bf16.msra.mxu0 %v758
          %802 = vmatprep.subr.bf16.mxu0 0
          %803 = vmatpush2.bf16.msra.mxu0 %v757
          %804 = vmatprep.subr.bf16.mxu0 0
          %805 = vmatpush2.bf16.msra.mxu0 %v756
          %806 = vmatprep.subr.bf16.mxu0 0
          %807 = vmatpush2.bf16.msra.mxu0 %v755
          %808 = vmatprep.subr.bf16.mxu0 0
          %809 = vmatpush2.bf16.msra.mxu0 %v754
          %810 = vmatprep.mubr.bf16.mxu0 %v619
          %811 = vmatmul.mubr.bf16.gmra.mxu0 %v618
          %v812 = vpop.f32.mrf.mxu0
          %v813 = vadd.f32 0.0, %v812
          %v814 = vpop.f32.mrf.mxu0
          %v815 = vpop.f32.mrf.mxu0
          %v816 = vadd.f32 0.0, %v815
          %v817 = vpop.f32.mrf.mxu0
          %818 = vmatprep.mubr.bf16.mxu0 %v621
          %819 = vmatmul.mubr.bf16.gmra.mxu0 %v620
          %v820 = vpop.f32.mrf.mxu0
          %v821 = vadd.f32 0.0, %v820
          %v822 = vpop.f32.mrf.mxu0
          %v823 = vpop.f32.mrf.mxu0
          %v824 = vadd.f32 0.0, %v823
          %v825 = vpop.f32.mrf.mxu0
          %826 = vmatprep.mubr.bf16.mxu0 %v623
          %827 = vmatmul.mubr.bf16.gmra.mxu0 %v622
          %v828 = vpop.f32.mrf.mxu0
          %v829 = vadd.f32 0.0, %v828
          %v830 = vpop.f32.mrf.mxu0
          %v831 = vpop.f32.mrf.mxu0
          %v832 = vadd.f32 0.0, %v831
          %v833 = vpop.f32.mrf.mxu0
          %834 = vmatprep.mubr.bf16.mxu0 %v625
          %835 = vmatmul.mubr.bf16.gmra.mxu0 %v624
          %v836 = vpop.f32.mrf.mxu0
          %v837 = vadd.f32 0.0, %v836
          %v838 = vpop.f32.mrf.mxu0
          %v839 = vpop.f32.mrf.mxu0
          %v840 = vadd.f32 0.0, %v839
          %v841 = vpop.f32.mrf.mxu0
          %842 = vmatprep.mubr.bf16.mxu0 %v627
          %843 = vmatmul.mubr.bf16.gmra.mxu0 %v626
          %v844 = vpop.f32.mrf.mxu0
          %v845 = vadd.f32 0.0, %v844
          %v846 = vpop.f32.mrf.mxu0
          %v847 = vpop.f32.mrf.mxu0
          %v848 = vadd.f32 0.0, %v847
          %v849 = vpop.f32.mrf.mxu0
          %850 = vmatprep.mubr.bf16.mxu0 %v629
          %851 = vmatmul.mubr.bf16.gmra.mxu0 %v628
          %v852 = vpop.f32.mrf.mxu0
          %v853 = vadd.f32 0.0, %v852
          %v854 = vpop.f32.mrf.mxu0
          %v855 = vpop.f32.mrf.mxu0
          %v856 = vadd.f32 0.0, %v855
          %v857 = vpop.f32.mrf.mxu0
          %858 = vmatprep.mubr.bf16.mxu0 %v631
          %859 = vmatmul.mubr.bf16.gmra.mxu0 %v630
          %v860 = vpop.f32.mrf.mxu0
          %v861 = vadd.f32 0.0, %v860
          %v862 = vpop.f32.mrf.mxu0
          %v863 = vpop.f32.mrf.mxu0
          %v864 = vadd.f32 0.0, %v863
          %v865 = vpop.f32.mrf.mxu0
          %866 = vmatprep.mubr.bf16.mxu0 %v633
          %867 = vmatmul.mubr.bf16.gmra.mxu0 %v632
          %v868 = vpop.f32.mrf.mxu0
          %v869 = vadd.f32 0.0, %v868
          %v870 = vpop.f32.mrf.mxu0
          %v871 = vpop.f32.mrf.mxu0
          %v872 = vadd.f32 0.0, %v871
          %v873 = vpop.f32.mrf.mxu0
          %874 = vmatprep.mubr.bf16.mxu0 %v635
          %875 = vmatmul.mubr.bf16.gmra.mxu0 %v634
          %v876 = vpop.f32.mrf.mxu0
          %v877 = vadd.f32 0.0, %v876
          %v878 = vpop.f32.mrf.mxu0
          %v879 = vpop.f32.mrf.mxu0
          %v880 = vadd.f32 0.0, %v879
          %v881 = vpop.f32.mrf.mxu0
          %882 = vmatprep.mubr.bf16.mxu0 %v637
          %883 = vmatmul.mubr.bf16.gmra.mxu0 %v636
          %v884 = vpop.f32.mrf.mxu0
          %v885 = vadd.f32 0.0, %v884
          %v886 = vpop.f32.mrf.mxu0
          %v887 = vpop.f32.mrf.mxu0
          %v888 = vadd.f32 0.0, %v887
          %v889 = vpop.f32.mrf.mxu0
          %890 = vmatprep.mubr.bf16.mxu0 %v639
          %891 = vmatmul.mubr.bf16.gmra.mxu0 %v638
          %v892 = vpop.f32.mrf.mxu0
          %v893 = vadd.f32 0.0, %v892
          %v894 = vpop.f32.mrf.mxu0
          %v895 = vpop.f32.mrf.mxu0
          %v896 = vadd.f32 0.0, %v895
          %v897 = vpop.f32.mrf.mxu0
          %898 = vmatprep.mubr.bf16.mxu0 %v641
          %899 = vmatmul.mubr.bf16.gmra.mxu0 %v640
          %v900 = vpop.f32.mrf.mxu0
          %v901 = vadd.f32 0.0, %v900
          %v902 = vpop.f32.mrf.mxu0
          %v903 = vpop.f32.mrf.mxu0
          %v904 = vadd.f32 0.0, %v903
          %v905 = vpop.f32.mrf.mxu0
          %906 = vmatprep.mubr.bf16.mxu0 %v643
          %907 = vmatmul.mubr.bf16.gmra.mxu0 %v642
          %v908 = vpop.f32.mrf.mxu0
          %v909 = vadd.f32 0.0, %v908
          %v910 = vpop.f32.mrf.mxu0
          %v911 = vpop.f32.mrf.mxu0
          %v912 = vadd.f32 0.0, %v911
          %v913 = vpop.f32.mrf.mxu0
          %914 = vmatprep.mubr.bf16.mxu0 %v645
          %915 = vmatmul.mubr.bf16.gmra.mxu0 %v644
          %v916 = vpop.f32.mrf.mxu0
          %v917 = vadd.f32 0.0, %v916
          %v918 = vpop.f32.mrf.mxu0
          %v919 = vpop.f32.mrf.mxu0
          %v920 = vadd.f32 0.0, %v919
          %v921 = vpop.f32.mrf.mxu0
          %922 = vmatprep.mubr.bf16.mxu0 %v647
          %923 = vmatmul.mubr.bf16.gmra.mxu0 %v646
          %v924 = vpop.f32.mrf.mxu0
          %v925 = vadd.f32 0.0, %v924
          %v926 = vpop.f32.mrf.mxu0
          %v927 = vpop.f32.mrf.mxu0
          %v928 = vadd.f32 0.0, %v927
          %v929 = vpop.f32.mrf.mxu0
          %930 = vmatprep.mubr.bf16.mxu0 %v649
          %931 = vmatmul.mubr.bf16.gmra.mxu0 %v648
          %v932 = vpop.f32.mrf.mxu0
          %v933 = vadd.f32 0.0, %v932
          %v934 = vpop.f32.mrf.mxu0
          %v935 = vpop.f32.mrf.mxu0
          %v936 = vadd.f32 0.0, %v935
          %v937 = vpop.f32.mrf.mxu0
          %938 = vdwg.mxu0
          %v939 = vadd.f32 %v458, %v813
          %v940 = vadd.f32 %v459, %v816
          %v941 = vadd.f32 %v460, %v821
          %v942 = vadd.f32 %v461, %v824
          %v943 = vadd.f32 %v462, %v829
          %v944 = vadd.f32 %v463, %v832
          %v945 = vadd.f32 %v464, %v837
          %v946 = vadd.f32 %v465, %v840
          %v947 = vadd.f32 %v466, %v845
          %v948 = vadd.f32 %v467, %v848
          %v949 = vadd.f32 %v468, %v853
          %v950 = vadd.f32 %v469, %v856
          %v951 = vadd.f32 %v470, %v861
          %v952 = vadd.f32 %v471, %v864
          %v953 = vadd.f32 %v472, %v869
          %v954 = vadd.f32 %v473, %v872
          %v955 = vadd.f32 %v474, %v877
          %v956 = vadd.f32 %v475, %v880
          %v957 = vadd.f32 %v476, %v885
          %v958 = vadd.f32 %v477, %v888
          %v959 = vadd.f32 %v478, %v893
          %v960 = vadd.f32 %v479, %v896
          %v961 = vadd.f32 %v480, %v901
          %v962 = vadd.f32 %v481, %v904
          %v963 = vadd.f32 %v482, %v909
          %v964 = vadd.f32 %v483, %v912
          %v965 = vadd.f32 %v484, %v917
          %v966 = vadd.f32 %v485, %v920
          %v967 = vadd.f32 %v486, %v925
          %v968 = vadd.f32 %v487, %v928
          %v969 = vadd.f32 %v488, %v933
          %v970 = vadd.f32 %v489, %v936
          %vm971 = vcmask 64512
          %972 = vst.msk [vmem:[#allocation2] sm:$0xff] %vm971, %v939
          %973 = vst.msk [vmem:[#allocation2 + $0x8] sm:$0xff] %vm971, %v940
          %974 = vst.msk [vmem:[#allocation2 + $0x10] sm:$0xff] %vm971, %v941
          %975 = vst.msk [vmem:[#allocation2 + $0x18] sm:$0xff] %vm971, %v942
          %976 = vst.msk [vmem:[#allocation2 + $0x20] sm:$0xff] %vm971, %v943
          %977 = vst.msk [vmem:[#allocation2 + $0x28] sm:$0xff] %vm971, %v944
          %978 = vst.msk [vmem:[#allocation2 + $0x30] sm:$0xff] %vm971, %v945
          %979 = vst.msk [vmem:[#allocation2 + $0x38] sm:$0xff] %vm971, %v946
          %980 = vst.msk [vmem:[#allocation2 + $0x40] sm:$0xff] %vm971, %v947
          %981 = vst.msk [vmem:[#allocation2 + $0x48] sm:$0xff] %vm971, %v948
          %982 = vst.msk [vmem:[#allocation2 + $0x50] sm:$0xff] %vm971, %v949
          %983 = vst.msk [vmem:[#allocation2 + $0x58] sm:$0xff] %vm971, %v950
          %984 = vst.msk [vmem:[#allocation2 + $0x60] sm:$0xff] %vm971, %v951
          %985 = vst.msk [vmem:[#allocation2 + $0x68] sm:$0xff] %vm971, %v952
          %986 = vst.msk [vmem:[#allocation2 + $0x70] sm:$0xff] %vm971, %v953
          %987 = vst.msk [vmem:[#allocation2 + $0x78] sm:$0xff] %vm971, %v954
          %988 = vst.msk [vmem:[#allocation2 + $0x80] sm:$0xff] %vm971, %v955
          %989 = vst.msk [vmem:[#allocation2 + $0x88] sm:$0xff] %vm971, %v956
          %990 = vst.msk [vmem:[#allocation2 + $0x90] sm:$0xff] %vm971, %v957
          %991 = vst.msk [vmem:[#allocation2 + $0x98] sm:$0xff] %vm971, %v958
          %992 = vst.msk [vmem:[#allocation2 + $0xa0] sm:$0xff] %vm971, %v959
          %993 = vst.msk [vmem:[#allocation2 + $0xa8] sm:$0xff] %vm971, %v960
          %994 = vst.msk [vmem:[#allocation2 + $0xb0] sm:$0xff] %vm971, %v961
          %995 = vst.msk [vmem:[#allocation2 + $0xb8] sm:$0xff] %vm971, %v962
          %996 = vst.msk [vmem:[#allocation2 + $0xc0] sm:$0xff] %vm971, %v963
          %997 = vst.msk [vmem:[#allocation2 + $0xc8] sm:$0xff] %vm971, %v964
          %998 = vst.msk [vmem:[#allocation2 + $0xd0] sm:$0xff] %vm971, %v965
          %999 = vst.msk [vmem:[#allocation2 + $0xd8] sm:$0xff] %vm971, %v966
          %1000 = vst.msk [vmem:[#allocation2 + $0xe0] sm:$0xff] %vm971, %v967
          %1001 = vst.msk [vmem:[#allocation2 + $0xe8] sm:$0xff] %vm971, %v968
          %1002 = vst.msk [vmem:[#allocation2 + $0xf0] sm:$0xff] %vm971, %v969
          %1003 = vst.msk [vmem:[#allocation2 + $0xf8] sm:$0xff] %vm971, %v970
        $region78: #{gcn_forward.5} parent=65 // pred_fallthru
          _
        %p1004 = scmp.eq.s32.totalorder %s31, 1
        // Predicated region
        $region79: #{gcn_forward.5} parent=65 // pred_check
          %p1005 = pneg %p1004
        $region80: #{gcn_forward.5} parent=65 // pred_check_branch
          %1007 = sbr.rel (%p1005) target = $region82
        $region81: #{gcn_forward.5} parent=65 // pred_region
          %v1008 = vld [vmem:[#allocation2] sm:$0xff]
          %v1009 = vld [vmem:[#allocation2 + $0x8] sm:$0xff]
          %v1010 = vld [vmem:[#allocation2 + $0x10] sm:$0xff]
          %v1011 = vld [vmem:[#allocation2 + $0x18] sm:$0xff]
          %v1012 = vld [vmem:[#allocation2 + $0x20] sm:$0xff]
          %v1013 = vld [vmem:[#allocation2 + $0x28] sm:$0xff]
          %v1014 = vld [vmem:[#allocation2 + $0x30] sm:$0xff]
          %v1015 = vld [vmem:[#allocation2 + $0x38] sm:$0xff]
          %v1016 = vld [vmem:[#allocation2 + $0x40] sm:$0xff]
          %v1017 = vld [vmem:[#allocation2 + $0x48] sm:$0xff]
          %v1018 = vld [vmem:[#allocation2 + $0x50] sm:$0xff]
          %v1019 = vld [vmem:[#allocation2 + $0x58] sm:$0xff]
          %v1020 = vld [vmem:[#allocation2 + $0x60] sm:$0xff]
          %v1021 = vld [vmem:[#allocation2 + $0x68] sm:$0xff]
          %v1022 = vld [vmem:[#allocation2 + $0x70] sm:$0xff]
          %v1023 = vld [vmem:[#allocation2 + $0x78] sm:$0xff]
          %v1024 = vld [vmem:[#allocation2 + $0x80] sm:$0xff]
          %v1025 = vld [vmem:[#allocation2 + $0x88] sm:$0xff]
          %v1026 = vld [vmem:[#allocation2 + $0x90] sm:$0xff]
          %v1027 = vld [vmem:[#allocation2 + $0x98] sm:$0xff]
          %v1028 = vld [vmem:[#allocation2 + $0xa0] sm:$0xff]
          %v1029 = vld [vmem:[#allocation2 + $0xa8] sm:$0xff]
          %v1030 = vld [vmem:[#allocation2 + $0xb0] sm:$0xff]
          %v1031 = vld [vmem:[#allocation2 + $0xb8] sm:$0xff]
          %v1032 = vld [vmem:[#allocation2 + $0xc0] sm:$0xff]
          %v1033 = vld [vmem:[#allocation2 + $0xc8] sm:$0xff]
          %v1034 = vld [vmem:[#allocation2 + $0xd0] sm:$0xff]
          %v1035 = vld [vmem:[#allocation2 + $0xd8] sm:$0xff]
          %v1036 = vld [vmem:[#allocation2 + $0xe0] sm:$0xff]
          %v1037 = vld [vmem:[#allocation2 + $0xe8] sm:$0xff]
          %v1038 = vld [vmem:[#allocation2 + $0xf0] sm:$0xff]
          %v1039 = vld [vmem:[#allocation2 + $0xf8] sm:$0xff]
          %v1040 = vld [vmem:[%s4] sm:$0x1]
          %v1042 = vlaneseq
          %v1043 = vshrl.u32 %v1042, 7
          %v1044 = vsub.s32 0, %v1043
          %v1045 = vrot.slane %v1040, %v1044
          %v1047 = vadd.f32 %v1008, %v1045
          %v1048 = vadd.f32 %v1009, %v1045
          %v1049 = vadd.f32 %v1010, %v1045
          %v1050 = vadd.f32 %v1011, %v1045
          %v1051 = vadd.f32 %v1012, %v1045
          %v1052 = vadd.f32 %v1013, %v1045
          %v1053 = vadd.f32 %v1014, %v1045
          %v1054 = vadd.f32 %v1015, %v1045
          %v1055 = vadd.f32 %v1016, %v1045
          %v1056 = vadd.f32 %v1017, %v1045
          %v1057 = vadd.f32 %v1018, %v1045
          %v1058 = vadd.f32 %v1019, %v1045
          %v1059 = vadd.f32 %v1020, %v1045
          %v1060 = vadd.f32 %v1021, %v1045
          %v1061 = vadd.f32 %v1022, %v1045
          %v1062 = vadd.f32 %v1023, %v1045
          %v1063 = vadd.f32 %v1024, %v1045
          %v1064 = vadd.f32 %v1025, %v1045
          %v1065 = vadd.f32 %v1026, %v1045
          %v1066 = vadd.f32 %v1027, %v1045
          %v1067 = vadd.f32 %v1028, %v1045
          %v1068 = vadd.f32 %v1029, %v1045
          %v1069 = vadd.f32 %v1030, %v1045
          %v1070 = vadd.f32 %v1031, %v1045
          %v1071 = vadd.f32 %v1032, %v1045
          %v1072 = vadd.f32 %v1033, %v1045
          %v1073 = vadd.f32 %v1034, %v1045
          %v1074 = vadd.f32 %v1035, %v1045
          %v1075 = vadd.f32 %v1036, %v1045
          %v1076 = vadd.f32 %v1037, %v1045
          %v1077 = vadd.f32 %v1038, %v1045
          %v1078 = vadd.f32 %v1039, %v1045
          %vm1079 = vcmask 64512
          %v1080 = vsel %vm1079, %v1047, -inf
          %1081 = vmax.xlane.f32.xlu0 %v1080
          %v1082 = vpop.xlane.xlu0 %1081
          %v1083 = vsel %vm1079, %v1048, -inf
          %1084 = vmax.xlane.f32.xlu0 %v1083
          %v1085 = vpop.xlane.xlu0 %1084
          %v1086 = vsel %vm1079, %v1049, -inf
          %1087 = vmax.xlane.f32.xlu0 %v1086
          %v1088 = vpop.xlane.xlu0 %1087
          %v1089 = vsel %vm1079, %v1050, -inf
          %1090 = vmax.xlane.f32.xlu0 %v1089
          %v1091 = vpop.xlane.xlu0 %1090
          %v1092 = vsel %vm1079, %v1051, -inf
          %1093 = vmax.xlane.f32.xlu0 %v1092
          %v1094 = vpop.xlane.xlu0 %1093
          %v1095 = vsel %vm1079, %v1052, -inf
          %1096 = vmax.xlane.f32.xlu0 %v1095
          %v1097 = vpop.xlane.xlu0 %1096
          %v1098 = vsel %vm1079, %v1053, -inf
          %1099 = vmax.xlane.f32.xlu0 %v1098
          %v1100 = vpop.xlane.xlu0 %1099
          %v1101 = vsel %vm1079, %v1054, -inf
          %1102 = vmax.xlane.f32.xlu0 %v1101
          %v1103 = vpop.xlane.xlu0 %1102
          %v1104 = vsel %vm1079, %v1055, -inf
          %1105 = vmax.xlane.f32.xlu0 %v1104
          %v1106 = vpop.xlane.xlu0 %1105
          %v1107 = vsel %vm1079, %v1056, -inf
          %1108 = vmax.xlane.f32.xlu0 %v1107
          %v1109 = vpop.xlane.xlu0 %1108
          %v1110 = vsel %vm1079, %v1057, -inf
          %1111 = vmax.xlane.f32.xlu0 %v1110
          %v1112 = vpop.xlane.xlu0 %1111
          %v1113 = vsel %vm1079, %v1058, -inf
          %1114 = vmax.xlane.f32.xlu0 %v1113
          %v1115 = vpop.xlane.xlu0 %1114
          %v1116 = vsel %vm1079, %v1059, -inf
          %1117 = vmax.xlane.f32.xlu0 %v1116
          %v1118 = vpop.xlane.xlu0 %1117
          %v1119 = vsel %vm1079, %v1060, -inf
          %1120 = vmax.xlane.f32.xlu0 %v1119
          %v1121 = vpop.xlane.xlu0 %1120
          %v1122 = vsel %vm1079, %v1061, -inf
          %1123 = vmax.xlane.f32.xlu0 %v1122
          %v1124 = vpop.xlane.xlu0 %1123
          %v1125 = vsel %vm1079, %v1062, -inf
          %1126 = vmax.xlane.f32.xlu0 %v1125
          %v1127 = vpop.xlane.xlu0 %1126
          %v1128 = vsel %vm1079, %v1063, -inf
          %1129 = vmax.xlane.f32.xlu0 %v1128
          %v1130 = vpop.xlane.xlu0 %1129
          %v1131 = vsel %vm1079, %v1064, -inf
          %1132 = vmax.xlane.f32.xlu0 %v1131
          %v1133 = vpop.xlane.xlu0 %1132
          %v1134 = vsel %vm1079, %v1065, -inf
          %1135 = vmax.xlane.f32.xlu0 %v1134
          %v1136 = vpop.xlane.xlu0 %1135
          %v1137 = vsel %vm1079, %v1066, -inf
          %1138 = vmax.xlane.f32.xlu0 %v1137
          %v1139 = vpop.xlane.xlu0 %1138
          %v1140 = vsel %vm1079, %v1067, -inf
          %1141 = vmax.xlane.f32.xlu0 %v1140
          %v1142 = vpop.xlane.xlu0 %1141
          %v1143 = vsel %vm1079, %v1068, -inf
          %1144 = vmax.xlane.f32.xlu0 %v1143
          %v1145 = vpop.xlane.xlu0 %1144
          %v1146 = vsel %vm1079, %v1069, -inf
          %1147 = vmax.xlane.f32.xlu0 %v1146
          %v1148 = vpop.xlane.xlu0 %1147
          %v1149 = vsel %vm1079, %v1070, -inf
          %1150 = vmax.xlane.f32.xlu0 %v1149
          %v1151 = vpop.xlane.xlu0 %1150
          %v1152 = vsel %vm1079, %v1071, -inf
          %1153 = vmax.xlane.f32.xlu0 %v1152
          %v1154 = vpop.xlane.xlu0 %1153
          %v1155 = vsel %vm1079, %v1072, -inf
          %1156 = vmax.xlane.f32.xlu0 %v1155
          %v1157 = vpop.xlane.xlu0 %1156
          %v1158 = vsel %vm1079, %v1073, -inf
          %1159 = vmax.xlane.f32.xlu0 %v1158
          %v1160 = vpop.xlane.xlu0 %1159
          %v1161 = vsel %vm1079, %v1074, -inf
          %1162 = vmax.xlane.f32.xlu0 %v1161
          %v1163 = vpop.xlane.xlu0 %1162
          %v1164 = vsel %vm1079, %v1075, -inf
          %1165 = vmax.xlane.f32.xlu0 %v1164
          %v1166 = vpop.xlane.xlu0 %1165
          %v1167 = vsel %vm1079, %v1076, -inf
          %1168 = vmax.xlane.f32.xlu0 %v1167
          %v1169 = vpop.xlane.xlu0 %1168
          %v1170 = vsel %vm1079, %v1077, -inf
          %1171 = vmax.xlane.f32.xlu0 %v1170
          %v1172 = vpop.xlane.xlu0 %1171
          %v1173 = vsel %vm1079, %v1078, -inf
          %1174 = vmax.xlane.f32.xlu0 %v1173
          %v1175 = vpop.xlane.xlu0 %1174
          %v1176 = vsub.f32 %v1047, %v1082
          %v1177 = vsub.f32 %v1048, %v1085
          %v1178 = vsub.f32 %v1049, %v1088
          %v1179 = vsub.f32 %v1050, %v1091
          %v1180 = vsub.f32 %v1051, %v1094
          %v1181 = vsub.f32 %v1052, %v1097
          %v1182 = vsub.f32 %v1053, %v1100
          %v1183 = vsub.f32 %v1054, %v1103
          %v1184 = vsub.f32 %v1055, %v1106
          %v1185 = vsub.f32 %v1056, %v1109
          %v1186 = vsub.f32 %v1057, %v1112
          %v1187 = vsub.f32 %v1058, %v1115
          %v1188 = vsub.f32 %v1059, %v1118
          %v1189 = vsub.f32 %v1060, %v1121
          %v1190 = vsub.f32 %v1061, %v1124
          %v1191 = vsub.f32 %v1062, %v1127
          %v1192 = vsub.f32 %v1063, %v1130
          %v1193 = vsub.f32 %v1064, %v1133
          %v1194 = vsub.f32 %v1065, %v1136
          %v1195 = vsub.f32 %v1066, %v1139
          %v1196 = vsub.f32 %v1067, %v1142
          %v1197 = vsub.f32 %v1068, %v1145
          %v1198 = vsub.f32 %v1069, %v1148
          %v1199 = vsub.f32 %v1070, %v1151
          %v1200 = vsub.f32 %v1071, %v1154
          %v1201 = vsub.f32 %v1072, %v1157
          %v1202 = vsub.f32 %v1073, %v1160
          %v1203 = vsub.f32 %v1074, %v1163
          %v1204 = vsub.f32 %v1075, %v1166
          %v1205 = vsub.f32 %v1076, %v1169
          %v1206 = vsub.f32 %v1077, %v1172
          %v1207 = vsub.f32 %v1078, %v1175
          %v1208 = vmul.f32 %v1176, 1.442695
          %v1209 = vpow.pop %v1208
          %v1210 = vmul.f32 %v1177, 1.442695
          %v1211 = vpow.pop %v1210
          %v1212 = vmul.f32 %v1178, 1.442695
          %v1213 = vpow.pop %v1212
          %v1214 = vmul.f32 %v1179, 1.442695
          %v1215 = vpow.pop %v1214
          %v1216 = vmul.f32 %v1180, 1.442695
          %v1217 = vpow.pop %v1216
          %v1218 = vmul.f32 %v1181, 1.442695
          %v1219 = vpow.pop %v1218
          %v1220 = vmul.f32 %v1182, 1.442695
          %v1221 = vpow.pop %v1220
          %v1222 = vmul.f32 %v1183, 1.442695
          %v1223 = vpow.pop %v1222
          %v1224 = vmul.f32 %v1184, 1.442695
          %v1225 = vpow.pop %v1224
          %v1226 = vmul.f32 %v1185, 1.442695
          %v1227 = vpow.pop %v1226
          %v1228 = vmul.f32 %v1186, 1.442695
          %v1229 = vpow.pop %v1228
          %v1230 = vmul.f32 %v1187, 1.442695
          %v1231 = vpow.pop %v1230
          %v1232 = vmul.f32 %v1188, 1.442695
          %v1233 = vpow.pop %v1232
          %v1234 = vmul.f32 %v1189, 1.442695
          %v1235 = vpow.pop %v1234
          %v1236 = vmul.f32 %v1190, 1.442695
          %v1237 = vpow.pop %v1236
          %v1238 = vmul.f32 %v1191, 1.442695
          %v1239 = vpow.pop %v1238
          %v1240 = vmul.f32 %v1192, 1.442695
          %v1241 = vpow.pop %v1240
          %v1242 = vmul.f32 %v1193, 1.442695
          %v1243 = vpow.pop %v1242
          %v1244 = vmul.f32 %v1194, 1.442695
          %v1245 = vpow.pop %v1244
          %v1246 = vmul.f32 %v1195, 1.442695
          %v1247 = vpow.pop %v1246
          %v1248 = vmul.f32 %v1196, 1.442695
          %v1249 = vpow.pop %v1248
          %v1250 = vmul.f32 %v1197, 1.442695
          %v1251 = vpow.pop %v1250
          %v1252 = vmul.f32 %v1198, 1.442695
          %v1253 = vpow.pop %v1252
          %v1254 = vmul.f32 %v1199, 1.442695
          %v1255 = vpow.pop %v1254
          %v1256 = vmul.f32 %v1200, 1.442695
          %v1257 = vpow.pop %v1256
          %v1258 = vmul.f32 %v1201, 1.442695
          %v1259 = vpow.pop %v1258
          %v1260 = vmul.f32 %v1202, 1.442695
          %v1261 = vpow.pop %v1260
          %v1262 = vmul.f32 %v1203, 1.442695
          %v1263 = vpow.pop %v1262
          %v1264 = vmul.f32 %v1204, 1.442695
          %v1265 = vpow.pop %v1264
          %v1266 = vmul.f32 %v1205, 1.442695
          %v1267 = vpow.pop %v1266
          %v1268 = vmul.f32 %v1206, 1.442695
          %v1269 = vpow.pop %v1268
          %v1270 = vmul.f32 %v1207, 1.442695
          %v1271 = vpow.pop %v1270
          %v1272 = vsel %vm1079, %v1209, 0.0
          %1273 = vadd.xlane.f32.xlu0 %v1272
          %v1274 = vpop.xlane.xlu0 %1273
          %v1275 = vsel %vm1079, %v1211, 0.0
          %1276 = vadd.xlane.f32.xlu0 %v1275
          %v1277 = vpop.xlane.xlu0 %1276
          %v1278 = vsel %vm1079, %v1213, 0.0
          %1279 = vadd.xlane.f32.xlu0 %v1278
          %v1280 = vpop.xlane.xlu0 %1279
          %v1281 = vsel %vm1079, %v1215, 0.0
          %1282 = vadd.xlane.f32.xlu0 %v1281
          %v1283 = vpop.xlane.xlu0 %1282
          %v1284 = vsel %vm1079, %v1217, 0.0
          %1285 = vadd.xlane.f32.xlu0 %v1284
          %v1286 = vpop.xlane.xlu0 %1285
          %v1287 = vsel %vm1079, %v1219, 0.0
          %1288 = vadd.xlane.f32.xlu0 %v1287
          %v1289 = vpop.xlane.xlu0 %1288
          %v1290 = vsel %vm1079, %v1221, 0.0
          %1291 = vadd.xlane.f32.xlu0 %v1290
          %v1292 = vpop.xlane.xlu0 %1291
          %v1293 = vsel %vm1079, %v1223, 0.0
          %1294 = vadd.xlane.f32.xlu0 %v1293
          %v1295 = vpop.xlane.xlu0 %1294
          %v1296 = vsel %vm1079, %v1225, 0.0
          %1297 = vadd.xlane.f32.xlu0 %v1296
          %v1298 = vpop.xlane.xlu0 %1297
          %v1299 = vsel %vm1079, %v1227, 0.0
          %1300 = vadd.xlane.f32.xlu0 %v1299
          %v1301 = vpop.xlane.xlu0 %1300
          %v1302 = vsel %vm1079, %v1229, 0.0
          %1303 = vadd.xlane.f32.xlu0 %v1302
          %v1304 = vpop.xlane.xlu0 %1303
          %v1305 = vsel %vm1079, %v1231, 0.0
          %1306 = vadd.xlane.f32.xlu0 %v1305
          %v1307 = vpop.xlane.xlu0 %1306
          %v1308 = vsel %vm1079, %v1233, 0.0
          %1309 = vadd.xlane.f32.xlu0 %v1308
          %v1310 = vpop.xlane.xlu0 %1309
          %v1311 = vsel %vm1079, %v1235, 0.0
          %1312 = vadd.xlane.f32.xlu0 %v1311
          %v1313 = vpop.xlane.xlu0 %1312
          %v1314 = vsel %vm1079, %v1237, 0.0
          %1315 = vadd.xlane.f32.xlu0 %v1314
          %v1316 = vpop.xlane.xlu0 %1315
          %v1317 = vsel %vm1079, %v1239, 0.0
          %1318 = vadd.xlane.f32.xlu0 %v1317
          %v1319 = vpop.xlane.xlu0 %1318
          %v1320 = vsel %vm1079, %v1241, 0.0
          %1321 = vadd.xlane.f32.xlu0 %v1320
          %v1322 = vpop.xlane.xlu0 %1321
          %v1323 = vsel %vm1079, %v1243, 0.0
          %1324 = vadd.xlane.f32.xlu0 %v1323
          %v1325 = vpop.xlane.xlu0 %1324
          %v1326 = vsel %vm1079, %v1245, 0.0
          %1327 = vadd.xlane.f32.xlu0 %v1326
          %v1328 = vpop.xlane.xlu0 %1327
          %v1329 = vsel %vm1079, %v1247, 0.0
          %1330 = vadd.xlane.f32.xlu0 %v1329
          %v1331 = vpop.xlane.xlu0 %1330
          %v1332 = vsel %vm1079, %v1249, 0.0
          %1333 = vadd.xlane.f32.xlu0 %v1332
          %v1334 = vpop.xlane.xlu0 %1333
          %v1335 = vsel %vm1079, %v1251, 0.0
          %1336 = vadd.xlane.f32.xlu0 %v1335
          %v1337 = vpop.xlane.xlu0 %1336
          %v1338 = vsel %vm1079, %v1253, 0.0
          %1339 = vadd.xlane.f32.xlu0 %v1338
          %v1340 = vpop.xlane.xlu0 %1339
          %v1341 = vsel %vm1079, %v1255, 0.0
          %1342 = vadd.xlane.f32.xlu0 %v1341
          %v1343 = vpop.xlane.xlu0 %1342
          %v1344 = vsel %vm1079, %v1257, 0.0
          %1345 = vadd.xlane.f32.xlu0 %v1344
          %v1346 = vpop.xlane.xlu0 %1345
          %v1347 = vsel %vm1079, %v1259, 0.0
          %1348 = vadd.xlane.f32.xlu0 %v1347
          %v1349 = vpop.xlane.xlu0 %1348
          %v1350 = vsel %vm1079, %v1261, 0.0
          %1351 = vadd.xlane.f32.xlu0 %v1350
          %v1352 = vpop.xlane.xlu0 %1351
          %v1353 = vsel %vm1079, %v1263, 0.0
          %1354 = vadd.xlane.f32.xlu0 %v1353
          %v1355 = vpop.xlane.xlu0 %1354
          %v1356 = vsel %vm1079, %v1265, 0.0
          %1357 = vadd.xlane.f32.xlu0 %v1356
          %v1358 = vpop.xlane.xlu0 %1357
          %v1359 = vsel %vm1079, %v1267, 0.0
          %1360 = vadd.xlane.f32.xlu0 %v1359
          %v1361 = vpop.xlane.xlu0 %1360
          %v1362 = vsel %vm1079, %v1269, 0.0
          %1363 = vadd.xlane.f32.xlu0 %v1362
          %v1364 = vpop.xlane.xlu0 %1363
          %v1365 = vsel %vm1079, %v1271, 0.0
          %1366 = vadd.xlane.f32.xlu0 %v1365
          %v1367 = vpop.xlane.xlu0 %1366
          %v1368 = vlog2.pop %v1274
          %v1369 = vmul.f32 %v1368, 0.6931472
          %v1370 = vlog2.pop %v1277
          %v1371 = vmul.f32 %v1370, 0.6931472
          %v1372 = vlog2.pop %v1280
          %v1373 = vmul.f32 %v1372, 0.6931472
          %v1374 = vlog2.pop %v1283
          %v1375 = vmul.f32 %v1374, 0.6931472
          %v1376 = vlog2.pop %v1286
          %v1377 = vmul.f32 %v1376, 0.6931472
          %v1378 = vlog2.pop %v1289
          %v1379 = vmul.f32 %v1378, 0.6931472
          %v1380 = vlog2.pop %v1292
          %v1381 = vmul.f32 %v1380, 0.6931472
          %v1382 = vlog2.pop %v1295
          %v1383 = vmul.f32 %v1382, 0.6931472
          %v1384 = vlog2.pop %v1298
          %v1385 = vmul.f32 %v1384, 0.6931472
          %v1386 = vlog2.pop %v1301
          %v1387 = vmul.f32 %v1386, 0.6931472
          %v1388 = vlog2.pop %v1304
          %v1389 = vmul.f32 %v1388, 0.6931472
          %v1390 = vlog2.pop %v1307
          %v1391 = vmul.f32 %v1390, 0.6931472
          %v1392 = vlog2.pop %v1310
          %v1393 = vmul.f32 %v1392, 0.6931472
          %v1394 = vlog2.pop %v1313
          %v1395 = vmul.f32 %v1394, 0.6931472
          %v1396 = vlog2.pop %v1316
          %v1397 = vmul.f32 %v1396, 0.6931472
          %v1398 = vlog2.pop %v1319
          %v1399 = vmul.f32 %v1398, 0.6931472
          %v1400 = vlog2.pop %v1322
          %v1401 = vmul.f32 %v1400, 0.6931472
          %v1402 = vlog2.pop %v1325
          %v1403 = vmul.f32 %v1402, 0.6931472
          %v1404 = vlog2.pop %v1328
          %v1405 = vmul.f32 %v1404, 0.6931472
          %v1406 = vlog2.pop %v1331
          %v1407 = vmul.f32 %v1406, 0.6931472
          %v1408 = vlog2.pop %v1334
          %v1409 = vmul.f32 %v1408, 0.6931472
          %v1410 = vlog2.pop %v1337
          %v1411 = vmul.f32 %v1410, 0.6931472
          %v1412 = vlog2.pop %v1340
          %v1413 = vmul.f32 %v1412, 0.6931472
          %v1414 = vlog2.pop %v1343
          %v1415 = vmul.f32 %v1414, 0.6931472
          %v1416 = vlog2.pop %v1346
          %v1417 = vmul.f32 %v1416, 0.6931472
          %v1418 = vlog2.pop %v1349
          %v1419 = vmul.f32 %v1418, 0.6931472
          %v1420 = vlog2.pop %v1352
          %v1421 = vmul.f32 %v1420, 0.6931472
          %v1422 = vlog2.pop %v1355
          %v1423 = vmul.f32 %v1422, 0.6931472
          %v1424 = vlog2.pop %v1358
          %v1425 = vmul.f32 %v1424, 0.6931472
          %v1426 = vlog2.pop %v1361
          %v1427 = vmul.f32 %v1426, 0.6931472
          %v1428 = vlog2.pop %v1364
          %v1429 = vmul.f32 %v1428, 0.6931472
          %v1430 = vlog2.pop %v1367
          %v1431 = vmul.f32 %v1430, 0.6931472
          %v1432 = vadd.f32 %v1082, %v1369
          %v1433 = vadd.f32 %v1085, %v1371
          %v1434 = vadd.f32 %v1088, %v1373
          %v1435 = vadd.f32 %v1091, %v1375
          %v1436 = vadd.f32 %v1094, %v1377
          %v1437 = vadd.f32 %v1097, %v1379
          %v1438 = vadd.f32 %v1100, %v1381
          %v1439 = vadd.f32 %v1103, %v1383
          %v1440 = vadd.f32 %v1106, %v1385
          %v1441 = vadd.f32 %v1109, %v1387
          %v1442 = vadd.f32 %v1112, %v1389
          %v1443 = vadd.f32 %v1115, %v1391
          %v1444 = vadd.f32 %v1118, %v1393
          %v1445 = vadd.f32 %v1121, %v1395
          %v1446 = vadd.f32 %v1124, %v1397
          %v1447 = vadd.f32 %v1127, %v1399
          %v1448 = vadd.f32 %v1130, %v1401
          %v1449 = vadd.f32 %v1133, %v1403
          %v1450 = vadd.f32 %v1136, %v1405
          %v1451 = vadd.f32 %v1139, %v1407
          %v1452 = vadd.f32 %v1142, %v1409
          %v1453 = vadd.f32 %v1145, %v1411
          %v1454 = vadd.f32 %v1148, %v1413
          %v1455 = vadd.f32 %v1151, %v1415
          %v1456 = vadd.f32 %v1154, %v1417
          %v1457 = vadd.f32 %v1157, %v1419
          %v1458 = vadd.f32 %v1160, %v1421
          %v1459 = vadd.f32 %v1163, %v1423
          %v1460 = vadd.f32 %v1166, %v1425
          %v1461 = vadd.f32 %v1169, %v1427
          %v1462 = vadd.f32 %v1172, %v1429
          %v1463 = vadd.f32 %v1175, %v1431
          %v1464 = vsub.f32 %v1047, %v1432
          %v1465 = vsub.f32 %v1048, %v1433
          %v1466 = vsub.f32 %v1049, %v1434
          %v1467 = vsub.f32 %v1050, %v1435
          %v1468 = vsub.f32 %v1051, %v1436
          %v1469 = vsub.f32 %v1052, %v1437
          %v1470 = vsub.f32 %v1053, %v1438
          %v1471 = vsub.f32 %v1054, %v1439
          %v1472 = vsub.f32 %v1055, %v1440
          %v1473 = vsub.f32 %v1056, %v1441
          %v1474 = vsub.f32 %v1057, %v1442
          %v1475 = vsub.f32 %v1058, %v1443
          %v1476 = vsub.f32 %v1059, %v1444
          %v1477 = vsub.f32 %v1060, %v1445
          %v1478 = vsub.f32 %v1061, %v1446
          %v1479 = vsub.f32 %v1062, %v1447
          %v1480 = vsub.f32 %v1063, %v1448
          %v1481 = vsub.f32 %v1064, %v1449
          %v1482 = vsub.f32 %v1065, %v1450
          %v1483 = vsub.f32 %v1066, %v1451
          %v1484 = vsub.f32 %v1067, %v1452
          %v1485 = vsub.f32 %v1068, %v1453
          %v1486 = vsub.f32 %v1069, %v1454
          %v1487 = vsub.f32 %v1070, %v1455
          %v1488 = vsub.f32 %v1071, %v1456
          %v1489 = vsub.f32 %v1072, %v1457
          %v1490 = vsub.f32 %v1073, %v1458
          %v1491 = vsub.f32 %v1074, %v1459
          %v1492 = vsub.f32 %v1075, %v1460
          %v1493 = vsub.f32 %v1076, %v1461
          %v1494 = vsub.f32 %v1077, %v1462
          %v1495 = vsub.f32 %v1078, %v1463
          %1496 = vst.msk [vmem:[%s373] sm:$0xff] %vm1079, %v1464
          %1497 = vst.msk [vmem:[%s373 + $0x8] sm:$0xff] %vm1079, %v1465
          %1498 = vst.msk [vmem:[%s373 + $0x10] sm:$0xff] %vm1079, %v1466
          %1499 = vst.msk [vmem:[%s373 + $0x18] sm:$0xff] %vm1079, %v1467
          %1500 = vst.msk [vmem:[%s373 + $0x20] sm:$0xff] %vm1079, %v1468
          %1501 = vst.msk [vmem:[%s373 + $0x28] sm:$0xff] %vm1079, %v1469
          %1502 = vst.msk [vmem:[%s373 + $0x30] sm:$0xff] %vm1079, %v1470
          %1503 = vst.msk [vmem:[%s373 + $0x38] sm:$0xff] %vm1079, %v1471
          %1504 = vst.msk [vmem:[%s373 + $0x40] sm:$0xff] %vm1079, %v1472
          %1505 = vst.msk [vmem:[%s373 + $0x48] sm:$0xff] %vm1079, %v1473
          %1506 = vst.msk [vmem:[%s373 + $0x50] sm:$0xff] %vm1079, %v1474
          %1507 = vst.msk [vmem:[%s373 + $0x58] sm:$0xff] %vm1079, %v1475
          %1508 = vst.msk [vmem:[%s373 + $0x60] sm:$0xff] %vm1079, %v1476
          %1509 = vst.msk [vmem:[%s373 + $0x68] sm:$0xff] %vm1079, %v1477
          %1510 = vst.msk [vmem:[%s373 + $0x70] sm:$0xff] %vm1079, %v1478
          %1511 = vst.msk [vmem:[%s373 + $0x78] sm:$0xff] %vm1079, %v1479
          %1512 = vst.msk [vmem:[%s373 + $0x80] sm:$0xff] %vm1079, %v1480
          %1513 = vst.msk [vmem:[%s373 + $0x88] sm:$0xff] %vm1079, %v1481
          %1514 = vst.msk [vmem:[%s373 + $0x90] sm:$0xff] %vm1079, %v1482
          %1515 = vst.msk [vmem:[%s373 + $0x98] sm:$0xff] %vm1079, %v1483
          %1516 = vst.msk [vmem:[%s373 + $0xa0] sm:$0xff] %vm1079, %v1484
          %1517 = vst.msk [vmem:[%s373 + $0xa8] sm:$0xff] %vm1079, %v1485
          %1518 = vst.msk [vmem:[%s373 + $0xb0] sm:$0xff] %vm1079, %v1486
          %1519 = vst.msk [vmem:[%s373 + $0xb8] sm:$0xff] %vm1079, %v1487
          %1520 = vst.msk [vmem:[%s373 + $0xc0] sm:$0xff] %vm1079, %v1488
          %1521 = vst.msk [vmem:[%s373 + $0xc8] sm:$0xff] %vm1079, %v1489
          %1522 = vst.msk [vmem:[%s373 + $0xd0] sm:$0xff] %vm1079, %v1490
          %1523 = vst.msk [vmem:[%s373 + $0xd8] sm:$0xff] %vm1079, %v1491
          %1524 = vst.msk [vmem:[%s373 + $0xe0] sm:$0xff] %vm1079, %v1492
          %1525 = vst.msk [vmem:[%s373 + $0xe8] sm:$0xff] %vm1079, %v1493
          %1526 = vst.msk [vmem:[%s373 + $0xf0] sm:$0xff] %vm1079, %v1494
          %1527 = vst.msk [vmem:[%s373 + $0xf8] sm:$0xff] %vm1079, %v1495
        $region82: #{gcn_forward.5} parent=65 // pred_fallthru
          _
        %s1528 = smul.u32 32, %s30
        %p1529 = scmp.lt.s32.totalorder %s1528, 63
        %s1530 = scalar_select %p1529, %s1528, 63
        %s1531 = smul.addr %s1530, 8
        %s1532 = scalar_lea.vmem %s5, %s1531
        // Predicated region
        $region83: #{gcn_forward.5} parent=65 // pred_check
          %p1533 = pneg %p132
        $region84: #{gcn_forward.5} parent=65 // pred_check_branch
          %1535 = sbr.rel (%p1533) target = $region86
        $region85: #{gcn_forward.5} parent=65 // pred_region
          %s1536 = smul.u32 32, %s30
        $region86: #{gcn_forward.5} parent=65 // pred_fallthru
          _
      $region66: #{gcn_forward.5} parent=5 // pred_fallthru
        _
      %p1537 = scmp.le.s32.totalorder 2, %s21
      // Predicated region
      $region87: #{gcn_forward.5} parent=5 // pred_check
        %p1538 = pneg %p1537
      $region88: #{gcn_forward.5} parent=5 // pred_check_branch
        %1540 = sbr.rel (%p1538) target = $region90
      $region89: #{gcn_forward.5} parent=5 // pred_region
        %s1541 = ssub.s32 %s21, 2
        // Predicated region
        $region91: #{gcn_forward.5} parent=89 // pred_check
          %p1542 = pneg %p138
        $region92: #{gcn_forward.5} parent=89 // pred_check_branch
          %1544 = sbr.rel (%p1542) target = $region94
        $region93: #{gcn_forward.5} parent=89 // pred_region
          %s1545 = smul.u32 32, %s32
          %p1546 = scmp.lt.s32.totalorder %s1545, 63
          %s1547 = scalar_select %p1546, %s1545, 63
          %s1548 = smul.addr %s1547, 8
          %s1549 = scalar_lea.vmem %s5, %s1548
        $region94: #{gcn_forward.5} parent=89 // pred_fallthru
          _
      $region90: #{gcn_forward.5} parent=5 // pred_fallthru
        _
    $region6: #{gcn_forward.5} parent=1 // loop_footer
      %s25 = sadd.s32 1, %s21
    $region7: #{gcn_forward.5} parent=1 // loop_footer_branch
      %20 = sbr.rel target = $region3
    $region8: #{gcn_forward.5} parent=1 // loop_exit
      _

</llo_original>
